<compile_context>
chip_gen: v7x
topology: tpu7x:2x2x1
jax: 0.10.0
libtpu: 0.0.40
codegen_flags: <defaults>
</compile_context>

<pallas_src>
import functools

import jax
import jax.numpy as jnp
from jax.experimental import pallas as pl
from jax.experimental.pallas import tpu as pltpu


_VMEM_LIMIT = 32 * 1024 * 1024   # comfortably above per-step use on v5e/v6e/v7x


# ----------------------------- Pallas kernels ------------------------------ #

def _conv_gemm_kernel(*refs, relu: bool, has_noise: bool):
    """One M-tile of: out = [relu](P @ W + b) [+ noise], f32 accumulation."""
    if has_noise:
        p_ref, w_ref, b_ref, n_ref, o_ref = refs
    else:
        p_ref, w_ref, b_ref, o_ref = refs
        n_ref = None
    acc = jnp.dot(p_ref[...], w_ref[...], preferred_element_type=jnp.float32)
    acc = acc + b_ref[...]                      # (1, N) broadcast over rows
    if relu:
        acc = jnp.maximum(acc, 0.0)
    if n_ref is not None:
        acc = acc + n_ref[...].astype(jnp.float32)
    o_ref[...] = acc.astype(o_ref.dtype)


def _linear_kernel(x_ref, wt_ref, b_ref, o_ref):
    """K-tiled Linear: o (f32, VMEM-resident) accumulates x @ wt.T over the K grid."""
    @pl.when(pl.program_id(0) == 0)
    def _():
        o_ref[...] = jnp.zeros_like(o_ref) + b_ref[...]
    o_ref[...] += jax.lax.dot_general(
        x_ref[...], wt_ref[...],
        dimension_numbers=(((1,), (1,)), ((), ())),   # contract last dims (x @ wt.T)
        preferred_element_type=jnp.float32)


# ----------------------------- Pallas wrappers ------------------------------ #

def pallas_conv_gemm(p, w, b, noise=None, relu=False, tile_m=256):
    """Fused im2col-GEMM + bias + ReLU + optional noise, tiled over patch rows.

    p: (M, K) patch matrix; w: (K_pad, N) bf16 weight (K_pad >= K, zero-padded);
    noise: optional (M, N).  Output is bf16 (M, N)."""
    M, K = p.shape
    Kw, N = w.shape
    assert Kw >= K, (Kw, K)

    n_tiles = (M + tile_m - 1) // tile_m
    m_pad = n_tiles * tile_m
    if m_pad != M or Kw != K:
        p = jnp.pad(p, ((0, m_pad - M), (0, Kw - K)))
    if noise is not None and m_pad != M:
        noise = jnp.pad(noise, ((0, m_pad - M), (0, 0)))

    b2 = jnp.reshape(b, (1, N)).astype(jnp.float32)
    args = [p.astype(jnp.bfloat16), w.astype(jnp.bfloat16), b2]
    in_specs = [
        pl.BlockSpec((tile_m, Kw), lambda i: (i, 0)),
        pl.BlockSpec((Kw, N), lambda i: (0, 0)),
        pl.BlockSpec((1, N), lambda i: (0, 0)),
    ]
    if noise is not None:
        args.append(noise.astype(jnp.bfloat16))
        in_specs.append(pl.BlockSpec((tile_m, N), lambda i: (i, 0)))

    kernel = functools.partial(_conv_gemm_kernel, relu=relu,
                               has_noise=noise is not None)
    out = pl.pallas_call(
        kernel,
        out_shape=jax.ShapeDtypeStruct((m_pad, N), jnp.bfloat16),
        grid=(n_tiles,),
        in_specs=in_specs,
        out_specs=pl.BlockSpec((tile_m, N), lambda i: (i, 0)),
        compiler_params=pltpu.CompilerParams(
            dimension_semantics=("parallel",),        # shard M-tiles on v7x's 2 TCs
            vmem_limit_bytes=_VMEM_LIMIT),
    )(*args)
    return out[:M]


def pallas_linear(x, w_t, b, tile_k=3584):
    """out = x @ w_t.T + b, streaming the (N_pad, K) weight through VMEM in
    K-chunks with an f32 resident output accumulator."""
    M, K = x.shape
    N, Kw = w_t.shape
    assert K == Kw, (K, Kw)
    if K % tile_k != 0:
        for cand in (4096, 3584, 2048, 1792, 1024, 896, 512, 256, 128):
            if K % cand == 0:
                tile_k = cand
                break
        else:
            tile_k = K
    nk = K // tile_k
    b2 = jnp.reshape(b, (1, N)).astype(jnp.float32)

    return pl.pallas_call(
        _linear_kernel,
        out_shape=jax.ShapeDtypeStruct((M, N), jnp.float32),
        grid=(nk,),
        in_specs=[
            pl.BlockSpec((M, tile_k), lambda k: (0, k)),
            pl.BlockSpec((N, tile_k), lambda k: (0, k)),
            pl.BlockSpec((1, N), lambda k: (0, 0)),
        ],
        out_specs=pl.BlockSpec((M, N), lambda k: (0, 0)),   # resident accumulator
        compiler_params=pltpu.CompilerParams(
            dimension_semantics=("arbitrary",),
            vmem_limit_bytes=_VMEM_LIMIT),
    )(x.astype(jnp.bfloat16), w_t.astype(jnp.bfloat16), b2)


# ------------------------------- JAX glue ---------------------------------- #

def im2col(x_nhwc, kh, kw):
    """Extract valid-conv patches; patch feature ordering is (kh, kw, cin)."""
    B, H, W, C = x_nhwc.shape
    Ho, Wo = H - kh + 1, W - kw + 1
    cols = []
    for i in range(kh):
        for j in range(kw):
            cols.append(x_nhwc[:, i:i + Ho, j:j + Wo, :])    # (B, Ho, Wo, C)
    p = jnp.stack(cols, axis=3)                              # (B, Ho, Wo, kh*kw, C)
    return p.reshape(B * Ho * Wo, kh * kw * C), (B, Ho, Wo)


def init_params(key, num_class=10):
    """Deterministic synthetic parameters (PyTorch-style uniform fan-in init),
    stored in the torch layouts (conv (kh,kw,cin,cout); Linear rows in NCHW
    flatten order)."""
    k1, k2, k3, k4, k5, k6 = jax.random.split(key, 6)

    def u(k, shape, fan_in):
        bound = 1.0 / jnp.sqrt(jnp.asarray(fan_in, jnp.float32))
        return jax.random.uniform(k, shape, jnp.float32, -bound, bound)

    return {
        "w1": u(k1, (3, 3, 3, 32), 3 * 3 * 3),       # conv1
        "b1": u(k2, (32,), 3 * 3 * 3),
        "w2": u(k3, (3, 3, 32, 32), 3 * 3 * 32),     # conv2
        "b2": u(k4, (32,), 3 * 3 * 32),
        "wl": u(k5, (28 * 28 * 32, num_class), 28 * 28 * 32),   # Linear (NCHW rows)
        "bl": u(k6, (num_class,), 28 * 28 * 32),
    }


def prepare_params(params, num_class=10, n_pad=16):
    """One-time (outside jit) conversion to kernel-friendly layouts:
      - conv weights as (K, Cout) matrices, conv1 K zero-padded 27 -> 32, bf16;
      - Linear weight transposed to (n_pad, 25088), rows permuted so a plain
        NHWC flatten matches torch's NCHW Flatten, output dim padded to 16."""
    w1m = jnp.pad(params["w1"].reshape(3 * 3 * 3, 32), ((0, 32 - 27), (0, 0)))
    w2m = params["w2"].reshape(3 * 3 * 32, 32)

    wl = params["wl"]                                        # (32*28*28, nc), NCHW rows
    wl_t = wl.T.reshape(num_class, 32, 28, 28)               # (nc, C, H, W)
    wl_t = jnp.transpose(wl_t, (0, 2, 3, 1)).reshape(num_class, 28 * 28 * 32)
    wl_t = jnp.pad(wl_t, ((0, n_pad - num_class), (0, 0)))   # pad 10 -> 16 rows
    blp = jnp.pad(params["bl"], (0, n_pad - num_class))

    return {
        "w1m": w1m.astype(jnp.bfloat16),
        "b1": params["b1"].astype(jnp.float32),
        "w2m": w2m.astype(jnp.bfloat16),
        "b2": params["b2"].astype(jnp.float32),
        "wlT": wl_t.astype(jnp.bfloat16),
        "blp": blp.astype(jnp.float32),
    }


def convnet_rse_forward(prep, x_nchw, n_in, n_mid, num_class=10):
    B = x_nchw.shape[0]
    x = jnp.transpose(x_nchw, (0, 2, 3, 1)).astype(jnp.float32)   # NCHW -> NHWC

    # noise1 on the input (elementwise glue; same math as torch Noise.forward)
    x_n = x + n_in

    # conv1 -> ReLU -> noise1   (fused GEMM kernel, K padded 27 -> 32)
    p1, (_, H1, W1) = im2col(x_n, 3, 3)                 # (B*30*30, 27)
    h1 = pallas_conv_gemm(p1, prep["w1m"], prep["b1"], noise=n_mid, relu=True)
    h1 = h1.reshape(B, H1, W1, 32)                      # bf16 (B, 30, 30, 32)

    # conv2 -> ReLU
    p2, (_, H2, W2) = im2col(h1, 3, 3)                  # (B*28*28, 288) bf16
    h2 = pallas_conv_gemm(p2, prep["w2m"], prep["b2"], relu=True)   # (B*784, 32)

    # Plain NHWC flatten (no transpose) — wlT rows were permuted at init so this
    # is bit-equivalent to torch's NCHW Flatten + Linear.
    flat = h2.reshape(B, H2 * W2 * 32)                  # (B, 25088) bf16
    out = pallas_linear(flat, prep["wlT"], prep["blp"])  # (B, 16) f32
    return out[:, :num_class]


def reference_forward(params, x_nchw, n_in, n_mid):
    """Pure-JAX f32 reference using torch layouts (NCHW flatten + untransposed wl)."""
    B = x_nchw.shape[0]
    x = jnp.transpose(x_nchw, (0, 2, 3, 1)).astype(jnp.float32)
    x_n = x + n_in

    p1, (_, H1, W1) = im2col(x_n, 3, 3)
    w1m = params["w1"].reshape(3 * 3 * 3, 32)
    h1 = jnp.maximum(p1 @ w1m + params["b1"][None, :], 0.0) + n_mid
    h1 = h1.reshape(B, H1, W1, 32)

    p2, (_, H2, W2) = im2col(h1, 3, 3)
    w2m = params["w2"].reshape(3 * 3 * 32, 32)
    h2 = jnp.maximum(p2 @ w2m + params["b2"][None, :], 0.0)
    h2 = h2.reshape(B, H2, W2, 32)

    flat = jnp.transpose(h2, (0, 3, 1, 2)).reshape(B, 32 * H2 * W2)   # NCHW flatten
    return flat @ params["wl"] + params["bl"][None, :]


# --------------------------------- main ------------------------------------ #

if __name__ == "__main__":
    key = jax.random.PRNGKey(0)
    kx, kp, kn1, kn2 = jax.random.split(key, 4)

    B, num_class = 2, 10
    noise_init = 0.2   # both Noise applications in the torch forward use noise1

    # Input implied by Linear(28*28*32): 3x32x32 images (CIFAR-like), NCHW.
    x = jax.random.normal(kx, (B, 3, 32, 32), jnp.float32)
    params = init_params(kp, num_class)
    prep = prepare_params(params, num_class)     # one-time layout conversion

    # Deterministic "Noise" buffers (torch draws fresh N(0, std) each call).
    n_in = noise_init * jax.random.normal(kn1, (B, 32, 32, 3), jnp.float32)
    n_mid = noise_init * jax.random.normal(kn2, (B * 30 * 30, 32), jnp.float32)

    fwd = jax.jit(functools.partial(convnet_rse_forward, num_class=num_class))
    out = jax.block_until_ready(fwd(prep, x, n_in, n_mid))

    ref = reference_forward(params, x, n_in, n_mid)

    assert out.shape == (B, num_class), out.shape
    assert bool(jnp.all(jnp.isfinite(out)))
    assert bool(jnp.allclose(out, ref, atol=5e-2, rtol=5e-2)), (out, ref)
    print("KERNEL_OK")
</pallas_src>

<mosaic_0001>
module attributes {stable_mosaic.version = 11 : i64} {
  func.func @_conv_gemm_kernel(%arg0: i32, %arg1: memref<256x32xbf16, #tpu.memory_space<vmem>>, %arg2: memref<32x32xbf16, #tpu.memory_space<vmem>>, %arg3: memref<1x32xf32, #tpu.memory_space<vmem>>, %arg4: memref<256x32xbf16, #tpu.memory_space<vmem>>, %arg5: memref<256x32xbf16, #tpu.memory_space<vmem>>) attributes {dimension_semantics = [#tpu.dimension_semantics<parallel>], iteration_bounds = array<i64: 8>, scalar_prefetch = 0 : i64, scratch_operands = 0 : i64, tpu.core_type = #tpu.core_type<tc>, window_params = [{transform_indices = @transform_0, window_bounds = array<i64: 256, 32>}, {pipeline_mode = #tpu.pipeline_mode<synchronous>, transform_indices = @transform_1, window_bounds = array<i64: 32, 32>}, {pipeline_mode = #tpu.pipeline_mode<synchronous>, transform_indices = @transform_2, window_bounds = array<i64: 1, 32>}, {transform_indices = @transform_3, window_bounds = array<i64: 256, 32>}, {transform_indices = @transform_4, window_bounds = array<i64: 256, 32>}]} {
    %c0 = arith.constant 0 : index
    %c0_0 = arith.constant 0 : index
    %0 = vector.load %arg1[%c0, %c0_0] : memref<256x32xbf16, #tpu.memory_space<vmem>>, vector<256x32xbf16>
    %c0_1 = arith.constant 0 : index
    %c0_2 = arith.constant 0 : index
    %1 = vector.load %arg2[%c0_1, %c0_2] : memref<32x32xbf16, #tpu.memory_space<vmem>>, vector<32x32xbf16>
    %cst = arith.constant dense<0.000000e+00> : vector<256x32xf32>
    %2 = tpu.matmul %0, %1, %cst {dimension_numbers = #tpu.dot_dimension_numbers<[1], [0], [0], [1], [0, 0, 1, 1], [], []>} : vector<256x32xbf16>, vector<32x32xbf16>, vector<256x32xf32> -> vector<256x32xf32>
    %c0_3 = arith.constant 0 : index
    %c0_4 = arith.constant 0 : index
    %3 = vector.load %arg3[%c0_3, %c0_4] : memref<1x32xf32, #tpu.memory_space<vmem>>, vector<1x32xf32>
    %4 = vector.broadcast %3 : vector<1x32xf32> to vector<256x32xf32>
    %5 = arith.addf %2, %4 : vector<256x32xf32>
    %cst_5 = arith.constant 0.000000e+00 : f32
    %6 = vector.broadcast %cst_5 : f32 to vector<256x32xf32>
    %7 = arith.maximumf %5, %6 : vector<256x32xf32>
    %c0_6 = arith.constant 0 : index
    %c0_7 = arith.constant 0 : index
    %8 = vector.load %arg4[%c0_6, %c0_7] : memref<256x32xbf16, #tpu.memory_space<vmem>>, vector<256x32xbf16>
    %9 = arith.extf %8 : vector<256x32xbf16> to vector<256x32xf32>
    %10 = arith.addf %7, %9 : vector<256x32xf32>
    %11 = arith.truncf %10 : vector<256x32xf32> to vector<256x32xbf16>
    %c0_8 = arith.constant 0 : index
    %c0_9 = arith.constant 0 : index
    %12 = vector.load %arg5[%c0_8, %c0_9] : memref<256x32xbf16, #tpu.memory_space<vmem>>, vector<256x32xbf16>
    tpu.vector_store %arg5[%c0_8, %c0_9], %11 {strides = array<i32>} : memref<256x32xbf16, #tpu.memory_space<vmem>>, vector<256x32xbf16>,
    return
  }
  func.func @transform_0(%arg0: i32) -> (i32, i32) {
    %c0_i32 = arith.constant 0 : i32
    %c0_i32_0 = arith.constant 0 : i32
    return %arg0, %c0_i32 : i32, i32
  }
  func.func @transform_1(%arg0: i32) -> (i32, i32) {
    %c0_i32 = arith.constant 0 : i32
    %c0_i32_0 = arith.constant 0 : i32
    %c0_i32_1 = arith.constant 0 : i32
    return %c0_i32, %c0_i32_0 : i32, i32
  }
  func.func @transform_2(%arg0: i32) -> (i32, i32) {
    %c0_i32 = arith.constant 0 : i32
    %c0_i32_0 = arith.constant 0 : i32
    %c0_i32_1 = arith.constant 0 : i32
    return %c0_i32, %c0_i32_0 : i32, i32
  }
  func.func @transform_3(%arg0: i32) -> (i32, i32) {
    %c0_i32 = arith.constant 0 : i32
    %c0_i32_0 = arith.constant 0 : i32
    return %arg0, %c0_i32 : i32, i32
  }
  func.func @transform_4(%arg0: i32) -> (i32, i32) {
    %c0_i32 = arith.constant 0 : i32
    %c0_i32_0 = arith.constant 0 : i32
    return %arg0, %c0_i32 : i32, i32
  }
}

module attributes {stable_mosaic.version = 11 : i64} {
  func.func @_conv_gemm_kernel(%arg0: i32, %arg1: memref<256x288xbf16, #tpu.memory_space<vmem>>, %arg2: memref<288x32xbf16, #tpu.memory_space<vmem>>, %arg3: memref<1x32xf32, #tpu.memory_space<vmem>>, %arg4: memref<256x32xbf16, #tpu.memory_space<vmem>>) attributes {dimension_semantics = [#tpu.dimension_semantics<parallel>], iteration_bounds = array<i64: 7>, scalar_prefetch = 0 : i64, scratch_operands = 0 : i64, tpu.core_type = #tpu.core_type<tc>, window_params = [{transform_indices = @transform_0, window_bounds = array<i64: 256, 288>}, {pipeline_mode = #tpu.pipeline_mode<synchronous>, transform_indices = @transform_1, window_bounds = array<i64: 288, 32>}, {pipeline_mode = #tpu.pipeline_mode<synchronous>, transform_indices = @transform_2, window_bounds = array<i64: 1, 32>}, {transform_indices = @transform_3, window_bounds = array<i64: 256, 32>}]} {
    %c0 = arith.constant 0 : index
    %c0_0 = arith.constant 0 : index
    %0 = vector.load %arg1[%c0, %c0_0] : memref<256x288xbf16, #tpu.memory_space<vmem>>, vector<256x288xbf16>
    %c0_1 = arith.constant 0 : index
    %c0_2 = arith.constant 0 : index
    %1 = vector.load %arg2[%c0_1, %c0_2] : memref<288x32xbf16, #tpu.memory_space<vmem>>, vector<288x32xbf16>
    %cst = arith.constant dense<0.000000e+00> : vector<256x32xf32>
    %2 = tpu.matmul %0, %1, %cst {dimension_numbers = #tpu.dot_dimension_numbers<[1], [0], [0], [1], [0, 0, 1, 1], [], []>} : vector<256x288xbf16>, vector<288x32xbf16>, vector<256x32xf32> -> vector<256x32xf32>
    %c0_3 = arith.constant 0 : index
    %c0_4 = arith.constant 0 : index
    %3 = vector.load %arg3[%c0_3, %c0_4] : memref<1x32xf32, #tpu.memory_space<vmem>>, vector<1x32xf32>
    %4 = vector.broadcast %3 : vector<1x32xf32> to vector<256x32xf32>
    %5 = arith.addf %2, %4 : vector<256x32xf32>
    %cst_5 = arith.constant 0.000000e+00 : f32
    %6 = vector.broadcast %cst_5 : f32 to vector<256x32xf32>
    %7 = arith.maximumf %5, %6 : vector<256x32xf32>
    %8 = arith.truncf %7 : vector<256x32xf32> to vector<256x32xbf16>
    %c0_6 = arith.constant 0 : index
    %c0_7 = arith.constant 0 : index
    %9 = vector.load %arg4[%c0_6, %c0_7] : memref<256x32xbf16, #tpu.memory_space<vmem>>, vector<256x32xbf16>
    tpu.vector_store %arg4[%c0_6, %c0_7], %8 {strides = array<i32>} : memref<256x32xbf16, #tpu.memory_space<vmem>>, vector<256x32xbf16>,
    return
  }
  func.func @transform_0(%arg0: i32) -> (i32, i32) {
    %c0_i32 = arith.constant 0 : i32
    %c0_i32_0 = arith.constant 0 : i32
    return %arg0, %c0_i32 : i32, i32
  }
  func.func @transform_1(%arg0: i32) -> (i32, i32) {
    %c0_i32 = arith.constant 0 : i32
    %c0_i32_0 = arith.constant 0 : i32
    %c0_i32_1 = arith.constant 0 : i32
    return %c0_i32, %c0_i32_0 : i32, i32
  }
  func.func @transform_2(%arg0: i32) -> (i32, i32) {
    %c0_i32 = arith.constant 0 : i32
    %c0_i32_0 = arith.constant 0 : i32
    %c0_i32_1 = arith.constant 0 : i32
    return %c0_i32, %c0_i32_0 : i32, i32
  }
  func.func @transform_3(%arg0: i32) -> (i32, i32) {
    %c0_i32 = arith.constant 0 : i32
    %c0_i32_0 = arith.constant 0 : i32
    return %arg0, %c0_i32 : i32, i32
  }
}

module attributes {stable_mosaic.version = 11 : i64} {
  func.func @_linear_kernel(%arg0: i32, %arg1: memref<2x3584xbf16, #tpu.memory_space<vmem>>, %arg2: memref<16x3584xbf16, #tpu.memory_space<vmem>>, %arg3: memref<1x16xf32, #tpu.memory_space<vmem>>, %arg4: memref<2x16xf32, #tpu.memory_space<vmem>>) attributes {dimension_semantics = [#tpu.dimension_semantics<arbitrary>], iteration_bounds = array<i64: 7>, scalar_prefetch = 0 : i64, scratch_operands = 0 : i64, tpu.core_type = #tpu.core_type<tc>, window_params = [{transform_indices = @transform_0, window_bounds = array<i64: 2, 3584>}, {transform_indices = @transform_1, window_bounds = array<i64: 16, 3584>}, {pipeline_mode = #tpu.pipeline_mode<synchronous>, transform_indices = @transform_2, window_bounds = array<i64: 1, 16>}, {pipeline_mode = #tpu.pipeline_mode<synchronous>, transform_indices = @transform_3, window_bounds = array<i64: 2, 16>}]} {
    %c0_i32 = arith.constant 0 : i32
    %0 = arith.cmpi eq, %arg0, %c0_i32 : i32
    %1 = arith.extui %0 : i1 to i32
    %c0_i32_0 = arith.constant 0 : i32
    %2 = arith.cmpi ne, %1, %c0_i32_0 : i32
    scf.if %2 {
      %cst_8 = arith.constant 0.000000e+00 : f32
      %9 = vector.broadcast %cst_8 : f32 to vector<2x16xf32>
      %c0_9 = arith.constant 0 : index
      %c0_10 = arith.constant 0 : index
      %10 = vector.load %arg3[%c0_9, %c0_10] : memref<1x16xf32, #tpu.memory_space<vmem>>, vector<1x16xf32>
      %11 = vector.broadcast %10 : vector<1x16xf32> to vector<2x16xf32>
      %12 = arith.addf %9, %11 : vector<2x16xf32>
      %c0_11 = arith.constant 0 : index
      %c0_12 = arith.constant 0 : index
      %13 = vector.load %arg4[%c0_11, %c0_12] : memref<2x16xf32, #tpu.memory_space<vmem>>, vector<2x16xf32>
      tpu.vector_store %arg4[%c0_11, %c0_12], %12 {strides = array<i32>} : memref<2x16xf32, #tpu.memory_space<vmem>>, vector<2x16xf32>,
    } else {
    }
    %c0 = arith.constant 0 : index
    %c0_1 = arith.constant 0 : index
    %3 = vector.load %arg4[%c0, %c0_1] : memref<2x16xf32, #tpu.memory_space<vmem>>, vector<2x16xf32>
    %c0_2 = arith.constant 0 : index
    %c0_3 = arith.constant 0 : index
    %4 = vector.load %arg1[%c0_2, %c0_3] : memref<2x3584xbf16, #tpu.memory_space<vmem>>, vector<2x3584xbf16>
    %c0_4 = arith.constant 0 : index
    %c0_5 = arith.constant 0 : index
    %5 = vector.load %arg2[%c0_4, %c0_5] : memref<16x3584xbf16, #tpu.memory_space<vmem>>, vector<16x3584xbf16>
    %cst = arith.constant dense<0.000000e+00> : vector<2x16xf32>
    %6 = tpu.matmul %4, %5, %cst {dimension_numbers = #tpu.dot_dimension_numbers<[1], [1], [0], [0], [0, 0, 1, 0], [], []>} : vector<2x3584xbf16>, vector<16x3584xbf16>, vector<2x16xf32> -> vector<2x16xf32>
    %7 = arith.addf %3, %6 : vector<2x16xf32>
    %c0_6 = arith.constant 0 : index
    %c0_7 = arith.constant 0 : index
    %8 = vector.load %arg4[%c0_6, %c0_7] : memref<2x16xf32, #tpu.memory_space<vmem>>, vector<2x16xf32>
    tpu.vector_store %arg4[%c0_6, %c0_7], %7 {strides = array<i32>} : memref<2x16xf32, #tpu.memory_space<vmem>>, vector<2x16xf32>,
    return
  }
  func.func @transform_0(%arg0: i32) -> (i32, i32) {
    %c0_i32 = arith.constant 0 : i32
    %c0_i32_0 = arith.constant 0 : i32
    return %c0_i32, %arg0 : i32, i32
  }
  func.func @transform_1(%arg0: i32) -> (i32, i32) {
    %c0_i32 = arith.constant 0 : i32
    %c0_i32_0 = arith.constant 0 : i32
    return %c0_i32, %arg0 : i32, i32
  }
  func.func @transform_2(%arg0: i32) -> (i32, i32) {
    %c0_i32 = arith.constant 0 : i32
    %c0_i32_0 = arith.constant 0 : i32
    %c0_i32_1 = arith.constant 0 : i32
    return %c0_i32, %c0_i32_0 : i32, i32
  }
  func.func @transform_3(%arg0: i32) -> (i32, i32) {
    %c0_i32 = arith.constant 0 : i32
    %c0_i32_0 = arith.constant 0 : i32
    %c0_i32_1 = arith.constant 0 : i32
    return %c0_i32, %c0_i32_0 : i32, i32
  }
}

</mosaic_0001>

<llo_original>
// kernel: convnet_rse_forward.3
$region0: #{convnet_rse_forward.3}
  #allocation0 [shape = 'u32[]', space=smem, size = 0x4, offset = 0x4, fixed_abs, tag = 'smem constant byte address 0x4 - core index']
  #allocation1 [shape = 'u32[144,128]{1,0:T(1,128)}', space=vmem, size = 0x12000, scoped, tag = 'internal scratch']
  %s0 = inlined_call_operand.vmem [shape: bf16[2048,32], index: 0, kind: input, shape index: {}]
  %s1 = inlined_call_operand.vmem [shape: bf16[32,32], index: 1, kind: input, shape index: {}]
  %s2 = inlined_call_operand.vmem [shape: f32[1,32], index: 2, kind: input, shape index: {}]
  %s3 = inlined_call_operand.vmem [shape: bf16[2048,32], index: 3, kind: input, shape index: {}]
  %s4 = inlined_call_operand.vmem [shape: bf16[2048,32], index: 4, kind: output, shape index: {}]
  %s5 = sld [smem:[#allocation0]]
  $region49: #{convnet_rse_forward.3} parent=0
    _
  %s7 = ssub.s32 1, %s5
  %s8 = scalar_select 0, %s7, %s5
  loop: start=0, step=1, limit=10
  $region2: #{convnet_rse_forward.3} parent=0 // loop_pre_header
    _
  $region3: #{convnet_rse_forward.3} parent=0 // loop_header
    %s10 = sphi 0, %s14
    %p11 = scmp.ge.s32.totalorder %s10, 10
    %s20 = sphi 0, %s22
    %s23 = sphi 0, %s20
    %s24 = sphi 0, %s23
    %s40 = sphi 0, %s24
    %s44 = sphi 0, %s44
    %s46 = sphi 0, %s44
    %s47 = sphi 0, %s46
    %s61 = sphi 0, %s47
    %s65 = sphi 0, %s65
    %s67 = sphi 0, %s65
    %s68 = sphi 0, %s67
    %s82 = sphi 0, %s68
    %s88 = sphi 0, %s90
    %s91 = sphi 0, %s88
    %s92 = sphi 0, %s91
    %s108 = sphi 0, %s92
    %s114 = sphi 0, %s116
    %s117 = sphi 0, %s114
    %s118 = sphi 0, %s117
    %s134 = sphi 0, %s118
  $region4: #{convnet_rse_forward.3} parent=0 // loop_header_branch
    %13 = sbr.rel (%p11) target = $region8
  $region5: #{convnet_rse_forward.3} parent=0 // loop_body
    %s15 = ssub.s32 %s10, 1
    %s16 = ssub.s32 %s10, 2
    %s17 = sadd.s32 %s10, 1
    %s18 = ssub.s32 %s10, %s17
    %p19 = scmp.eq.s32.totalorder %s18, 0
    %s21 = sadd.s32 %s20, 1
    %s22 = scalar_select %p19, %s20, %s21
    %p25 = pneg %p19
    %p26 = scmp.eq.s32.totalorder %s10, 7
    %p27 = por %p25, %p26
    %p28 = scmp.ne.s32.totalorder %s20, %s23
    %p29 = scmp.eq.s32.totalorder %s10, 0
    %p30 = por %p28, %p29
    %p31 = scmp.ne.s32.totalorder %s20, %s23
    %p32 = scmp.eq.s32.totalorder %s15, 7
    %p33 = por %p31, %p32
    %p34 = scmp.ne.s32.totalorder %s23, %s24
    %p35 = scmp.eq.s32.totalorder %s15, 0
    %p36 = por %p34, %p35
    %p37 = scmp.ne.s32.totalorder %s23, %s24
    %p38 = scmp.eq.s32.totalorder %s16, 7
    %p39 = por %p37, %p38
    %p41 = scmp.ne.s32.totalorder %s24, %s40
    %p42 = scmp.eq.s32.totalorder %s16, 0
    %p43 = por %p41, %p42
    %s45 = sadd.s32 %s44, 1
    %p48 = scmp.eq.s32.totalorder %s10, 7
    %p49 = scmp.ne.s32.totalorder %s44, %s46
    %p50 = scmp.eq.s32.totalorder %s10, 0
    %p51 = por %p49, %p50
    %p52 = scmp.ne.s32.totalorder %s44, %s46
    %p53 = scmp.eq.s32.totalorder %s15, 7
    %p54 = por %p52, %p53
    %p55 = scmp.ne.s32.totalorder %s46, %s47
    %p56 = scmp.eq.s32.totalorder %s15, 0
    %p57 = por %p55, %p56
    %p58 = scmp.ne.s32.totalorder %s46, %s47
    %p59 = scmp.eq.s32.totalorder %s16, 7
    %p60 = por %p58, %p59
    %p62 = scmp.ne.s32.totalorder %s47, %s61
    %p63 = scmp.eq.s32.totalorder %s16, 0
    %p64 = por %p62, %p63
    %s66 = sadd.s32 %s65, 1
    %p69 = scmp.eq.s32.totalorder %s10, 7
    %p70 = scmp.ne.s32.totalorder %s65, %s67
    %p71 = scmp.eq.s32.totalorder %s10, 0
    %p72 = por %p70, %p71
    %p73 = scmp.ne.s32.totalorder %s65, %s67
    %p74 = scmp.eq.s32.totalorder %s15, 7
    %p75 = por %p73, %p74
    %p76 = scmp.ne.s32.totalorder %s67, %s68
    %p77 = scmp.eq.s32.totalorder %s15, 0
    %p78 = por %p76, %p77
    %p79 = scmp.ne.s32.totalorder %s67, %s68
    %p80 = scmp.eq.s32.totalorder %s16, 7
    %p81 = por %p79, %p80
    %p83 = scmp.ne.s32.totalorder %s68, %s82
    %p84 = scmp.eq.s32.totalorder %s16, 0
    %p85 = por %p83, %p84
    %s86 = ssub.s32 %s10, %s17
    %p87 = scmp.eq.s32.totalorder %s86, 0
    %s89 = sadd.s32 %s88, 1
    %s90 = scalar_select %p87, %s88, %s89
    %p93 = pneg %p87
    %p94 = scmp.eq.s32.totalorder %s10, 7
    %p95 = por %p93, %p94
    %p96 = scmp.ne.s32.totalorder %s88, %s91
    %p97 = scmp.eq.s32.totalorder %s10, 0
    %p98 = por %p96, %p97
    %p99 = scmp.ne.s32.totalorder %s88, %s91
    %p100 = scmp.eq.s32.totalorder %s15, 7
    %p101 = por %p99, %p100
    %p102 = scmp.ne.s32.totalorder %s91, %s92
    %p103 = scmp.eq.s32.totalorder %s15, 0
    %p104 = por %p102, %p103
    %p105 = scmp.ne.s32.totalorder %s91, %s92
    %p106 = scmp.eq.s32.totalorder %s16, 7
    %p107 = por %p105, %p106
    %p109 = scmp.ne.s32.totalorder %s92, %s108
    %p110 = scmp.eq.s32.totalorder %s16, 0
    %p111 = por %p109, %p110
    %s112 = ssub.s32 %s10, %s17
    %p113 = scmp.eq.s32.totalorder %s112, 0
    %s115 = sadd.s32 %s114, 1
    %s116 = scalar_select %p113, %s114, %s115
    %p119 = pneg %p113
    %p120 = scmp.eq.s32.totalorder %s10, 7
    %p121 = por %p119, %p120
    %p122 = scmp.ne.s32.totalorder %s114, %s117
    %p123 = scmp.eq.s32.totalorder %s10, 0
    %p124 = por %p122, %p123
    %p125 = scmp.ne.s32.totalorder %s114, %s117
    %p126 = scmp.eq.s32.totalorder %s15, 7
    %p127 = por %p125, %p126
    %p128 = scmp.ne.s32.totalorder %s117, %s118
    %p129 = scmp.eq.s32.totalorder %s15, 0
    %p130 = por %p128, %p129
    %p131 = scmp.ne.s32.totalorder %s117, %s118
    %p132 = scmp.eq.s32.totalorder %s16, 7
    %p133 = por %p131, %p132
    %p135 = scmp.ne.s32.totalorder %s118, %s134
    %p136 = scmp.eq.s32.totalorder %s16, 0
    %p137 = por %p135, %p136
    %p138 = scmp.le.s32.totalorder 1, %s10
    %p139 = scmp.lt.s32.totalorder %s10, 9
    %p140 = pnand %p138, %p139
    %p141 = pneg %p140
    // Predicated region
    $region9: #{convnet_rse_forward.3} parent=5 // pred_check
      _
    $region10: #{convnet_rse_forward.3} parent=5 // pred_check_branch
      %143 = sbr.rel (%p140) target = $region12
    $region11: #{convnet_rse_forward.3} parent=5 // pred_region
      %s144 = ssub.s32 %s10, 1
      // Predicated region
      $region13: #{convnet_rse_forward.3} parent=11 // pred_check
        %p145 = pneg %p57
      $region14: #{convnet_rse_forward.3} parent=11 // pred_check_branch
        %147 = sbr.rel (%p145) target = $region16
      $region15: #{convnet_rse_forward.3} parent=11 // pred_region
        _
      $region16: #{convnet_rse_forward.3} parent=11 // pred_fallthru
        _
      // Predicated region
      $region17: #{convnet_rse_forward.3} parent=11 // pred_check
        %p148 = pneg %p78
      $region18: #{convnet_rse_forward.3} parent=11 // pred_check_branch
        %150 = sbr.rel (%p148) target = $region20
      $region19: #{convnet_rse_forward.3} parent=11 // pred_region
        _
      $region20: #{convnet_rse_forward.3} parent=11 // pred_fallthru
        _
    $region12: #{convnet_rse_forward.3} parent=5 // pred_fallthru
      _
    %p151 = scmp.lt.s32.totalorder %s10, 8
    // Predicated region
    $region21: #{convnet_rse_forward.3} parent=5 // pred_check
      %p152 = pneg %p151
    $region22: #{convnet_rse_forward.3} parent=5 // pred_check_branch
      %154 = sbr.rel (%p152) target = $region24
    $region23: #{convnet_rse_forward.3} parent=5 // pred_region
      // Predicated region
      $region25: #{convnet_rse_forward.3} parent=23 // pred_check
        %p155 = pneg %p30
      $region26: #{convnet_rse_forward.3} parent=23 // pred_check_branch
        %157 = sbr.rel (%p155) target = $region28
      $region27: #{convnet_rse_forward.3} parent=23 // pred_region
        %s158 = smul.u32 32, %s10
        %p159 = scmp.lt.s32.totalorder %s158, 255
        %s160 = scalar_select %p159, %s158, 255
        %s161 = smul.addr %s160, 4
        %s162 = scalar_lea.vmem %s0, %s161
        %s163 = smul.u32 32, %s10
      $region28: #{convnet_rse_forward.3} parent=23 // pred_fallthru
        _
      // Predicated region
      $region29: #{convnet_rse_forward.3} parent=23 // pred_check
        %p164 = pneg %p98
      $region30: #{convnet_rse_forward.3} parent=23 // pred_check_branch
        %166 = sbr.rel (%p164) target = $region32
      $region31: #{convnet_rse_forward.3} parent=23 // pred_region
        %s167 = smul.u32 32, %s10
        %p168 = scmp.lt.s32.totalorder %s167, 255
        %s169 = scalar_select %p168, %s167, 255
        %s170 = smul.addr %s169, 4
        %s171 = scalar_lea.vmem %s3, %s170
        %s172 = smul.u32 32, %s10
      $region32: #{convnet_rse_forward.3} parent=23 // pred_fallthru
        _
    $region24: #{convnet_rse_forward.3} parent=5 // pred_fallthru
      _
    %p173 = scmp.le.s32.totalorder 1, %s10
    %p174 = scmp.lt.s32.totalorder %s10, 9
    %p175 = pnand %p173, %p174
    %p176 = pneg %p175
    // Predicated region
    $region33: #{convnet_rse_forward.3} parent=5 // pred_check
      _
    $region34: #{convnet_rse_forward.3} parent=5 // pred_check_branch
      %178 = sbr.rel (%p175) target = $region36
    $region35: #{convnet_rse_forward.3} parent=5 // pred_region
      %s179 = ssub.s32 %s10, 1
      %s180 = smul.u32 32, %s15
      %p181 = scmp.lt.s32.totalorder %s180, 255
      %s182 = scalar_select %p181, %s180, 255
      %s183 = smul.addr %s182, 4
      %s184 = scalar_lea.vmem %s0, %s183
      %p185 = pneg %p36
      %p186 = pneg %p33
      %p187 = pneg %p57
      %p188 = pneg %p54
      %p189 = pneg %p78
      %p190 = pneg %p75
      %s191 = smul.u32 32, %s15
      %p192 = scmp.lt.s32.totalorder %s191, 255
      %s193 = scalar_select %p192, %s191, 255
      %s194 = smul.addr %s193, 4
      %s195 = scalar_lea.vmem %s3, %s194
      %p196 = pneg %p104
      %p197 = pneg %p101
      %p198 = pneg %p130
      %p199 = pneg %p127
      %s200 = smul.u32 32, %s15
      %p201 = scmp.lt.s32.totalorder %s200, 255
      %s202 = scalar_select %p201, %s200, 255
      %s203 = smul.addr %s202, 4
      %s204 = scalar_lea.vmem %s4, %s203
      %s205 = smul.u32 32, %s15
      %p206 = scmp.lt.s32.totalorder %s205, 255
      %s207 = scalar_select %p206, %s205, 255
      %s208 = smul.addr %s207, 4
      %s209 = scalar_lea.vmem %s0, %s208
      %s210 = smul.u32 32, %s15
      %s211 = smul.u32 32, %s15
      %p212 = scmp.lt.s32.totalorder %s211, 255
      %s213 = scalar_select %p212, %s211, 255
      %s214 = smul.addr %s213, 4
      %s215 = scalar_lea.vmem %s3, %s214
      %s216 = smul.u32 32, %s15
      %s217 = smul.u32 32, %s15
      %p218 = scmp.lt.s32.totalorder %s217, 255
      %s219 = scalar_select %p218, %s217, 255
      %s220 = smul.addr %s219, 4
      %s221 = scalar_lea.vmem %s4, %s220
      %s222 = smul.u32 32, %s15
      %v224 = vld [vmem:[%s209] sm:$0xf]
      %v225 = vld [vmem:[%s209 + $0x4] sm:$0xf]
      %v226 = vld [vmem:[%s209 + $0x8] sm:$0xf]
      %v227 = vld [vmem:[%s209 + $0xc] sm:$0xf]
      %v228 = vld [vmem:[%s209 + $0x10] sm:$0xf]
      %v229 = vld [vmem:[%s209 + $0x14] sm:$0xf]
      %v230 = vld [vmem:[%s209 + $0x18] sm:$0xf]
      %v231 = vld [vmem:[%s209 + $0x1c] sm:$0xf]
      %v232 = vld [vmem:[%s209 + $0x20] sm:$0xf]
      %v233 = vld [vmem:[%s209 + $0x24] sm:$0xf]
      %v234 = vld [vmem:[%s209 + $0x28] sm:$0xf]
      %v235 = vld [vmem:[%s209 + $0x2c] sm:$0xf]
      %v236 = vld [vmem:[%s209 + $0x30] sm:$0xf]
      %v237 = vld [vmem:[%s209 + $0x34] sm:$0xf]
      %v238 = vld [vmem:[%s209 + $0x38] sm:$0xf]
      %v239 = vld [vmem:[%s209 + $0x3c] sm:$0xf]
      %v240 = vld [vmem:[%s209 + $0x40] sm:$0xf]
      %v241 = vld [vmem:[%s209 + $0x44] sm:$0xf]
      %v242 = vld [vmem:[%s209 + $0x48] sm:$0xf]
      %v243 = vld [vmem:[%s209 + $0x4c] sm:$0xf]
      %v244 = vld [vmem:[%s209 + $0x50] sm:$0xf]
      %v245 = vld [vmem:[%s209 + $0x54] sm:$0xf]
      %v246 = vld [vmem:[%s209 + $0x58] sm:$0xf]
      %v247 = vld [vmem:[%s209 + $0x5c] sm:$0xf]
      %v248 = vld [vmem:[%s209 + $0x60] sm:$0xf]
      %v249 = vld [vmem:[%s209 + $0x64] sm:$0xf]
      %v250 = vld [vmem:[%s209 + $0x68] sm:$0xf]
      %v251 = vld [vmem:[%s209 + $0x6c] sm:$0xf]
      %v252 = vld [vmem:[%s209 + $0x70] sm:$0xf]
      %v253 = vld [vmem:[%s209 + $0x74] sm:$0xf]
      %v254 = vld [vmem:[%s209 + $0x78] sm:$0xf]
      %v255 = vld [vmem:[%s209 + $0x7c] sm:$0xf]
      %v256 = vld [vmem:[%s1] sm:$0xf]
      %v257 = vld [vmem:[%s1 + $0x4] sm:$0xf]
      %v258 = vld [vmem:[%s1 + $0x8] sm:$0xf]
      %v259 = vld [vmem:[%s1 + $0xc] sm:$0xf]
      %v260 = vld [vmem:[%s2] sm:$0x1]
      %v262 = vlaneseq
      %v263 = vshrl.u32 %v262, 7
      %v264 = vsub.s32 0, %v263
      %v265 = vrot.slane %v260, %v264
      %v299 = vunpack.c.l.b16 %v224
      %v300 = vunpack.c.l.b16 %v225
      %v301 = vunpack.c.l.b16 %v226
      %v302 = vunpack.c.l.b16 %v227
      %v303 = vunpack.c.l.b16 %v228
      %v304 = vunpack.c.l.b16 %v229
      %v305 = vunpack.c.l.b16 %v230
      %v306 = vunpack.c.l.b16 %v231
      %v307 = vunpack.c.l.b16 %v232
      %v308 = vunpack.c.l.b16 %v233
      %v309 = vunpack.c.l.b16 %v234
      %v310 = vunpack.c.l.b16 %v235
      %v311 = vunpack.c.l.b16 %v236
      %v312 = vunpack.c.l.b16 %v237
      %v313 = vunpack.c.l.b16 %v238
      %v314 = vunpack.c.l.b16 %v239
      %v315 = vunpack.c.l.b16 %v240
      %v316 = vunpack.c.l.b16 %v241
      %v317 = vunpack.c.l.b16 %v242
      %v318 = vunpack.c.l.b16 %v243
      %v319 = vunpack.c.l.b16 %v244
      %v320 = vunpack.c.l.b16 %v245
      %v321 = vunpack.c.l.b16 %v246
      %v322 = vunpack.c.l.b16 %v247
      %v323 = vunpack.c.l.b16 %v248
      %v324 = vunpack.c.l.b16 %v249
      %v325 = vunpack.c.l.b16 %v250
      %v326 = vunpack.c.l.b16 %v251
      %v327 = vunpack.c.l.b16 %v252
      %v328 = vunpack.c.l.b16 %v253
      %v329 = vunpack.c.l.b16 %v254
      %v330 = vunpack.c.l.b16 %v255
      %v331 = vpack.c.b16 %v300, %v299
      %v332 = vpack.c.b16 %v302, %v301
      %v333 = vpack.c.b16 %v304, %v303
      %v334 = vpack.c.b16 %v306, %v305
      %v335 = vpack.c.b16 %v308, %v307
      %v336 = vpack.c.b16 %v310, %v309
      %v337 = vpack.c.b16 %v312, %v311
      %v338 = vpack.c.b16 %v314, %v313
      %v339 = vpack.c.b16 %v316, %v315
      %v340 = vpack.c.b16 %v318, %v317
      %v341 = vpack.c.b16 %v320, %v319
      %v342 = vpack.c.b16 %v322, %v321
      %v343 = vpack.c.b16 %v324, %v323
      %v344 = vpack.c.b16 %v326, %v325
      %v345 = vpack.c.b16 %v328, %v327
      %v346 = vpack.c.b16 %v330, %v329
      %v351 = vunpack.c.l.b16 %v256
      %v352 = vunpack.c.l.b16 %v257
      %v353 = vunpack.c.l.b16 %v258
      %v354 = vunpack.c.l.b16 %v259
      %v355 = vpack.c.b16 %v352, %v351
      %v356 = vpack.c.b16 %v354, %v353
      %vm359 = vcmask 261120
      %v361 = vsel %vm359, %v331, 0
      %v364 = vsel %vm359, %v332, 0
      %v367 = vsel %vm359, %v333, 0
      %v370 = vsel %vm359, %v334, 0
      %v373 = vsel %vm359, %v335, 0
      %v376 = vsel %vm359, %v336, 0
      %v379 = vsel %vm359, %v337, 0
      %v382 = vsel %vm359, %v338, 0
      %v385 = vsel %vm359, %v339, 0
      %v388 = vsel %vm359, %v340, 0
      %v391 = vsel %vm359, %v341, 0
      %v394 = vsel %vm359, %v342, 0
      %v397 = vsel %vm359, %v343, 0
      %v400 = vsel %vm359, %v344, 0
      %v403 = vsel %vm359, %v345, 0
      %v406 = vsel %vm359, %v346, 0
      %408 = vmatprep.subr.bf16.mxu0 0
      %409 = vmatpush1.bf16.msra.mxu0 %v355
      %410 = vmatprep.subr.bf16.mxu0 0
      %411 = vmatpush1.bf16.msra.mxu0 %v356
      %412 = vmatprep.subr.bf16.mxu0 0
      %413 = vmatpush1.bf16.msra.mxu0 0
      %414 = vmatprep.subr.bf16.mxu0 0
      %415 = vmatpush1.bf16.msra.mxu0 0
      %416 = vmatprep.subr.bf16.mxu0 0
      %417 = vmatpush1.bf16.msra.mxu0 0
      %418 = vmatprep.subr.bf16.mxu0 0
      %419 = vmatpush1.bf16.msra.mxu0 0
      %420 = vmatprep.subr.bf16.mxu0 0
      %421 = vmatpush1.bf16.msra.mxu0 0
      %422 = vmatprep.subr.bf16.mxu0 0
      %423 = vmatpush1.bf16.msra.mxu0 0
      %424 = vmatprep.subr.bf16.mxu0 0
      %425 = vmatpush1.bf16.msra.mxu0 0
      %426 = vmatprep.subr.bf16.mxu0 0
      %427 = vmatpush1.bf16.msra.mxu0 0
      %428 = vmatprep.subr.bf16.mxu0 0
      %429 = vmatpush1.bf16.msra.mxu0 0
      %430 = vmatprep.subr.bf16.mxu0 0
      %431 = vmatpush1.bf16.msra.mxu0 0
      %432 = vmatprep.subr.bf16.mxu0 0
      %433 = vmatpush1.bf16.msra.mxu0 0
      %434 = vmatprep.subr.bf16.mxu0 0
      %435 = vmatpush1.bf16.msra.mxu0 0
      %436 = vmatprep.subr.bf16.mxu0 0
      %437 = vmatpush1.bf16.msra.mxu0 0
      %438 = vmatprep.subr.bf16.mxu0 0
      %439 = vmatpush1.bf16.msra.mxu0 0
      %440 = vmatprep.mubr.bf16.mxu0 0
      %441 = vmatmul.mubr.bf16.gmra.mrb[0].mxu0 %v361
      %v442 = vpop.f32.mrb[0].mxu0
      %v443 = vadd.f32 %v265, %v442
      %v444 = vpop.f32.mrb[0].mxu0
      %v445 = vpop.f32.mrb[0].mxu0
      %v446 = vadd.f32 %v265, %v445
      %v447 = vpop.f32.mrb[0].mxu0
      %448 = vmatprep.mubr.bf16.mxu0 0
      %449 = vmatmul.mubr.bf16.gmra.mrb[0].mxu0 %v364
      %v450 = vpop.f32.mrb[0].mxu0
      %v451 = vadd.f32 %v265, %v450
      %v452 = vpop.f32.mrb[0].mxu0
      %v453 = vpop.f32.mrb[0].mxu0
      %v454 = vadd.f32 %v265, %v453
      %v455 = vpop.f32.mrb[0].mxu0
      %456 = vmatprep.mubr.bf16.mxu0 0
      %457 = vmatmul.mubr.bf16.gmra.mrb[0].mxu0 %v367
      %v458 = vpop.f32.mrb[0].mxu0
      %v459 = vadd.f32 %v265, %v458
      %v460 = vpop.f32.mrb[0].mxu0
      %v461 = vpop.f32.mrb[0].mxu0
      %v462 = vadd.f32 %v265, %v461
      %v463 = vpop.f32.mrb[0].mxu0
      %464 = vmatprep.mubr.bf16.mxu0 0
      %465 = vmatmul.mubr.bf16.gmra.mrb[0].mxu0 %v370
      %v466 = vpop.f32.mrb[0].mxu0
      %v467 = vadd.f32 %v265, %v466
      %v468 = vpop.f32.mrb[0].mxu0
      %v469 = vpop.f32.mrb[0].mxu0
      %v470 = vadd.f32 %v265, %v469
      %v471 = vpop.f32.mrb[0].mxu0
      %472 = vmatprep.mubr.bf16.mxu0 0
      %473 = vmatmul.mubr.bf16.gmra.mrb[0].mxu0 %v373
      %v474 = vpop.f32.mrb[0].mxu0
      %v475 = vadd.f32 %v265, %v474
      %v476 = vpop.f32.mrb[0].mxu0
      %v477 = vpop.f32.mrb[0].mxu0
      %v478 = vadd.f32 %v265, %v477
      %v479 = vpop.f32.mrb[0].mxu0
      %480 = vmatprep.mubr.bf16.mxu0 0
      %481 = vmatmul.mubr.bf16.gmra.mrb[0].mxu0 %v376
      %v482 = vpop.f32.mrb[0].mxu0
      %v483 = vadd.f32 %v265, %v482
      %v484 = vpop.f32.mrb[0].mxu0
      %v485 = vpop.f32.mrb[0].mxu0
      %v486 = vadd.f32 %v265, %v485
      %v487 = vpop.f32.mrb[0].mxu0
      %488 = vmatprep.mubr.bf16.mxu0 0
      %489 = vmatmul.mubr.bf16.gmra.mrb[0].mxu0 %v379
      %v490 = vpop.f32.mrb[0].mxu0
      %v491 = vadd.f32 %v265, %v490
      %v492 = vpop.f32.mrb[0].mxu0
      %v493 = vpop.f32.mrb[0].mxu0
      %v494 = vadd.f32 %v265, %v493
      %v495 = vpop.f32.mrb[0].mxu0
      %496 = vmatprep.mubr.bf16.mxu0 0
      %497 = vmatmul.mubr.bf16.gmra.mrb[0].mxu0 %v382
      %v498 = vpop.f32.mrb[0].mxu0
      %v499 = vadd.f32 %v265, %v498
      %v500 = vpop.f32.mrb[0].mxu0
      %v501 = vpop.f32.mrb[0].mxu0
      %v502 = vadd.f32 %v265, %v501
      %v503 = vpop.f32.mrb[0].mxu0
      %504 = vmatprep.mubr.bf16.mxu0 0
      %505 = vmatmul.mubr.bf16.gmra.mrb[0].mxu0 %v385
      %v506 = vpop.f32.mrb[0].mxu0
      %v507 = vadd.f32 %v265, %v506
      %v508 = vpop.f32.mrb[0].mxu0
      %v509 = vpop.f32.mrb[0].mxu0
      %v510 = vadd.f32 %v265, %v509
      %v511 = vpop.f32.mrb[0].mxu0
      %512 = vmatprep.mubr.bf16.mxu0 0
      %513 = vmatmul.mubr.bf16.gmra.mrb[0].mxu0 %v388
      %v514 = vpop.f32.mrb[0].mxu0
      %v515 = vadd.f32 %v265, %v514
      %v516 = vpop.f32.mrb[0].mxu0
      %v517 = vpop.f32.mrb[0].mxu0
      %v518 = vadd.f32 %v265, %v517
      %v519 = vpop.f32.mrb[0].mxu0
      %520 = vmatprep.mubr.bf16.mxu0 0
      %521 = vmatmul.mubr.bf16.gmra.mrb[0].mxu0 %v391
      %v522 = vpop.f32.mrb[0].mxu0
      %v523 = vadd.f32 %v265, %v522
      %v524 = vpop.f32.mrb[0].mxu0
      %v525 = vpop.f32.mrb[0].mxu0
      %v526 = vadd.f32 %v265, %v525
      %v527 = vpop.f32.mrb[0].mxu0
      %528 = vmatprep.mubr.bf16.mxu0 0
      %529 = vmatmul.mubr.bf16.gmra.mrb[0].mxu0 %v394
      %v530 = vpop.f32.mrb[0].mxu0
      %v531 = vadd.f32 %v265, %v530
      %v532 = vpop.f32.mrb[0].mxu0
      %v533 = vpop.f32.mrb[0].mxu0
      %v534 = vadd.f32 %v265, %v533
      %v535 = vpop.f32.mrb[0].mxu0
      %536 = vmatprep.mubr.bf16.mxu0 0
      %537 = vmatmul.mubr.bf16.gmra.mrb[0].mxu0 %v397
      %v538 = vpop.f32.mrb[0].mxu0
      %v539 = vadd.f32 %v265, %v538
      %v540 = vpop.f32.mrb[0].mxu0
      %v541 = vpop.f32.mrb[0].mxu0
      %v542 = vadd.f32 %v265, %v541
      %v543 = vpop.f32.mrb[0].mxu0
      %544 = vmatprep.mubr.bf16.mxu0 0
      %545 = vmatmul.mubr.bf16.gmra.mrb[0].mxu0 %v400
      %v546 = vpop.f32.mrb[0].mxu0
      %v547 = vadd.f32 %v265, %v546
      %v548 = vpop.f32.mrb[0].mxu0
      %v549 = vpop.f32.mrb[0].mxu0
      %v550 = vadd.f32 %v265, %v549
      %v551 = vpop.f32.mrb[0].mxu0
      %552 = vmatprep.mubr.bf16.mxu0 0
      %553 = vmatmul.mubr.bf16.gmra.mrb[0].mxu0 %v403
      %v554 = vpop.f32.mrb[0].mxu0
      %v555 = vadd.f32 %v265, %v554
      %v556 = vpop.f32.mrb[0].mxu0
      %v557 = vpop.f32.mrb[0].mxu0
      %v558 = vadd.f32 %v265, %v557
      %v559 = vpop.f32.mrb[0].mxu0
      %560 = vmatprep.mubr.bf16.mxu0 0
      %561 = vmatmul.mubr.bf16.gmra.mrb[0].mxu0 %v406
      %v562 = vpop.f32.mrb[0].mxu0
      %v563 = vadd.f32 %v265, %v562
      %v564 = vpop.f32.mrb[0].mxu0
      %v565 = vpop.f32.mrb[0].mxu0
      %v566 = vadd.f32 %v265, %v565
      %v567 = vpop.f32.mrb[0].mxu0
      %568 = vdwg.mxu0
      %v569 = vmax.f32 %v443, 0.0
      %v570 = vmax.f32 %v446, 0.0
      %v571 = vmax.f32 %v451, 0.0
      %v572 = vmax.f32 %v454, 0.0
      %v573 = vmax.f32 %v459, 0.0
      %v574 = vmax.f32 %v462, 0.0
      %v575 = vmax.f32 %v467, 0.0
      %v576 = vmax.f32 %v470, 0.0
      %v577 = vmax.f32 %v475, 0.0
      %v578 = vmax.f32 %v478, 0.0
      %v579 = vmax.f32 %v483, 0.0
      %v580 = vmax.f32 %v486, 0.0
      %v581 = vmax.f32 %v491, 0.0
      %v582 = vmax.f32 %v494, 0.0
      %v583 = vmax.f32 %v499, 0.0
      %v584 = vmax.f32 %v502, 0.0
      %v585 = vmax.f32 %v507, 0.0
      %v586 = vmax.f32 %v510, 0.0
      %v587 = vmax.f32 %v515, 0.0
      %v588 = vmax.f32 %v518, 0.0
      %v589 = vmax.f32 %v523, 0.0
      %v590 = vmax.f32 %v526, 0.0
      %v591 = vmax.f32 %v531, 0.0
      %v592 = vmax.f32 %v534, 0.0
      %v593 = vmax.f32 %v539, 0.0
      %v594 = vmax.f32 %v542, 0.0
      %v595 = vmax.f32 %v547, 0.0
      %v596 = vmax.f32 %v550, 0.0
      %v597 = vmax.f32 %v555, 0.0
      %v598 = vmax.f32 %v558, 0.0
      %v599 = vmax.f32 %v563, 0.0
      %v600 = vmax.f32 %v566, 0.0
      %v601 = vld [vmem:[%s215] sm:$0xf]
      %v602 = vld [vmem:[%s215 + $0x4] sm:$0xf]
      %v603 = vld [vmem:[%s215 + $0x8] sm:$0xf]
      %v604 = vld [vmem:[%s215 + $0xc] sm:$0xf]
      %v605 = vld [vmem:[%s215 + $0x10] sm:$0xf]
      %v606 = vld [vmem:[%s215 + $0x14] sm:$0xf]
      %v607 = vld [vmem:[%s215 + $0x18] sm:$0xf]
      %v608 = vld [vmem:[%s215 + $0x1c] sm:$0xf]
      %v609 = vld [vmem:[%s215 + $0x20] sm:$0xf]
      %v610 = vld [vmem:[%s215 + $0x24] sm:$0xf]
      %v611 = vld [vmem:[%s215 + $0x28] sm:$0xf]
      %v612 = vld [vmem:[%s215 + $0x2c] sm:$0xf]
      %v613 = vld [vmem:[%s215 + $0x30] sm:$0xf]
      %v614 = vld [vmem:[%s215 + $0x34] sm:$0xf]
      %v615 = vld [vmem:[%s215 + $0x38] sm:$0xf]
      %v616 = vld [vmem:[%s215 + $0x3c] sm:$0xf]
      %v617 = vld [vmem:[%s215 + $0x40] sm:$0xf]
      %v618 = vld [vmem:[%s215 + $0x44] sm:$0xf]
      %v619 = vld [vmem:[%s215 + $0x48] sm:$0xf]
      %v620 = vld [vmem:[%s215 + $0x4c] sm:$0xf]
      %v621 = vld [vmem:[%s215 + $0x50] sm:$0xf]
      %v622 = vld [vmem:[%s215 + $0x54] sm:$0xf]
      %v623 = vld [vmem:[%s215 + $0x58] sm:$0xf]
      %v624 = vld [vmem:[%s215 + $0x5c] sm:$0xf]
      %v625 = vld [vmem:[%s215 + $0x60] sm:$0xf]
      %v626 = vld [vmem:[%s215 + $0x64] sm:$0xf]
      %v627 = vld [vmem:[%s215 + $0x68] sm:$0xf]
      %v628 = vld [vmem:[%s215 + $0x6c] sm:$0xf]
      %v629 = vld [vmem:[%s215 + $0x70] sm:$0xf]
      %v630 = vld [vmem:[%s215 + $0x74] sm:$0xf]
      %v631 = vld [vmem:[%s215 + $0x78] sm:$0xf]
      %v632 = vld [vmem:[%s215 + $0x7c] sm:$0xf]
      %v633 = vunpack.c.l.bf16 %v601
      %v634 = vunpack.c.l.bf16 %v602
      %v635 = vunpack.c.l.bf16 %v603
      %v636 = vunpack.c.l.bf16 %v604
      %v637 = vunpack.c.l.bf16 %v605
      %v638 = vunpack.c.l.bf16 %v606
      %v639 = vunpack.c.l.bf16 %v607
      %v640 = vunpack.c.l.bf16 %v608
      %v641 = vunpack.c.l.bf16 %v609
      %v642 = vunpack.c.l.bf16 %v610
      %v643 = vunpack.c.l.bf16 %v611
      %v644 = vunpack.c.l.bf16 %v612
      %v645 = vunpack.c.l.bf16 %v613
      %v646 = vunpack.c.l.bf16 %v614
      %v647 = vunpack.c.l.bf16 %v615
      %v648 = vunpack.c.l.bf16 %v616
      %v649 = vunpack.c.l.bf16 %v617
      %v650 = vunpack.c.l.bf16 %v618
      %v651 = vunpack.c.l.bf16 %v619
      %v652 = vunpack.c.l.bf16 %v620
      %v653 = vunpack.c.l.bf16 %v621
      %v654 = vunpack.c.l.bf16 %v622
      %v655 = vunpack.c.l.bf16 %v623
      %v656 = vunpack.c.l.bf16 %v624
      %v657 = vunpack.c.l.bf16 %v625
      %v658 = vunpack.c.l.bf16 %v626
      %v659 = vunpack.c.l.bf16 %v627
      %v660 = vunpack.c.l.bf16 %v628
      %v661 = vunpack.c.l.bf16 %v629
      %v662 = vunpack.c.l.bf16 %v630
      %v663 = vunpack.c.l.bf16 %v631
      %v664 = vunpack.c.l.bf16 %v632
      %v665 = vadd.f32 %v569, %v633
      %v666 = vadd.f32 %v570, %v634
      %v667 = vadd.f32 %v571, %v635
      %v668 = vadd.f32 %v572, %v636
      %v669 = vadd.f32 %v573, %v637
      %v670 = vadd.f32 %v574, %v638
      %v671 = vadd.f32 %v575, %v639
      %v672 = vadd.f32 %v576, %v640
      %v673 = vadd.f32 %v577, %v641
      %v674 = vadd.f32 %v578, %v642
      %v675 = vadd.f32 %v579, %v643
      %v676 = vadd.f32 %v580, %v644
      %v677 = vadd.f32 %v581, %v645
      %v678 = vadd.f32 %v582, %v646
      %v679 = vadd.f32 %v583, %v647
      %v680 = vadd.f32 %v584, %v648
      %v681 = vadd.f32 %v585, %v649
      %v682 = vadd.f32 %v586, %v650
      %v683 = vadd.f32 %v587, %v651
      %v684 = vadd.f32 %v588, %v652
      %v685 = vadd.f32 %v589, %v653
      %v686 = vadd.f32 %v590, %v654
      %v687 = vadd.f32 %v591, %v655
      %v688 = vadd.f32 %v592, %v656
      %v689 = vadd.f32 %v593, %v657
      %v690 = vadd.f32 %v594, %v658
      %v691 = vadd.f32 %v595, %v659
      %v692 = vadd.f32 %v596, %v660
      %v693 = vadd.f32 %v597, %v661
      %v694 = vadd.f32 %v598, %v662
      %v695 = vadd.f32 %v599, %v663
      %v696 = vadd.f32 %v600, %v664
      %v697 = vpack.c.bf16 %v666, %v665
      %v698 = vpack.c.bf16 %v668, %v667
      %v699 = vpack.c.bf16 %v670, %v669
      %v700 = vpack.c.bf16 %v672, %v671
      %v701 = vpack.c.bf16 %v674, %v673
      %v702 = vpack.c.bf16 %v676, %v675
      %v703 = vpack.c.bf16 %v678, %v677
      %v704 = vpack.c.bf16 %v680, %v679
      %v705 = vpack.c.bf16 %v682, %v681
      %v706 = vpack.c.bf16 %v684, %v683
      %v707 = vpack.c.bf16 %v686, %v685
      %v708 = vpack.c.bf16 %v688, %v687
      %v709 = vpack.c.bf16 %v690, %v689
      %v710 = vpack.c.bf16 %v692, %v691
      %v711 = vpack.c.bf16 %v694, %v693
      %v712 = vpack.c.bf16 %v696, %v695
      %v729 = vunpack.c.l.b16 %v697
      %v730 = vunpack.c.h.b16 %v697
      %v731 = vunpack.c.l.b16 %v698
      %v732 = vunpack.c.h.b16 %v698
      %v733 = vunpack.c.l.b16 %v699
      %v734 = vunpack.c.h.b16 %v699
      %v735 = vunpack.c.l.b16 %v700
      %v736 = vunpack.c.h.b16 %v700
      %v737 = vunpack.c.l.b16 %v701
      %v738 = vunpack.c.h.b16 %v701
      %v739 = vunpack.c.l.b16 %v702
      %v740 = vunpack.c.h.b16 %v702
      %v741 = vunpack.c.l.b16 %v703
      %v742 = vunpack.c.h.b16 %v703
      %v743 = vunpack.c.l.b16 %v704
      %v744 = vunpack.c.h.b16 %v704
      %v745 = vunpack.c.l.b16 %v705
      %v746 = vunpack.c.h.b16 %v705
      %v747 = vunpack.c.l.b16 %v706
      %v748 = vunpack.c.h.b16 %v706
      %v749 = vunpack.c.l.b16 %v707
      %v750 = vunpack.c.h.b16 %v707
      %v751 = vunpack.c.l.b16 %v708
      %v752 = vunpack.c.h.b16 %v708
      %v753 = vunpack.c.l.b16 %v709
      %v754 = vunpack.c.h.b16 %v709
      %v755 = vunpack.c.l.b16 %v710
      %v756 = vunpack.c.h.b16 %v710
      %v757 = vunpack.c.l.b16 %v711
      %v758 = vunpack.c.h.b16 %v711
      %v759 = vunpack.c.l.b16 %v712
      %v760 = vunpack.c.h.b16 %v712
      %v761 = vpack.c.b16 %v729, %v729
      %v762 = vpack.c.b16 %v730, %v730
      %v763 = vpack.c.b16 %v731, %v731
      %v764 = vpack.c.b16 %v732, %v732
      %v765 = vpack.c.b16 %v733, %v733
      %v766 = vpack.c.b16 %v734, %v734
      %v767 = vpack.c.b16 %v735, %v735
      %v768 = vpack.c.b16 %v736, %v736
      %v769 = vpack.c.b16 %v737, %v737
      %v770 = vpack.c.b16 %v738, %v738
      %v771 = vpack.c.b16 %v739, %v739
      %v772 = vpack.c.b16 %v740, %v740
      %v773 = vpack.c.b16 %v741, %v741
      %v774 = vpack.c.b16 %v742, %v742
      %v775 = vpack.c.b16 %v743, %v743
      %v776 = vpack.c.b16 %v744, %v744
      %v777 = vpack.c.b16 %v745, %v745
      %v778 = vpack.c.b16 %v746, %v746
      %v779 = vpack.c.b16 %v747, %v747
      %v780 = vpack.c.b16 %v748, %v748
      %v781 = vpack.c.b16 %v749, %v749
      %v782 = vpack.c.b16 %v750, %v750
      %v783 = vpack.c.b16 %v751, %v751
      %v784 = vpack.c.b16 %v752, %v752
      %v785 = vpack.c.b16 %v753, %v753
      %v786 = vpack.c.b16 %v754, %v754
      %v787 = vpack.c.b16 %v755, %v755
      %v788 = vpack.c.b16 %v756, %v756
      %v789 = vpack.c.b16 %v757, %v757
      %v790 = vpack.c.b16 %v758, %v758
      %v791 = vpack.c.b16 %v759, %v759
      %v792 = vpack.c.b16 %v760, %v760
      %vm825 = vcmask 257024
      %826 = vst.msk [vmem:[%s221] sm:$0xf] %vm825, %v761
      %827 = vst.msk [vmem:[%s221 + $0x4] sm:$0xf] %vm825, %v762
      %828 = vst.msk [vmem:[%s221 + $0x8] sm:$0xf] %vm825, %v763
      %829 = vst.msk [vmem:[%s221 + $0xc] sm:$0xf] %vm825, %v764
      %830 = vst.msk [vmem:[%s221 + $0x10] sm:$0xf] %vm825, %v765
      %831 = vst.msk [vmem:[%s221 + $0x14] sm:$0xf] %vm825, %v766
      %832 = vst.msk [vmem:[%s221 + $0x18] sm:$0xf] %vm825, %v767
      %833 = vst.msk [vmem:[%s221 + $0x1c] sm:$0xf] %vm825, %v768
      %834 = vst.msk [vmem:[%s221 + $0x20] sm:$0xf] %vm825, %v769
      %835 = vst.msk [vmem:[%s221 + $0x24] sm:$0xf] %vm825, %v770
      %836 = vst.msk [vmem:[%s221 + $0x28] sm:$0xf] %vm825, %v771
      %837 = vst.msk [vmem:[%s221 + $0x2c] sm:$0xf] %vm825, %v772
      %838 = vst.msk [vmem:[%s221 + $0x30] sm:$0xf] %vm825, %v773
      %839 = vst.msk [vmem:[%s221 + $0x34] sm:$0xf] %vm825, %v774
      %840 = vst.msk [vmem:[%s221 + $0x38] sm:$0xf] %vm825, %v775
      %841 = vst.msk [vmem:[%s221 + $0x3c] sm:$0xf] %vm825, %v776
      %842 = vst.msk [vmem:[%s221 + $0x40] sm:$0xf] %vm825, %v777
      %843 = vst.msk [vmem:[%s221 + $0x44] sm:$0xf] %vm825, %v778
      %844 = vst.msk [vmem:[%s221 + $0x48] sm:$0xf] %vm825, %v779
      %845 = vst.msk [vmem:[%s221 + $0x4c] sm:$0xf] %vm825, %v780
      %846 = vst.msk [vmem:[%s221 + $0x50] sm:$0xf] %vm825, %v781
      %847 = vst.msk [vmem:[%s221 + $0x54] sm:$0xf] %vm825, %v782
      %848 = vst.msk [vmem:[%s221 + $0x58] sm:$0xf] %vm825, %v783
      %849 = vst.msk [vmem:[%s221 + $0x5c] sm:$0xf] %vm825, %v784
      %850 = vst.msk [vmem:[%s221 + $0x60] sm:$0xf] %vm825, %v785
      %851 = vst.msk [vmem:[%s221 + $0x64] sm:$0xf] %vm825, %v786
      %852 = vst.msk [vmem:[%s221 + $0x68] sm:$0xf] %vm825, %v787
      %853 = vst.msk [vmem:[%s221 + $0x6c] sm:$0xf] %vm825, %v788
      %854 = vst.msk [vmem:[%s221 + $0x70] sm:$0xf] %vm825, %v789
      %855 = vst.msk [vmem:[%s221 + $0x74] sm:$0xf] %vm825, %v790
      %856 = vst.msk [vmem:[%s221 + $0x78] sm:$0xf] %vm825, %v791
      %857 = vst.msk [vmem:[%s221 + $0x7c] sm:$0xf] %vm825, %v792
      %s858 = smul.u32 32, %s15
      %p859 = scmp.lt.s32.totalorder %s858, 255
      %s860 = scalar_select %p859, %s858, 255
      %s861 = smul.addr %s860, 4
      %s862 = scalar_lea.vmem %s4, %s861
      // Predicated region
      $region37: #{convnet_rse_forward.3} parent=35 // pred_check
        %p863 = pneg %p127
      $region38: #{convnet_rse_forward.3} parent=35 // pred_check_branch
        %865 = sbr.rel (%p863) target = $region40
      $region39: #{convnet_rse_forward.3} parent=35 // pred_region
        %s866 = smul.u32 32, %s15
      $region40: #{convnet_rse_forward.3} parent=35 // pred_fallthru
        _
    $region36: #{convnet_rse_forward.3} parent=5 // pred_fallthru
      _
    %p867 = scmp.le.s32.totalorder 2, %s10
    // Predicated region
    $region41: #{convnet_rse_forward.3} parent=5 // pred_check
      %p868 = pneg %p867
    $region42: #{convnet_rse_forward.3} parent=5 // pred_check_branch
      %870 = sbr.rel (%p868) target = $region44
    $region43: #{convnet_rse_forward.3} parent=5 // pred_region
      %s871 = ssub.s32 %s10, 2
      // Predicated region
      $region45: #{convnet_rse_forward.3} parent=43 // pred_check
        %p872 = pneg %p133
      $region46: #{convnet_rse_forward.3} parent=43 // pred_check_branch
        %874 = sbr.rel (%p872) target = $region48
      $region47: #{convnet_rse_forward.3} parent=43 // pred_region
        %s875 = smul.u32 32, %s16
        %p876 = scmp.lt.s32.totalorder %s875, 255
        %s877 = scalar_select %p876, %s875, 255
        %s878 = smul.addr %s877, 4
        %s879 = scalar_lea.vmem %s4, %s878
      $region48: #{convnet_rse_forward.3} parent=43 // pred_fallthru
        _
    $region44: #{convnet_rse_forward.3} parent=5 // pred_fallthru
      _
  $region6: #{convnet_rse_forward.3} parent=0 // loop_footer
    %s14 = sadd.s32 1, %s10
  $region7: #{convnet_rse_forward.3} parent=0 // loop_footer_branch
    %9 = sbr.rel target = $region3
  $region8: #{convnet_rse_forward.3} parent=0 // loop_exit
    _

// kernel: convnet_rse_forward.4
$region0: #{convnet_rse_forward.4}
  #allocation0 [shape = 'u32[]', space=smem, size = 0x4, offset = 0x4, fixed_abs, tag = 'smem constant byte address 0x4 - core index']
  #allocation1 [shape = 'u32[144,128]{1,0:T(1,128)}', space=vmem, size = 0x12000, scoped, tag = 'internal scratch']
  %s0 = inlined_call_operand.vmem [shape: bf16[1792,288], index: 0, kind: input, shape index: {}]
  %s1 = inlined_call_operand.vmem [shape: bf16[288,32], index: 1, kind: input, shape index: {}]
  %s2 = inlined_call_operand.vmem [shape: f32[1,32], index: 2, kind: input, shape index: {}]
  %s3 = inlined_call_operand.vmem [shape: bf16[1792,32], index: 3, kind: output, shape index: {}]
  %s4 = sld [smem:[#allocation0]]
  $region45: #{convnet_rse_forward.4} parent=0
    _
  %s6 = ssub.s32 1, %s4
  %s7 = scalar_select 0, %s6, %s4
  loop: start=0, step=1, limit=9
  $region2: #{convnet_rse_forward.4} parent=0 // loop_pre_header
    _
  $region3: #{convnet_rse_forward.4} parent=0 // loop_header
    %s9 = sphi 0, %s13
    %p10 = scmp.ge.s32.totalorder %s9, 9
    %s19 = sphi 0, %s21
    %s22 = sphi 0, %s19
    %s23 = sphi 0, %s22
    %s39 = sphi 0, %s23
    %s43 = sphi 0, %s43
    %s45 = sphi 0, %s43
    %s46 = sphi 0, %s45
    %s60 = sphi 0, %s46
    %s64 = sphi 0, %s64
    %s66 = sphi 0, %s64
    %s67 = sphi 0, %s66
    %s81 = sphi 0, %s67
    %s87 = sphi 0, %s89
    %s90 = sphi 0, %s87
    %s91 = sphi 0, %s90
    %s107 = sphi 0, %s91
  $region4: #{convnet_rse_forward.4} parent=0 // loop_header_branch
    %12 = sbr.rel (%p10) target = $region8
  $region5: #{convnet_rse_forward.4} parent=0 // loop_body
    %s14 = ssub.s32 %s9, 1
    %s15 = ssub.s32 %s9, 2
    %s16 = sadd.s32 %s9, 1
    %s17 = ssub.s32 %s9, %s16
    %p18 = scmp.eq.s32.totalorder %s17, 0
    %s20 = sadd.s32 %s19, 1
    %s21 = scalar_select %p18, %s19, %s20
    %p24 = pneg %p18
    %p25 = scmp.eq.s32.totalorder %s9, 6
    %p26 = por %p24, %p25
    %p27 = scmp.ne.s32.totalorder %s19, %s22
    %p28 = scmp.eq.s32.totalorder %s9, 0
    %p29 = por %p27, %p28
    %p30 = scmp.ne.s32.totalorder %s19, %s22
    %p31 = scmp.eq.s32.totalorder %s14, 6
    %p32 = por %p30, %p31
    %p33 = scmp.ne.s32.totalorder %s22, %s23
    %p34 = scmp.eq.s32.totalorder %s14, 0
    %p35 = por %p33, %p34
    %p36 = scmp.ne.s32.totalorder %s22, %s23
    %p37 = scmp.eq.s32.totalorder %s15, 6
    %p38 = por %p36, %p37
    %p40 = scmp.ne.s32.totalorder %s23, %s39
    %p41 = scmp.eq.s32.totalorder %s15, 0
    %p42 = por %p40, %p41
    %s44 = sadd.s32 %s43, 1
    %p47 = scmp.eq.s32.totalorder %s9, 6
    %p48 = scmp.ne.s32.totalorder %s43, %s45
    %p49 = scmp.eq.s32.totalorder %s9, 0
    %p50 = por %p48, %p49
    %p51 = scmp.ne.s32.totalorder %s43, %s45
    %p52 = scmp.eq.s32.totalorder %s14, 6
    %p53 = por %p51, %p52
    %p54 = scmp.ne.s32.totalorder %s45, %s46
    %p55 = scmp.eq.s32.totalorder %s14, 0
    %p56 = por %p54, %p55
    %p57 = scmp.ne.s32.totalorder %s45, %s46
    %p58 = scmp.eq.s32.totalorder %s15, 6
    %p59 = por %p57, %p58
    %p61 = scmp.ne.s32.totalorder %s46, %s60
    %p62 = scmp.eq.s32.totalorder %s15, 0
    %p63 = por %p61, %p62
    %s65 = sadd.s32 %s64, 1
    %p68 = scmp.eq.s32.totalorder %s9, 6
    %p69 = scmp.ne.s32.totalorder %s64, %s66
    %p70 = scmp.eq.s32.totalorder %s9, 0
    %p71 = por %p69, %p70
    %p72 = scmp.ne.s32.totalorder %s64, %s66
    %p73 = scmp.eq.s32.totalorder %s14, 6
    %p74 = por %p72, %p73
    %p75 = scmp.ne.s32.totalorder %s66, %s67
    %p76 = scmp.eq.s32.totalorder %s14, 0
    %p77 = por %p75, %p76
    %p78 = scmp.ne.s32.totalorder %s66, %s67
    %p79 = scmp.eq.s32.totalorder %s15, 6
    %p80 = por %p78, %p79
    %p82 = scmp.ne.s32.totalorder %s67, %s81
    %p83 = scmp.eq.s32.totalorder %s15, 0
    %p84 = por %p82, %p83
    %s85 = ssub.s32 %s9, %s16
    %p86 = scmp.eq.s32.totalorder %s85, 0
    %s88 = sadd.s32 %s87, 1
    %s89 = scalar_select %p86, %s87, %s88
    %p92 = pneg %p86
    %p93 = scmp.eq.s32.totalorder %s9, 6
    %p94 = por %p92, %p93
    %p95 = scmp.ne.s32.totalorder %s87, %s90
    %p96 = scmp.eq.s32.totalorder %s9, 0
    %p97 = por %p95, %p96
    %p98 = scmp.ne.s32.totalorder %s87, %s90
    %p99 = scmp.eq.s32.totalorder %s14, 6
    %p100 = por %p98, %p99
    %p101 = scmp.ne.s32.totalorder %s90, %s91
    %p102 = scmp.eq.s32.totalorder %s14, 0
    %p103 = por %p101, %p102
    %p104 = scmp.ne.s32.totalorder %s90, %s91
    %p105 = scmp.eq.s32.totalorder %s15, 6
    %p106 = por %p104, %p105
    %p108 = scmp.ne.s32.totalorder %s91, %s107
    %p109 = scmp.eq.s32.totalorder %s15, 0
    %p110 = por %p108, %p109
    %p111 = scmp.le.s32.totalorder 1, %s9
    %p112 = scmp.lt.s32.totalorder %s9, 8
    %p113 = pnand %p111, %p112
    %p114 = pneg %p113
    // Predicated region
    $region9: #{convnet_rse_forward.4} parent=5 // pred_check
      _
    $region10: #{convnet_rse_forward.4} parent=5 // pred_check_branch
      %116 = sbr.rel (%p113) target = $region12
    $region11: #{convnet_rse_forward.4} parent=5 // pred_region
      %s117 = ssub.s32 %s9, 1
      // Predicated region
      $region13: #{convnet_rse_forward.4} parent=11 // pred_check
        %p118 = pneg %p56
      $region14: #{convnet_rse_forward.4} parent=11 // pred_check_branch
        %120 = sbr.rel (%p118) target = $region16
      $region15: #{convnet_rse_forward.4} parent=11 // pred_region
        _
      $region16: #{convnet_rse_forward.4} parent=11 // pred_fallthru
        _
      // Predicated region
      $region17: #{convnet_rse_forward.4} parent=11 // pred_check
        %p121 = pneg %p77
      $region18: #{convnet_rse_forward.4} parent=11 // pred_check_branch
        %123 = sbr.rel (%p121) target = $region20
      $region19: #{convnet_rse_forward.4} parent=11 // pred_region
        _
      $region20: #{convnet_rse_forward.4} parent=11 // pred_fallthru
        _
    $region12: #{convnet_rse_forward.4} parent=5 // pred_fallthru
      _
    %p124 = scmp.lt.s32.totalorder %s9, 7
    // Predicated region
    $region21: #{convnet_rse_forward.4} parent=5 // pred_check
      %p125 = pneg %p124
    $region22: #{convnet_rse_forward.4} parent=5 // pred_check_branch
      %127 = sbr.rel (%p125) target = $region24
    $region23: #{convnet_rse_forward.4} parent=5 // pred_region
      // Predicated region
      $region25: #{convnet_rse_forward.4} parent=23 // pred_check
        %p128 = pneg %p29
      $region26: #{convnet_rse_forward.4} parent=23 // pred_check_branch
        %130 = sbr.rel (%p128) target = $region28
      $region27: #{convnet_rse_forward.4} parent=23 // pred_region
        %s131 = smul.u32 32, %s9
        %p132 = scmp.lt.s32.totalorder %s131, 223
        %s133 = scalar_select %p132, %s131, 223
        %s134 = smul.addr %s133, 3
        %s135 = smul.addr %s134, 4
        %s136 = scalar_lea.vmem %s0, %s135
        %s137 = smul.u32 32, %s9
      $region28: #{convnet_rse_forward.4} parent=23 // pred_fallthru
        _
    $region24: #{convnet_rse_forward.4} parent=5 // pred_fallthru
      _
    %p138 = scmp.le.s32.totalorder 1, %s9
    %p139 = scmp.lt.s32.totalorder %s9, 8
    %p140 = pnand %p138, %p139
    %p141 = pneg %p140
    // Predicated region
    $region29: #{convnet_rse_forward.4} parent=5 // pred_check
      _
    $region30: #{convnet_rse_forward.4} parent=5 // pred_check_branch
      %143 = sbr.rel (%p140) target = $region32
    $region31: #{convnet_rse_forward.4} parent=5 // pred_region
      %s144 = ssub.s32 %s9, 1
      %s145 = smul.u32 32, %s14
      %p146 = scmp.lt.s32.totalorder %s145, 223
      %s147 = scalar_select %p146, %s145, 223
      %s148 = smul.addr %s147, 3
      %s149 = smul.addr %s148, 4
      %s150 = scalar_lea.vmem %s0, %s149
      %p151 = pneg %p35
      %p152 = pneg %p32
      %p153 = pneg %p56
      %p154 = pneg %p53
      %p155 = pneg %p77
      %p156 = pneg %p74
      %p157 = pneg %p103
      %p158 = pneg %p100
      %s159 = smul.u32 32, %s14
      %p160 = scmp.lt.s32.totalorder %s159, 223
      %s161 = scalar_select %p160, %s159, 223
      %s162 = smul.addr %s161, 4
      %s163 = scalar_lea.vmem %s3, %s162
      %s164 = smul.u32 32, %s14
      %p165 = scmp.lt.s32.totalorder %s164, 223
      %s166 = scalar_select %p165, %s164, 223
      %s167 = smul.addr %s166, 3
      %s168 = smul.addr %s167, 4
      %s169 = scalar_lea.vmem %s0, %s168
      %s170 = smul.u32 32, %s14
      %s171 = smul.u32 32, %s14
      %p172 = scmp.lt.s32.totalorder %s171, 223
      %s173 = scalar_select %p172, %s171, 223
      %s174 = smul.addr %s173, 4
      %s175 = scalar_lea.vmem %s3, %s174
      %s176 = smul.u32 32, %s14
      %v178 = vld [vmem:[%s169] sm:$0xff]
      %v179 = vld [vmem:[%s169 + $0x8] sm:$0xf]
      %v180 = vld [vmem:[%s169 + $0xc] sm:$0xff]
      %v181 = vld [vmem:[%s169 + $0x14] sm:$0xf]
      %v182 = vld [vmem:[%s169 + $0x18] sm:$0xff]
      %v183 = vld [vmem:[%s169 + $0x20] sm:$0xf]
      %v184 = vld [vmem:[%s169 + $0x24] sm:$0xff]
      %v185 = vld [vmem:[%s169 + $0x2c] sm:$0xf]
      %v186 = vld [vmem:[%s169 + $0x30] sm:$0xff]
      %v187 = vld [vmem:[%s169 + $0x38] sm:$0xf]
      %v188 = vld [vmem:[%s169 + $0x3c] sm:$0xff]
      %v189 = vld [vmem:[%s169 + $0x44] sm:$0xf]
      %v190 = vld [vmem:[%s169 + $0x48] sm:$0xff]
      %v191 = vld [vmem:[%s169 + $0x50] sm:$0xf]
      %v192 = vld [vmem:[%s169 + $0x54] sm:$0xff]
      %v193 = vld [vmem:[%s169 + $0x5c] sm:$0xf]
      %v194 = vld [vmem:[%s169 + $0x60] sm:$0xff]
      %v195 = vld [vmem:[%s169 + $0x68] sm:$0xf]
      %v196 = vld [vmem:[%s169 + $0x6c] sm:$0xff]
      %v197 = vld [vmem:[%s169 + $0x74] sm:$0xf]
      %v198 = vld [vmem:[%s169 + $0x78] sm:$0xff]
      %v199 = vld [vmem:[%s169 + $0x80] sm:$0xf]
      %v200 = vld [vmem:[%s169 + $0x84] sm:$0xff]
      %v201 = vld [vmem:[%s169 + $0x8c] sm:$0xf]
      %v202 = vld [vmem:[%s169 + $0x90] sm:$0xff]
      %v203 = vld [vmem:[%s169 + $0x98] sm:$0xf]
      %v204 = vld [vmem:[%s169 + $0x9c] sm:$0xff]
      %v205 = vld [vmem:[%s169 + $0xa4] sm:$0xf]
      %v206 = vld [vmem:[%s169 + $0xa8] sm:$0xff]
      %v207 = vld [vmem:[%s169 + $0xb0] sm:$0xf]
      %v208 = vld [vmem:[%s169 + $0xb4] sm:$0xff]
      %v209 = vld [vmem:[%s169 + $0xbc] sm:$0xf]
      %v210 = vld [vmem:[%s169 + $0xc0] sm:$0xff]
      %v211 = vld [vmem:[%s169 + $0xc8] sm:$0xf]
      %v212 = vld [vmem:[%s169 + $0xcc] sm:$0xff]
      %v213 = vld [vmem:[%s169 + $0xd4] sm:$0xf]
      %v214 = vld [vmem:[%s169 + $0xd8] sm:$0xff]
      %v215 = vld [vmem:[%s169 + $0xe0] sm:$0xf]
      %v216 = vld [vmem:[%s169 + $0xe4] sm:$0xff]
      %v217 = vld [vmem:[%s169 + $0xec] sm:$0xf]
      %v218 = vld [vmem:[%s169 + $0xf0] sm:$0xff]
      %v219 = vld [vmem:[%s169 + $0xf8] sm:$0xf]
      %v220 = vld [vmem:[%s169 + $0xfc] sm:$0xff]
      %v221 = vld [vmem:[%s169 + $0x104] sm:$0xf]
      %v222 = vld [vmem:[%s169 + $0x108] sm:$0xff]
      %v223 = vld [vmem:[%s169 + $0x110] sm:$0xf]
      %v224 = vld [vmem:[%s169 + $0x114] sm:$0xff]
      %v225 = vld [vmem:[%s169 + $0x11c] sm:$0xf]
      %v226 = vld [vmem:[%s169 + $0x120] sm:$0xff]
      %v227 = vld [vmem:[%s169 + $0x128] sm:$0xf]
      %v228 = vld [vmem:[%s169 + $0x12c] sm:$0xff]
      %v229 = vld [vmem:[%s169 + $0x134] sm:$0xf]
      %v230 = vld [vmem:[%s169 + $0x138] sm:$0xff]
      %v231 = vld [vmem:[%s169 + $0x140] sm:$0xf]
      %v232 = vld [vmem:[%s169 + $0x144] sm:$0xff]
      %v233 = vld [vmem:[%s169 + $0x14c] sm:$0xf]
      %v234 = vld [vmem:[%s169 + $0x150] sm:$0xff]
      %v235 = vld [vmem:[%s169 + $0x158] sm:$0xf]
      %v236 = vld [vmem:[%s169 + $0x15c] sm:$0xff]
      %v237 = vld [vmem:[%s169 + $0x164] sm:$0xf]
      %v238 = vld [vmem:[%s169 + $0x168] sm:$0xff]
      %v239 = vld [vmem:[%s169 + $0x170] sm:$0xf]
      %v240 = vld [vmem:[%s169 + $0x174] sm:$0xff]
      %v241 = vld [vmem:[%s169 + $0x17c] sm:$0xf]
      %v242 = vld [vmem:[%s1] sm:$0xf]
      %v243 = vld [vmem:[%s1 + $0x4] sm:$0xf]
      %v244 = vld [vmem:[%s1 + $0x8] sm:$0xf]
      %v245 = vld [vmem:[%s1 + $0xc] sm:$0xf]
      %v246 = vld [vmem:[%s1 + $0x10] sm:$0xf]
      %v247 = vld [vmem:[%s1 + $0x14] sm:$0xf]
      %v248 = vld [vmem:[%s1 + $0x18] sm:$0xf]
      %v249 = vld [vmem:[%s1 + $0x1c] sm:$0xf]
      %v250 = vld [vmem:[%s1 + $0x20] sm:$0xf]
      %v251 = vld [vmem:[%s1 + $0x24] sm:$0xf]
      %v252 = vld [vmem:[%s1 + $0x28] sm:$0xf]
      %v253 = vld [vmem:[%s1 + $0x2c] sm:$0xf]
      %v254 = vld [vmem:[%s1 + $0x30] sm:$0xf]
      %v255 = vld [vmem:[%s1 + $0x34] sm:$0xf]
      %v256 = vld [vmem:[%s1 + $0x38] sm:$0xf]
      %v257 = vld [vmem:[%s1 + $0x3c] sm:$0xf]
      %v258 = vld [vmem:[%s1 + $0x40] sm:$0xf]
      %v259 = vld [vmem:[%s1 + $0x44] sm:$0xf]
      %v260 = vld [vmem:[%s1 + $0x48] sm:$0xf]
      %v261 = vld [vmem:[%s1 + $0x4c] sm:$0xf]
      %v262 = vld [vmem:[%s1 + $0x50] sm:$0xf]
      %v263 = vld [vmem:[%s1 + $0x54] sm:$0xf]
      %v264 = vld [vmem:[%s1 + $0x58] sm:$0xf]
      %v265 = vld [vmem:[%s1 + $0x5c] sm:$0xf]
      %v266 = vld [vmem:[%s1 + $0x60] sm:$0xf]
      %v267 = vld [vmem:[%s1 + $0x64] sm:$0xf]
      %v268 = vld [vmem:[%s1 + $0x68] sm:$0xf]
      %v269 = vld [vmem:[%s1 + $0x6c] sm:$0xf]
      %v270 = vld [vmem:[%s1 + $0x70] sm:$0xf]
      %v271 = vld [vmem:[%s1 + $0x74] sm:$0xf]
      %v272 = vld [vmem:[%s1 + $0x78] sm:$0xf]
      %v273 = vld [vmem:[%s1 + $0x7c] sm:$0xf]
      %v274 = vld [vmem:[%s1 + $0x80] sm:$0xf]
      %v275 = vld [vmem:[%s1 + $0x84] sm:$0xf]
      %v276 = vld [vmem:[%s1 + $0x88] sm:$0xf]
      %v277 = vld [vmem:[%s1 + $0x8c] sm:$0xf]
      %v278 = vld [vmem:[%s2] sm:$0x1]
      %v280 = vlaneseq
      %v281 = vshrl.u32 %v280, 7
      %v282 = vsub.s32 0, %v281
      %v283 = vrot.slane %v278, %v282
      %v349 = vunpack.c.l.b16 %v178
      %v350 = vunpack.c.h.b16 %v178
      %v351 = vunpack.c.l.b16 %v179
      %v352 = vunpack.c.l.b16 %v180
      %v353 = vunpack.c.h.b16 %v180
      %v354 = vunpack.c.l.b16 %v181
      %v355 = vunpack.c.l.b16 %v182
      %v356 = vunpack.c.h.b16 %v182
      %v357 = vunpack.c.l.b16 %v183
      %v358 = vunpack.c.l.b16 %v184
      %v359 = vunpack.c.h.b16 %v184
      %v360 = vunpack.c.l.b16 %v185
      %v361 = vunpack.c.l.b16 %v186
      %v362 = vunpack.c.h.b16 %v186
      %v363 = vunpack.c.l.b16 %v187
      %v364 = vunpack.c.l.b16 %v188
      %v365 = vunpack.c.h.b16 %v188
      %v366 = vunpack.c.l.b16 %v189
      %v367 = vunpack.c.l.b16 %v190
      %v368 = vunpack.c.h.b16 %v190
      %v369 = vunpack.c.l.b16 %v191
      %v370 = vunpack.c.l.b16 %v192
      %v371 = vunpack.c.h.b16 %v192
      %v372 = vunpack.c.l.b16 %v193
      %v373 = vunpack.c.l.b16 %v194
      %v374 = vunpack.c.h.b16 %v194
      %v375 = vunpack.c.l.b16 %v195
      %v376 = vunpack.c.l.b16 %v196
      %v377 = vunpack.c.h.b16 %v196
      %v378 = vunpack.c.l.b16 %v197
      %v379 = vunpack.c.l.b16 %v198
      %v380 = vunpack.c.h.b16 %v198
      %v381 = vunpack.c.l.b16 %v199
      %v382 = vunpack.c.l.b16 %v200
      %v383 = vunpack.c.h.b16 %v200
      %v384 = vunpack.c.l.b16 %v201
      %v385 = vunpack.c.l.b16 %v202
      %v386 = vunpack.c.h.b16 %v202
      %v387 = vunpack.c.l.b16 %v203
      %v388 = vunpack.c.l.b16 %v204
      %v389 = vunpack.c.h.b16 %v204
      %v390 = vunpack.c.l.b16 %v205
      %v391 = vunpack.c.l.b16 %v206
      %v392 = vunpack.c.h.b16 %v206
      %v393 = vunpack.c.l.b16 %v207
      %v394 = vunpack.c.l.b16 %v208
      %v395 = vunpack.c.h.b16 %v208
      %v396 = vunpack.c.l.b16 %v209
      %v397 = vunpack.c.l.b16 %v210
      %v398 = vunpack.c.h.b16 %v210
      %v399 = vunpack.c.l.b16 %v211
      %v400 = vunpack.c.l.b16 %v212
      %v401 = vunpack.c.h.b16 %v212
      %v402 = vunpack.c.l.b16 %v213
      %v403 = vunpack.c.l.b16 %v214
      %v404 = vunpack.c.h.b16 %v214
      %v405 = vunpack.c.l.b16 %v215
      %v406 = vunpack.c.l.b16 %v216
      %v407 = vunpack.c.h.b16 %v216
      %v408 = vunpack.c.l.b16 %v217
      %v409 = vunpack.c.l.b16 %v218
      %v410 = vunpack.c.h.b16 %v218
      %v411 = vunpack.c.l.b16 %v219
      %v412 = vunpack.c.l.b16 %v220
      %v413 = vunpack.c.h.b16 %v220
      %v414 = vunpack.c.l.b16 %v221
      %v415 = vunpack.c.l.b16 %v222
      %v416 = vunpack.c.h.b16 %v222
      %v417 = vunpack.c.l.b16 %v223
      %v418 = vunpack.c.l.b16 %v224
      %v419 = vunpack.c.h.b16 %v224
      %v420 = vunpack.c.l.b16 %v225
      %v421 = vunpack.c.l.b16 %v226
      %v422 = vunpack.c.h.b16 %v226
      %v423 = vunpack.c.l.b16 %v227
      %v424 = vunpack.c.l.b16 %v228
      %v425 = vunpack.c.h.b16 %v228
      %v426 = vunpack.c.l.b16 %v229
      %v427 = vunpack.c.l.b16 %v230
      %v428 = vunpack.c.h.b16 %v230
      %v429 = vunpack.c.l.b16 %v231
      %v430 = vunpack.c.l.b16 %v232
      %v431 = vunpack.c.h.b16 %v232
      %v432 = vunpack.c.l.b16 %v233
      %v433 = vunpack.c.l.b16 %v234
      %v434 = vunpack.c.h.b16 %v234
      %v435 = vunpack.c.l.b16 %v235
      %v436 = vunpack.c.l.b16 %v236
      %v437 = vunpack.c.h.b16 %v236
      %v438 = vunpack.c.l.b16 %v237
      %v439 = vunpack.c.l.b16 %v238
      %v440 = vunpack.c.h.b16 %v238
      %v441 = vunpack.c.l.b16 %v239
      %v442 = vunpack.c.l.b16 %v240
      %v443 = vunpack.c.h.b16 %v240
      %v444 = vunpack.c.l.b16 %v241
      %v445 = vpack.c.b16 %v352, %v349
      %v446 = vpack.c.b16 %v353, %v350
      %v447 = vpack.c.b16 %v354, %v351
      %v448 = vpack.c.b16 %v358, %v355
      %v449 = vpack.c.b16 %v359, %v356
      %v450 = vpack.c.b16 %v360, %v357
      %v451 = vpack.c.b16 %v364, %v361
      %v452 = vpack.c.b16 %v365, %v362
      %v453 = vpack.c.b16 %v366, %v363
      %v454 = vpack.c.b16 %v370, %v367
      %v455 = vpack.c.b16 %v371, %v368
      %v456 = vpack.c.b16 %v372, %v369
      %v457 = vpack.c.b16 %v376, %v373
      %v458 = vpack.c.b16 %v377, %v374
      %v459 = vpack.c.b16 %v378, %v375
      %v460 = vpack.c.b16 %v382, %v379
      %v461 = vpack.c.b16 %v383, %v380
      %v462 = vpack.c.b16 %v384, %v381
      %v463 = vpack.c.b16 %v388, %v385
      %v464 = vpack.c.b16 %v389, %v386
      %v465 = vpack.c.b16 %v390, %v387
      %v466 = vpack.c.b16 %v394, %v391
      %v467 = vpack.c.b16 %v395, %v392
      %v468 = vpack.c.b16 %v396, %v393
      %v469 = vpack.c.b16 %v400, %v397
      %v470 = vpack.c.b16 %v401, %v398
      %v471 = vpack.c.b16 %v402, %v399
      %v472 = vpack.c.b16 %v406, %v403
      %v473 = vpack.c.b16 %v407, %v404
      %v474 = vpack.c.b16 %v408, %v405
      %v475 = vpack.c.b16 %v412, %v409
      %v476 = vpack.c.b16 %v413, %v410
      %v477 = vpack.c.b16 %v414, %v411
      %v478 = vpack.c.b16 %v418, %v415
      %v479 = vpack.c.b16 %v419, %v416
      %v480 = vpack.c.b16 %v420, %v417
      %v481 = vpack.c.b16 %v424, %v421
      %v482 = vpack.c.b16 %v425, %v422
      %v483 = vpack.c.b16 %v426, %v423
      %v484 = vpack.c.b16 %v430, %v427
      %v485 = vpack.c.b16 %v431, %v428
      %v486 = vpack.c.b16 %v432, %v429
      %v487 = vpack.c.b16 %v436, %v433
      %v488 = vpack.c.b16 %v437, %v434
      %v489 = vpack.c.b16 %v438, %v435
      %v490 = vpack.c.b16 %v442, %v439
      %v491 = vpack.c.b16 %v443, %v440
      %v492 = vpack.c.b16 %v444, %v441
      %v561 = vunpack.c.l.b16 %v242
      %v562 = vunpack.c.l.b16 %v243
      %v563 = vunpack.c.l.b16 %v244
      %v564 = vunpack.c.l.b16 %v245
      %v565 = vunpack.c.l.b16 %v246
      %v566 = vunpack.c.l.b16 %v247
      %v567 = vunpack.c.l.b16 %v248
      %v568 = vunpack.c.l.b16 %v249
      %v569 = vunpack.c.l.b16 %v250
      %v570 = vunpack.c.l.b16 %v251
      %v571 = vunpack.c.l.b16 %v252
      %v572 = vunpack.c.l.b16 %v253
      %v573 = vunpack.c.l.b16 %v254
      %v574 = vunpack.c.l.b16 %v255
      %v575 = vunpack.c.l.b16 %v256
      %v576 = vunpack.c.l.b16 %v257
      %v577 = vunpack.c.l.b16 %v258
      %v578 = vunpack.c.l.b16 %v259
      %v579 = vunpack.c.l.b16 %v260
      %v580 = vunpack.c.l.b16 %v261
      %v581 = vunpack.c.l.b16 %v262
      %v582 = vunpack.c.l.b16 %v263
      %v583 = vunpack.c.l.b16 %v264
      %v584 = vunpack.c.l.b16 %v265
      %v585 = vunpack.c.l.b16 %v266
      %v586 = vunpack.c.l.b16 %v267
      %v587 = vunpack.c.l.b16 %v268
      %v588 = vunpack.c.l.b16 %v269
      %v589 = vunpack.c.l.b16 %v270
      %v590 = vunpack.c.l.b16 %v271
      %v591 = vunpack.c.l.b16 %v272
      %v592 = vunpack.c.l.b16 %v273
      %v593 = vunpack.c.l.b16 %v274
      %v594 = vunpack.c.l.b16 %v275
      %v595 = vunpack.c.l.b16 %v276
      %v596 = vunpack.c.l.b16 %v277
      %v597 = vpack.c.b16 %v562, %v561
      %v598 = vpack.c.b16 %v564, %v563
      %v599 = vpack.c.b16 %v566, %v565
      %v600 = vpack.c.b16 %v568, %v567
      %v601 = vpack.c.b16 %v570, %v569
      %v602 = vpack.c.b16 %v572, %v571
      %v603 = vpack.c.b16 %v574, %v573
      %v604 = vpack.c.b16 %v576, %v575
      %v605 = vpack.c.b16 %v578, %v577
      %v606 = vpack.c.b16 %v580, %v579
      %v607 = vpack.c.b16 %v582, %v581
      %v608 = vpack.c.b16 %v584, %v583
      %v609 = vpack.c.b16 %v586, %v585
      %v610 = vpack.c.b16 %v588, %v587
      %v611 = vpack.c.b16 %v590, %v589
      %v612 = vpack.c.b16 %v592, %v591
      %v613 = vpack.c.b16 %v594, %v593
      %v614 = vpack.c.b16 %v596, %v595
      %vm633 = vcmask 261120
      %v635 = vsel %vm633, %v447, 0
      %v638 = vsel %vm633, %v450, 0
      %v641 = vsel %vm633, %v453, 0
      %v644 = vsel %vm633, %v456, 0
      %v647 = vsel %vm633, %v459, 0
      %v650 = vsel %vm633, %v462, 0
      %v653 = vsel %vm633, %v465, 0
      %v656 = vsel %vm633, %v468, 0
      %v659 = vsel %vm633, %v471, 0
      %v662 = vsel %vm633, %v474, 0
      %v665 = vsel %vm633, %v477, 0
      %v668 = vsel %vm633, %v480, 0
      %v671 = vsel %vm633, %v483, 0
      %v674 = vsel %vm633, %v486, 0
      %v677 = vsel %vm633, %v489, 0
      %v680 = vsel %vm633, %v492, 0
      %682 = vmatprep.subr.bf16.mxu0 0
      %683 = vmatpush1.bf16.msra.mxu0 %v597
      %684 = vmatprep.subr.bf16.mxu0 0
      %685 = vmatpush1.bf16.msra.mxu0 %v598
      %686 = vmatprep.subr.bf16.mxu0 0
      %687 = vmatpush1.bf16.msra.mxu0 %v599
      %688 = vmatprep.subr.bf16.mxu0 0
      %689 = vmatpush1.bf16.msra.mxu0 %v600
      %690 = vmatprep.subr.bf16.mxu0 0
      %691 = vmatpush1.bf16.msra.mxu0 %v601
      %692 = vmatprep.subr.bf16.mxu0 0
      %693 = vmatpush1.bf16.msra.mxu0 %v602
      %694 = vmatprep.subr.bf16.mxu0 0
      %695 = vmatpush1.bf16.msra.mxu0 %v603
      %696 = vmatprep.subr.bf16.mxu0 0
      %697 = vmatpush1.bf16.msra.mxu0 %v604
      %698 = vmatprep.subr.bf16.mxu0 0
      %699 = vmatpush1.bf16.msra.mxu0 %v605
      %700 = vmatprep.subr.bf16.mxu0 0
      %701 = vmatpush1.bf16.msra.mxu0 %v606
      %702 = vmatprep.subr.bf16.mxu0 0
      %703 = vmatpush1.bf16.msra.mxu0 %v607
      %704 = vmatprep.subr.bf16.mxu0 0
      %705 = vmatpush1.bf16.msra.mxu0 %v608
      %706 = vmatprep.subr.bf16.mxu0 0
      %707 = vmatpush1.bf16.msra.mxu0 %v609
      %708 = vmatprep.subr.bf16.mxu0 0
      %709 = vmatpush1.bf16.msra.mxu0 %v610
      %710 = vmatprep.subr.bf16.mxu0 0
      %711 = vmatpush1.bf16.msra.mxu0 %v611
      %712 = vmatprep.subr.bf16.mxu0 0
      %713 = vmatpush1.bf16.msra.mxu0 %v612
      %714 = vmatprep.mubr.bf16.mxu0 %v446
      %715 = vmatmul.mubr.bf16.gmra.mrb[0].mxu0 %v445
      %v716 = vpop.f32.mrb[0].mxu0
      %v717 = vadd.f32 %v283, %v716
      %v718 = vpop.f32.mrb[0].mxu0
      %v719 = vpop.f32.mrb[0].mxu0
      %v720 = vadd.f32 %v283, %v719
      %v721 = vpop.f32.mrb[0].mxu0
      %722 = vmatprep.mubr.bf16.mxu0 %v449
      %723 = vmatmul.mubr.bf16.gmra.mrb[0].mxu0 %v448
      %v724 = vpop.f32.mrb[0].mxu0
      %v725 = vadd.f32 %v283, %v724
      %v726 = vpop.f32.mrb[0].mxu0
      %v727 = vpop.f32.mrb[0].mxu0
      %v728 = vadd.f32 %v283, %v727
      %v729 = vpop.f32.mrb[0].mxu0
      %730 = vmatprep.mubr.bf16.mxu0 %v452
      %731 = vmatmul.mubr.bf16.gmra.mrb[0].mxu0 %v451
      %v732 = vpop.f32.mrb[0].mxu0
      %v733 = vadd.f32 %v283, %v732
      %v734 = vpop.f32.mrb[0].mxu0
      %v735 = vpop.f32.mrb[0].mxu0
      %v736 = vadd.f32 %v283, %v735
      %v737 = vpop.f32.mrb[0].mxu0
      %738 = vmatprep.mubr.bf16.mxu0 %v455
      %739 = vmatmul.mubr.bf16.gmra.mrb[0].mxu0 %v454
      %v740 = vpop.f32.mrb[0].mxu0
      %v741 = vadd.f32 %v283, %v740
      %v742 = vpop.f32.mrb[0].mxu0
      %v743 = vpop.f32.mrb[0].mxu0
      %v744 = vadd.f32 %v283, %v743
      %v745 = vpop.f32.mrb[0].mxu0
      %746 = vmatprep.mubr.bf16.mxu0 %v458
      %747 = vmatmul.mubr.bf16.gmra.mrb[0].mxu0 %v457
      %v748 = vpop.f32.mrb[0].mxu0
      %v749 = vadd.f32 %v283, %v748
      %v750 = vpop.f32.mrb[0].mxu0
      %v751 = vpop.f32.mrb[0].mxu0
      %v752 = vadd.f32 %v283, %v751
      %v753 = vpop.f32.mrb[0].mxu0
      %754 = vmatprep.mubr.bf16.mxu0 %v461
      %755 = vmatmul.mubr.bf16.gmra.mrb[0].mxu0 %v460
      %v756 = vpop.f32.mrb[0].mxu0
      %v757 = vadd.f32 %v283, %v756
      %v758 = vpop.f32.mrb[0].mxu0
      %v759 = vpop.f32.mrb[0].mxu0
      %v760 = vadd.f32 %v283, %v759
      %v761 = vpop.f32.mrb[0].mxu0
      %762 = vmatprep.mubr.bf16.mxu0 %v464
      %763 = vmatmul.mubr.bf16.gmra.mrb[0].mxu0 %v463
      %v764 = vpop.f32.mrb[0].mxu0
      %v765 = vadd.f32 %v283, %v764
      %v766 = vpop.f32.mrb[0].mxu0
      %v767 = vpop.f32.mrb[0].mxu0
      %v768 = vadd.f32 %v283, %v767
      %v769 = vpop.f32.mrb[0].mxu0
      %770 = vmatprep.mubr.bf16.mxu0 %v467
      %771 = vmatmul.mubr.bf16.gmra.mrb[0].mxu0 %v466
      %v772 = vpop.f32.mrb[0].mxu0
      %v773 = vadd.f32 %v283, %v772
      %v774 = vpop.f32.mrb[0].mxu0
      %v775 = vpop.f32.mrb[0].mxu0
      %v776 = vadd.f32 %v283, %v775
      %v777 = vpop.f32.mrb[0].mxu0
      %778 = vmatprep.mubr.bf16.mxu0 %v470
      %779 = vmatmul.mubr.bf16.gmra.mrb[0].mxu0 %v469
      %v780 = vpop.f32.mrb[0].mxu0
      %v781 = vadd.f32 %v283, %v780
      %v782 = vpop.f32.mrb[0].mxu0
      %v783 = vpop.f32.mrb[0].mxu0
      %v784 = vadd.f32 %v283, %v783
      %v785 = vpop.f32.mrb[0].mxu0
      %786 = vmatprep.mubr.bf16.mxu0 %v473
      %787 = vmatmul.mubr.bf16.gmra.mrb[0].mxu0 %v472
      %v788 = vpop.f32.mrb[0].mxu0
      %v789 = vadd.f32 %v283, %v788
      %v790 = vpop.f32.mrb[0].mxu0
      %v791 = vpop.f32.mrb[0].mxu0
      %v792 = vadd.f32 %v283, %v791
      %v793 = vpop.f32.mrb[0].mxu0
      %794 = vmatprep.mubr.bf16.mxu0 %v476
      %795 = vmatmul.mubr.bf16.gmra.mrb[0].mxu0 %v475
      %v796 = vpop.f32.mrb[0].mxu0
      %v797 = vadd.f32 %v283, %v796
      %v798 = vpop.f32.mrb[0].mxu0
      %v799 = vpop.f32.mrb[0].mxu0
      %v800 = vadd.f32 %v283, %v799
      %v801 = vpop.f32.mrb[0].mxu0
      %802 = vmatprep.mubr.bf16.mxu0 %v479
      %803 = vmatmul.mubr.bf16.gmra.mrb[0].mxu0 %v478
      %v804 = vpop.f32.mrb[0].mxu0
      %v805 = vadd.f32 %v283, %v804
      %v806 = vpop.f32.mrb[0].mxu0
      %v807 = vpop.f32.mrb[0].mxu0
      %v808 = vadd.f32 %v283, %v807
      %v809 = vpop.f32.mrb[0].mxu0
      %810 = vmatprep.mubr.bf16.mxu0 %v482
      %811 = vmatmul.mubr.bf16.gmra.mrb[0].mxu0 %v481
      %v812 = vpop.f32.mrb[0].mxu0
      %v813 = vadd.f32 %v283, %v812
      %v814 = vpop.f32.mrb[0].mxu0
      %v815 = vpop.f32.mrb[0].mxu0
      %v816 = vadd.f32 %v283, %v815
      %v817 = vpop.f32.mrb[0].mxu0
      %818 = vmatprep.mubr.bf16.mxu0 %v485
      %819 = vmatmul.mubr.bf16.gmra.mrb[0].mxu0 %v484
      %v820 = vpop.f32.mrb[0].mxu0
      %v821 = vadd.f32 %v283, %v820
      %v822 = vpop.f32.mrb[0].mxu0
      %v823 = vpop.f32.mrb[0].mxu0
      %v824 = vadd.f32 %v283, %v823
      %v825 = vpop.f32.mrb[0].mxu0
      %826 = vmatprep.mubr.bf16.mxu0 %v488
      %827 = vmatmul.mubr.bf16.gmra.mrb[0].mxu0 %v487
      %v828 = vpop.f32.mrb[0].mxu0
      %v829 = vadd.f32 %v283, %v828
      %v830 = vpop.f32.mrb[0].mxu0
      %v831 = vpop.f32.mrb[0].mxu0
      %v832 = vadd.f32 %v283, %v831
      %v833 = vpop.f32.mrb[0].mxu0
      %834 = vmatprep.mubr.bf16.mxu0 %v491
      %835 = vmatmul.mubr.bf16.gmra.mrb[0].mxu0 %v490
      %v836 = vpop.f32.mrb[0].mxu0
      %v837 = vadd.f32 %v283, %v836
      %v838 = vpop.f32.mrb[0].mxu0
      %v839 = vpop.f32.mrb[0].mxu0
      %v840 = vadd.f32 %v283, %v839
      %v841 = vpop.f32.mrb[0].mxu0
      %842 = vdwg.mxu0
      %843 = vmatprep.subr.bf16.mxu0 0
      %844 = vmatpush1.bf16.msra.mxu0 %v613
      %845 = vmatprep.subr.bf16.mxu0 0
      %846 = vmatpush1.bf16.msra.mxu0 %v614
      %847 = vmatprep.subr.bf16.mxu0 0
      %848 = vmatpush1.bf16.msra.mxu0 0
      %849 = vmatprep.subr.bf16.mxu0 0
      %850 = vmatpush1.bf16.msra.mxu0 0
      %851 = vmatprep.subr.bf16.mxu0 0
      %852 = vmatpush1.bf16.msra.mxu0 0
      %853 = vmatprep.subr.bf16.mxu0 0
      %854 = vmatpush1.bf16.msra.mxu0 0
      %855 = vmatprep.subr.bf16.mxu0 0
      %856 = vmatpush1.bf16.msra.mxu0 0
      %857 = vmatprep.subr.bf16.mxu0 0
      %858 = vmatpush1.bf16.msra.mxu0 0
      %859 = vmatprep.subr.bf16.mxu0 0
      %860 = vmatpush1.bf16.msra.mxu0 0
      %861 = vmatprep.subr.bf16.mxu0 0
      %862 = vmatpush1.bf16.msra.mxu0 0
      %863 = vmatprep.subr.bf16.mxu0 0
      %864 = vmatpush1.bf16.msra.mxu0 0
      %865 = vmatprep.subr.bf16.mxu0 0
      %866 = vmatpush1.bf16.msra.mxu0 0
      %867 = vmatprep.subr.bf16.mxu0 0
      %868 = vmatpush1.bf16.msra.mxu0 0
      %869 = vmatprep.subr.bf16.mxu0 0
      %870 = vmatpush1.bf16.msra.mxu0 0
      %871 = vmatprep.subr.bf16.mxu0 0
      %872 = vmatpush1.bf16.msra.mxu0 0
      %873 = vmatprep.subr.bf16.mxu0 0
      %874 = vmatpush1.bf16.msra.mxu0 0
      %875 = vmatprep.mubr.bf16.mxu0 0
      %876 = vmatmul.mubr.bf16.gmra.mrb[0].mxu0 %v635
      %v877 = vpop.f32.mrb[0].mxu0
      %v878 = vadd.f32 %v717, %v877
      %v879 = vpop.f32.mrb[0].mxu0
      %v880 = vpop.f32.mrb[0].mxu0
      %v881 = vadd.f32 %v720, %v880
      %v882 = vpop.f32.mrb[0].mxu0
      %883 = vmatprep.mubr.bf16.mxu0 0
      %884 = vmatmul.mubr.bf16.gmra.mrb[0].mxu0 %v638
      %v885 = vpop.f32.mrb[0].mxu0
      %v886 = vadd.f32 %v725, %v885
      %v887 = vpop.f32.mrb[0].mxu0
      %v888 = vpop.f32.mrb[0].mxu0
      %v889 = vadd.f32 %v728, %v888
      %v890 = vpop.f32.mrb[0].mxu0
      %891 = vmatprep.mubr.bf16.mxu0 0
      %892 = vmatmul.mubr.bf16.gmra.mrb[0].mxu0 %v641
      %v893 = vpop.f32.mrb[0].mxu0
      %v894 = vadd.f32 %v733, %v893
      %v895 = vpop.f32.mrb[0].mxu0
      %v896 = vpop.f32.mrb[0].mxu0
      %v897 = vadd.f32 %v736, %v896
      %v898 = vpop.f32.mrb[0].mxu0
      %899 = vmatprep.mubr.bf16.mxu0 0
      %900 = vmatmul.mubr.bf16.gmra.mrb[0].mxu0 %v644
      %v901 = vpop.f32.mrb[0].mxu0
      %v902 = vadd.f32 %v741, %v901
      %v903 = vpop.f32.mrb[0].mxu0
      %v904 = vpop.f32.mrb[0].mxu0
      %v905 = vadd.f32 %v744, %v904
      %v906 = vpop.f32.mrb[0].mxu0
      %907 = vmatprep.mubr.bf16.mxu0 0
      %908 = vmatmul.mubr.bf16.gmra.mrb[0].mxu0 %v647
      %v909 = vpop.f32.mrb[0].mxu0
      %v910 = vadd.f32 %v749, %v909
      %v911 = vpop.f32.mrb[0].mxu0
      %v912 = vpop.f32.mrb[0].mxu0
      %v913 = vadd.f32 %v752, %v912
      %v914 = vpop.f32.mrb[0].mxu0
      %915 = vmatprep.mubr.bf16.mxu0 0
      %916 = vmatmul.mubr.bf16.gmra.mrb[0].mxu0 %v650
      %v917 = vpop.f32.mrb[0].mxu0
      %v918 = vadd.f32 %v757, %v917
      %v919 = vpop.f32.mrb[0].mxu0
      %v920 = vpop.f32.mrb[0].mxu0
      %v921 = vadd.f32 %v760, %v920
      %v922 = vpop.f32.mrb[0].mxu0
      %923 = vmatprep.mubr.bf16.mxu0 0
      %924 = vmatmul.mubr.bf16.gmra.mrb[0].mxu0 %v653
      %v925 = vpop.f32.mrb[0].mxu0
      %v926 = vadd.f32 %v765, %v925
      %v927 = vpop.f32.mrb[0].mxu0
      %v928 = vpop.f32.mrb[0].mxu0
      %v929 = vadd.f32 %v768, %v928
      %v930 = vpop.f32.mrb[0].mxu0
      %931 = vmatprep.mubr.bf16.mxu0 0
      %932 = vmatmul.mubr.bf16.gmra.mrb[0].mxu0 %v656
      %v933 = vpop.f32.mrb[0].mxu0
      %v934 = vadd.f32 %v773, %v933
      %v935 = vpop.f32.mrb[0].mxu0
      %v936 = vpop.f32.mrb[0].mxu0
      %v937 = vadd.f32 %v776, %v936
      %v938 = vpop.f32.mrb[0].mxu0
      %939 = vmatprep.mubr.bf16.mxu0 0
      %940 = vmatmul.mubr.bf16.gmra.mrb[0].mxu0 %v659
      %v941 = vpop.f32.mrb[0].mxu0
      %v942 = vadd.f32 %v781, %v941
      %v943 = vpop.f32.mrb[0].mxu0
      %v944 = vpop.f32.mrb[0].mxu0
      %v945 = vadd.f32 %v784, %v944
      %v946 = vpop.f32.mrb[0].mxu0
      %947 = vmatprep.mubr.bf16.mxu0 0
      %948 = vmatmul.mubr.bf16.gmra.mrb[0].mxu0 %v662
      %v949 = vpop.f32.mrb[0].mxu0
      %v950 = vadd.f32 %v789, %v949
      %v951 = vpop.f32.mrb[0].mxu0
      %v952 = vpop.f32.mrb[0].mxu0
      %v953 = vadd.f32 %v792, %v952
      %v954 = vpop.f32.mrb[0].mxu0
      %955 = vmatprep.mubr.bf16.mxu0 0
      %956 = vmatmul.mubr.bf16.gmra.mrb[0].mxu0 %v665
      %v957 = vpop.f32.mrb[0].mxu0
      %v958 = vadd.f32 %v797, %v957
      %v959 = vpop.f32.mrb[0].mxu0
      %v960 = vpop.f32.mrb[0].mxu0
      %v961 = vadd.f32 %v800, %v960
      %v962 = vpop.f32.mrb[0].mxu0
      %963 = vmatprep.mubr.bf16.mxu0 0
      %964 = vmatmul.mubr.bf16.gmra.mrb[0].mxu0 %v668
      %v965 = vpop.f32.mrb[0].mxu0
      %v966 = vadd.f32 %v805, %v965
      %v967 = vpop.f32.mrb[0].mxu0
      %v968 = vpop.f32.mrb[0].mxu0
      %v969 = vadd.f32 %v808, %v968
      %v970 = vpop.f32.mrb[0].mxu0
      %971 = vmatprep.mubr.bf16.mxu0 0
      %972 = vmatmul.mubr.bf16.gmra.mrb[0].mxu0 %v671
      %v973 = vpop.f32.mrb[0].mxu0
      %v974 = vadd.f32 %v813, %v973
      %v975 = vpop.f32.mrb[0].mxu0
      %v976 = vpop.f32.mrb[0].mxu0
      %v977 = vadd.f32 %v816, %v976
      %v978 = vpop.f32.mrb[0].mxu0
      %979 = vmatprep.mubr.bf16.mxu0 0
      %980 = vmatmul.mubr.bf16.gmra.mrb[0].mxu0 %v674
      %v981 = vpop.f32.mrb[0].mxu0
      %v982 = vadd.f32 %v821, %v981
      %v983 = vpop.f32.mrb[0].mxu0
      %v984 = vpop.f32.mrb[0].mxu0
      %v985 = vadd.f32 %v824, %v984
      %v986 = vpop.f32.mrb[0].mxu0
      %987 = vmatprep.mubr.bf16.mxu0 0
      %988 = vmatmul.mubr.bf16.gmra.mrb[0].mxu0 %v677
      %v989 = vpop.f32.mrb[0].mxu0
      %v990 = vadd.f32 %v829, %v989
      %v991 = vpop.f32.mrb[0].mxu0
      %v992 = vpop.f32.mrb[0].mxu0
      %v993 = vadd.f32 %v832, %v992
      %v994 = vpop.f32.mrb[0].mxu0
      %995 = vmatprep.mubr.bf16.mxu0 0
      %996 = vmatmul.mubr.bf16.gmra.mrb[0].mxu0 %v680
      %v997 = vpop.f32.mrb[0].mxu0
      %v998 = vadd.f32 %v837, %v997
      %v999 = vpop.f32.mrb[0].mxu0
      %v1000 = vpop.f32.mrb[0].mxu0
      %v1001 = vadd.f32 %v840, %v1000
      %v1002 = vpop.f32.mrb[0].mxu0
      %1003 = vdwg.mxu0
      %v1004 = vmax.f32 %v878, 0.0
      %v1005 = vmax.f32 %v881, 0.0
      %v1006 = vmax.f32 %v886, 0.0
      %v1007 = vmax.f32 %v889, 0.0
      %v1008 = vmax.f32 %v894, 0.0
      %v1009 = vmax.f32 %v897, 0.0
      %v1010 = vmax.f32 %v902, 0.0
      %v1011 = vmax.f32 %v905, 0.0
      %v1012 = vmax.f32 %v910, 0.0
      %v1013 = vmax.f32 %v913, 0.0
      %v1014 = vmax.f32 %v918, 0.0
      %v1015 = vmax.f32 %v921, 0.0
      %v1016 = vmax.f32 %v926, 0.0
      %v1017 = vmax.f32 %v929, 0.0
      %v1018 = vmax.f32 %v934, 0.0
      %v1019 = vmax.f32 %v937, 0.0
      %v1020 = vmax.f32 %v942, 0.0
      %v1021 = vmax.f32 %v945, 0.0
      %v1022 = vmax.f32 %v950, 0.0
      %v1023 = vmax.f32 %v953, 0.0
      %v1024 = vmax.f32 %v958, 0.0
      %v1025 = vmax.f32 %v961, 0.0
      %v1026 = vmax.f32 %v966, 0.0
      %v1027 = vmax.f32 %v969, 0.0
      %v1028 = vmax.f32 %v974, 0.0
      %v1029 = vmax.f32 %v977, 0.0
      %v1030 = vmax.f32 %v982, 0.0
      %v1031 = vmax.f32 %v985, 0.0
      %v1032 = vmax.f32 %v990, 0.0
      %v1033 = vmax.f32 %v993, 0.0
      %v1034 = vmax.f32 %v998, 0.0
      %v1035 = vmax.f32 %v1001, 0.0
      %v1036 = vpack.c.bf16 %v1005, %v1004
      %v1037 = vpack.c.bf16 %v1007, %v1006
      %v1038 = vpack.c.bf16 %v1009, %v1008
      %v1039 = vpack.c.bf16 %v1011, %v1010
      %v1040 = vpack.c.bf16 %v1013, %v1012
      %v1041 = vpack.c.bf16 %v1015, %v1014
      %v1042 = vpack.c.bf16 %v1017, %v1016
      %v1043 = vpack.c.bf16 %v1019, %v1018
      %v1044 = vpack.c.bf16 %v1021, %v1020
      %v1045 = vpack.c.bf16 %v1023, %v1022
      %v1046 = vpack.c.bf16 %v1025, %v1024
      %v1047 = vpack.c.bf16 %v1027, %v1026
      %v1048 = vpack.c.bf16 %v1029, %v1028
      %v1049 = vpack.c.bf16 %v1031, %v1030
      %v1050 = vpack.c.bf16 %v1033, %v1032
      %v1051 = vpack.c.bf16 %v1035, %v1034
      %v1068 = vunpack.c.l.b16 %v1036
      %v1069 = vunpack.c.h.b16 %v1036
      %v1070 = vunpack.c.l.b16 %v1037
      %v1071 = vunpack.c.h.b16 %v1037
      %v1072 = vunpack.c.l.b16 %v1038
      %v1073 = vunpack.c.h.b16 %v1038
      %v1074 = vunpack.c.l.b16 %v1039
      %v1075 = vunpack.c.h.b16 %v1039
      %v1076 = vunpack.c.l.b16 %v1040
      %v1077 = vunpack.c.h.b16 %v1040
      %v1078 = vunpack.c.l.b16 %v1041
      %v1079 = vunpack.c.h.b16 %v1041
      %v1080 = vunpack.c.l.b16 %v1042
      %v1081 = vunpack.c.h.b16 %v1042
      %v1082 = vunpack.c.l.b16 %v1043
      %v1083 = vunpack.c.h.b16 %v1043
      %v1084 = vunpack.c.l.b16 %v1044
      %v1085 = vunpack.c.h.b16 %v1044
      %v1086 = vunpack.c.l.b16 %v1045
      %v1087 = vunpack.c.h.b16 %v1045
      %v1088 = vunpack.c.l.b16 %v1046
      %v1089 = vunpack.c.h.b16 %v1046
      %v1090 = vunpack.c.l.b16 %v1047
      %v1091 = vunpack.c.h.b16 %v1047
      %v1092 = vunpack.c.l.b16 %v1048
      %v1093 = vunpack.c.h.b16 %v1048
      %v1094 = vunpack.c.l.b16 %v1049
      %v1095 = vunpack.c.h.b16 %v1049
      %v1096 = vunpack.c.l.b16 %v1050
      %v1097 = vunpack.c.h.b16 %v1050
      %v1098 = vunpack.c.l.b16 %v1051
      %v1099 = vunpack.c.h.b16 %v1051
      %v1100 = vpack.c.b16 %v1068, %v1068
      %v1101 = vpack.c.b16 %v1069, %v1069
      %v1102 = vpack.c.b16 %v1070, %v1070
      %v1103 = vpack.c.b16 %v1071, %v1071
      %v1104 = vpack.c.b16 %v1072, %v1072
      %v1105 = vpack.c.b16 %v1073, %v1073
      %v1106 = vpack.c.b16 %v1074, %v1074
      %v1107 = vpack.c.b16 %v1075, %v1075
      %v1108 = vpack.c.b16 %v1076, %v1076
      %v1109 = vpack.c.b16 %v1077, %v1077
      %v1110 = vpack.c.b16 %v1078, %v1078
      %v1111 = vpack.c.b16 %v1079, %v1079
      %v1112 = vpack.c.b16 %v1080, %v1080
      %v1113 = vpack.c.b16 %v1081, %v1081
      %v1114 = vpack.c.b16 %v1082, %v1082
      %v1115 = vpack.c.b16 %v1083, %v1083
      %v1116 = vpack.c.b16 %v1084, %v1084
      %v1117 = vpack.c.b16 %v1085, %v1085
      %v1118 = vpack.c.b16 %v1086, %v1086
      %v1119 = vpack.c.b16 %v1087, %v1087
      %v1120 = vpack.c.b16 %v1088, %v1088
      %v1121 = vpack.c.b16 %v1089, %v1089
      %v1122 = vpack.c.b16 %v1090, %v1090
      %v1123 = vpack.c.b16 %v1091, %v1091
      %v1124 = vpack.c.b16 %v1092, %v1092
      %v1125 = vpack.c.b16 %v1093, %v1093
      %v1126 = vpack.c.b16 %v1094, %v1094
      %v1127 = vpack.c.b16 %v1095, %v1095
      %v1128 = vpack.c.b16 %v1096, %v1096
      %v1129 = vpack.c.b16 %v1097, %v1097
      %v1130 = vpack.c.b16 %v1098, %v1098
      %v1131 = vpack.c.b16 %v1099, %v1099
      %vm1164 = vcmask 257024
      %1165 = vst.msk [vmem:[%s175] sm:$0xf] %vm1164, %v1100
      %1166 = vst.msk [vmem:[%s175 + $0x4] sm:$0xf] %vm1164, %v1101
      %1167 = vst.msk [vmem:[%s175 + $0x8] sm:$0xf] %vm1164, %v1102
      %1168 = vst.msk [vmem:[%s175 + $0xc] sm:$0xf] %vm1164, %v1103
      %1169 = vst.msk [vmem:[%s175 + $0x10] sm:$0xf] %vm1164, %v1104
      %1170 = vst.msk [vmem:[%s175 + $0x14] sm:$0xf] %vm1164, %v1105
      %1171 = vst.msk [vmem:[%s175 + $0x18] sm:$0xf] %vm1164, %v1106
      %1172 = vst.msk [vmem:[%s175 + $0x1c] sm:$0xf] %vm1164, %v1107
      %1173 = vst.msk [vmem:[%s175 + $0x20] sm:$0xf] %vm1164, %v1108
      %1174 = vst.msk [vmem:[%s175 + $0x24] sm:$0xf] %vm1164, %v1109
      %1175 = vst.msk [vmem:[%s175 + $0x28] sm:$0xf] %vm1164, %v1110
      %1176 = vst.msk [vmem:[%s175 + $0x2c] sm:$0xf] %vm1164, %v1111
      %1177 = vst.msk [vmem:[%s175 + $0x30] sm:$0xf] %vm1164, %v1112
      %1178 = vst.msk [vmem:[%s175 + $0x34] sm:$0xf] %vm1164, %v1113
      %1179 = vst.msk [vmem:[%s175 + $0x38] sm:$0xf] %vm1164, %v1114
      %1180 = vst.msk [vmem:[%s175 + $0x3c] sm:$0xf] %vm1164, %v1115
      %1181 = vst.msk [vmem:[%s175 + $0x40] sm:$0xf] %vm1164, %v1116
      %1182 = vst.msk [vmem:[%s175 + $0x44] sm:$0xf] %vm1164, %v1117
      %1183 = vst.msk [vmem:[%s175 + $0x48] sm:$0xf] %vm1164, %v1118
      %1184 = vst.msk [vmem:[%s175 + $0x4c] sm:$0xf] %vm1164, %v1119
      %1185 = vst.msk [vmem:[%s175 + $0x50] sm:$0xf] %vm1164, %v1120
      %1186 = vst.msk [vmem:[%s175 + $0x54] sm:$0xf] %vm1164, %v1121
      %1187 = vst.msk [vmem:[%s175 + $0x58] sm:$0xf] %vm1164, %v1122
      %1188 = vst.msk [vmem:[%s175 + $0x5c] sm:$0xf] %vm1164, %v1123
      %1189 = vst.msk [vmem:[%s175 + $0x60] sm:$0xf] %vm1164, %v1124
      %1190 = vst.msk [vmem:[%s175 + $0x64] sm:$0xf] %vm1164, %v1125
      %1191 = vst.msk [vmem:[%s175 + $0x68] sm:$0xf] %vm1164, %v1126
      %1192 = vst.msk [vmem:[%s175 + $0x6c] sm:$0xf] %vm1164, %v1127
      %1193 = vst.msk [vmem:[%s175 + $0x70] sm:$0xf] %vm1164, %v1128
      %1194 = vst.msk [vmem:[%s175 + $0x74] sm:$0xf] %vm1164, %v1129
      %1195 = vst.msk [vmem:[%s175 + $0x78] sm:$0xf] %vm1164, %v1130
      %1196 = vst.msk [vmem:[%s175 + $0x7c] sm:$0xf] %vm1164, %v1131
      %s1197 = smul.u32 32, %s14
      %p1198 = scmp.lt.s32.totalorder %s1197, 223
      %s1199 = scalar_select %p1198, %s1197, 223
      %s1200 = smul.addr %s1199, 4
      %s1201 = scalar_lea.vmem %s3, %s1200
      // Predicated region
      $region33: #{convnet_rse_forward.4} parent=31 // pred_check
        %p1202 = pneg %p100
      $region34: #{convnet_rse_forward.4} parent=31 // pred_check_branch
        %1204 = sbr.rel (%p1202) target = $region36
      $region35: #{convnet_rse_forward.4} parent=31 // pred_region
        %s1205 = smul.u32 32, %s14
      $region36: #{convnet_rse_forward.4} parent=31 // pred_fallthru
        _
    $region32: #{convnet_rse_forward.4} parent=5 // pred_fallthru
      _
    %p1206 = scmp.le.s32.totalorder 2, %s9
    // Predicated region
    $region37: #{convnet_rse_forward.4} parent=5 // pred_check
      %p1207 = pneg %p1206
    $region38: #{convnet_rse_forward.4} parent=5 // pred_check_branch
      %1209 = sbr.rel (%p1207) target = $region40
    $region39: #{convnet_rse_forward.4} parent=5 // pred_region
      %s1210 = ssub.s32 %s9, 2
      // Predicated region
      $region41: #{convnet_rse_forward.4} parent=39 // pred_check
        %p1211 = pneg %p106
      $region42: #{convnet_rse_forward.4} parent=39 // pred_check_branch
        %1213 = sbr.rel (%p1211) target = $region44
      $region43: #{convnet_rse_forward.4} parent=39 // pred_region
        %s1214 = smul.u32 32, %s15
        %p1215 = scmp.lt.s32.totalorder %s1214, 223
        %s1216 = scalar_select %p1215, %s1214, 223
        %s1217 = smul.addr %s1216, 4
        %s1218 = scalar_lea.vmem %s3, %s1217
      $region44: #{convnet_rse_forward.4} parent=39 // pred_fallthru
        _
    $region40: #{convnet_rse_forward.4} parent=5 // pred_fallthru
      _
  $region6: #{convnet_rse_forward.4} parent=0 // loop_footer
    %s13 = sadd.s32 1, %s9
  $region7: #{convnet_rse_forward.4} parent=0 // loop_footer_branch
    %8 = sbr.rel target = $region3
  $region8: #{convnet_rse_forward.4} parent=0 // loop_exit
    _

// kernel: convnet_rse_forward.5
$region0: #{convnet_rse_forward.5}
  #allocation0 [shape = 'u32[]', space=smem, size = 0x4, offset = 0x4, fixed_abs, tag = 'smem constant byte address 0x4 - core index']
  #allocation1 [shape = 'u32[144,128]{1,0:T(1,128)}', space=vmem, size = 0x12000, scoped, tag = 'internal scratch']
  %s0 = inlined_call_operand.vmem [shape: bf16[2,25088], index: 0, kind: input, shape index: {}]
  %s1 = inlined_call_operand.vmem [shape: bf16[16,25088], index: 1, kind: input, shape index: {}]
  %s2 = inlined_call_operand.vmem [shape: f32[1,16], index: 2, kind: input, shape index: {}]
  %s3 = inlined_call_operand.hbm [shape: f32[2,16], index: 3, kind: output, shape index: {}]
  %s4 = sld [smem:[#allocation0]]
  $region72: #{convnet_rse_forward.5} parent=0
    _
  %s6 = ssub.s32 1, %s4
  %s7 = scalar_select 0, %s6, %s4
  $region1: #{convnet_rse_forward.5} parent=0
    #allocation2 [shape = 'u8[229376]{0}', space=vmem, size = 0x38000, scoped, tag = 'input window, operand 1']
    #allocation3 [shape = 'u8[1024]{0}', space=vmem, size = 0x400, scoped, tag = 'output window, operand 0, single buffered']
    #allocation4 [shape = 's32[2]{0}', space=sflag, size = 0x8, scoped, tag = 'scoped memory for convnet_rse_forward.5']
    %8 = vsyncpa [#allocation4], 0
    loop: start=0, step=1, limit=9
    $region2: #{convnet_rse_forward.5} parent=1 // loop_pre_header
      _
    $region3: #{convnet_rse_forward.5} parent=1 // loop_header
      %s10 = sphi 0, %s14
      %p11 = scmp.ge.s32.totalorder %s10, 9
      %s20 = sphi 0, %s22
      %s23 = sphi 0, %s20
      %s24 = sphi 0, %s23
      %s40 = sphi 0, %s24
      %s46 = sphi 0, %s48
      %s49 = sphi 0, %s46
      %s50 = sphi 0, %s49
      %s66 = sphi 0, %s50
      %s70 = sphi 0, %s70
      %s72 = sphi 0, %s70
      %s73 = sphi 0, %s72
      %s87 = sphi 0, %s73
      %s91 = sphi 0, %s91
      %s93 = sphi 0, %s91
      %s94 = sphi 0, %s93
      %s108 = sphi 0, %s94
    $region4: #{convnet_rse_forward.5} parent=1 // loop_header_branch
      %13 = sbr.rel (%p11) target = $region8
    $region5: #{convnet_rse_forward.5} parent=1 // loop_body
      %s15 = ssub.s32 %s10, 1
      %s16 = ssub.s32 %s10, 2
      %s17 = sadd.s32 %s10, 1
      %s18 = ssub.s32 %s10, %s17
      %p19 = scmp.eq.s32.totalorder %s18, 0
      %s21 = sadd.s32 %s20, 1
      %s22 = scalar_select %p19, %s20, %s21
      %p25 = pneg %p19
      %p26 = scmp.eq.s32.totalorder %s10, 6
      %p27 = por %p25, %p26
      %p28 = scmp.ne.s32.totalorder %s20, %s23
      %p29 = scmp.eq.s32.totalorder %s10, 0
      %p30 = por %p28, %p29
      %p31 = scmp.ne.s32.totalorder %s20, %s23
      %p32 = scmp.eq.s32.totalorder %s15, 6
      %p33 = por %p31, %p32
      %p34 = scmp.ne.s32.totalorder %s23, %s24
      %p35 = scmp.eq.s32.totalorder %s15, 0
      %p36 = por %p34, %p35
      %p37 = scmp.ne.s32.totalorder %s23, %s24
      %p38 = scmp.eq.s32.totalorder %s16, 6
      %p39 = por %p37, %p38
      %p41 = scmp.ne.s32.totalorder %s24, %s40
      %p42 = scmp.eq.s32.totalorder %s16, 0
      %p43 = por %p41, %p42
      %s44 = ssub.s32 %s10, %s17
      %p45 = scmp.eq.s32.totalorder %s44, 0
      %s47 = sadd.s32 %s46, 1
      %s48 = scalar_select %p45, %s46, %s47
      %p51 = pneg %p45
      %p52 = scmp.eq.s32.totalorder %s10, 6
      %p53 = por %p51, %p52
      %p54 = scmp.ne.s32.totalorder %s46, %s49
      %p55 = scmp.eq.s32.totalorder %s10, 0
      %p56 = por %p54, %p55
      %p57 = scmp.ne.s32.totalorder %s46, %s49
      %p58 = scmp.eq.s32.totalorder %s15, 6
      %p59 = por %p57, %p58
      %p60 = scmp.ne.s32.totalorder %s49, %s50
      %p61 = scmp.eq.s32.totalorder %s15, 0
      %p62 = por %p60, %p61
      %p63 = scmp.ne.s32.totalorder %s49, %s50
      %p64 = scmp.eq.s32.totalorder %s16, 6
      %p65 = por %p63, %p64
      %p67 = scmp.ne.s32.totalorder %s50, %s66
      %p68 = scmp.eq.s32.totalorder %s16, 0
      %p69 = por %p67, %p68
      %s71 = sadd.s32 %s70, 1
      %p74 = scmp.eq.s32.totalorder %s10, 6
      %p75 = scmp.ne.s32.totalorder %s70, %s72
      %p76 = scmp.eq.s32.totalorder %s10, 0
      %p77 = por %p75, %p76
      %p78 = scmp.ne.s32.totalorder %s70, %s72
      %p79 = scmp.eq.s32.totalorder %s15, 6
      %p80 = por %p78, %p79
      %p81 = scmp.ne.s32.totalorder %s72, %s73
      %p82 = scmp.eq.s32.totalorder %s15, 0
      %p83 = por %p81, %p82
      %p84 = scmp.ne.s32.totalorder %s72, %s73
      %p85 = scmp.eq.s32.totalorder %s16, 6
      %p86 = por %p84, %p85
      %p88 = scmp.ne.s32.totalorder %s73, %s87
      %p89 = scmp.eq.s32.totalorder %s16, 0
      %p90 = por %p88, %p89
      %s92 = sadd.s32 %s91, 1
      %p95 = scmp.eq.s32.totalorder %s10, 6
      %p96 = scmp.ne.s32.totalorder %s91, %s93
      %p97 = scmp.eq.s32.totalorder %s10, 0
      %p98 = por %p96, %p97
      %p99 = scmp.ne.s32.totalorder %s91, %s93
      %p100 = scmp.eq.s32.totalorder %s15, 6
      %p101 = por %p99, %p100
      %p102 = scmp.ne.s32.totalorder %s93, %s94
      %p103 = scmp.eq.s32.totalorder %s15, 0
      %p104 = por %p102, %p103
      %p105 = scmp.ne.s32.totalorder %s93, %s94
      %p106 = scmp.eq.s32.totalorder %s16, 6
      %p107 = por %p105, %p106
      %p109 = scmp.ne.s32.totalorder %s94, %s108
      %p110 = scmp.eq.s32.totalorder %s16, 0
      %p111 = por %p109, %p110
      %p112 = scmp.le.s32.totalorder 1, %s10
      %p113 = scmp.lt.s32.totalorder %s10, 8
      %p114 = pnand %p112, %p113
      %p115 = pneg %p114
      // Predicated region
      $region9: #{convnet_rse_forward.5} parent=5 // pred_check
        _
      $region10: #{convnet_rse_forward.5} parent=5 // pred_check_branch
        %117 = sbr.rel (%p114) target = $region12
      $region11: #{convnet_rse_forward.5} parent=5 // pred_region
        %s118 = ssub.s32 %s10, 1
        // Predicated region
        $region13: #{convnet_rse_forward.5} parent=11 // pred_check
          %p119 = pneg %p83
        $region14: #{convnet_rse_forward.5} parent=11 // pred_check_branch
          %121 = sbr.rel (%p119) target = $region16
        $region15: #{convnet_rse_forward.5} parent=11 // pred_region
          _
        $region16: #{convnet_rse_forward.5} parent=11 // pred_fallthru
          _
      $region12: #{convnet_rse_forward.5} parent=5 // pred_fallthru
        _
      %p122 = scmp.lt.s32.totalorder %s10, 7
      // Predicated region
      $region17: #{convnet_rse_forward.5} parent=5 // pred_check
        %p123 = pneg %p122
      $region18: #{convnet_rse_forward.5} parent=5 // pred_check_branch
        %125 = sbr.rel (%p123) target = $region20
      $region19: #{convnet_rse_forward.5} parent=5 // pred_region
        // Predicated region
        $region21: #{convnet_rse_forward.5} parent=19 // pred_check
          %p126 = pneg %p30
        $region22: #{convnet_rse_forward.5} parent=19 // pred_check_branch
          %128 = sbr.rel (%p126) target = $region24
        $region23: #{convnet_rse_forward.5} parent=19 // pred_region
          %s129 = smul.u32 28, %s10
          %p130 = scmp.lt.s32.totalorder %s129, 195
          %s131 = scalar_select %p130, %s129, 195
          %s132 = scalar_lea.vmem %s0, %s131
          %s133 = smul.u32 28, %s10
        $region24: #{convnet_rse_forward.5} parent=19 // pred_fallthru
          _
        // Predicated region
        $region25: #{convnet_rse_forward.5} parent=19 // pred_check
          %p134 = pneg %p56
        $region26: #{convnet_rse_forward.5} parent=19 // pred_check_branch
          %136 = sbr.rel (%p134) target = $region28
        $region27: #{convnet_rse_forward.5} parent=19 // pred_region
          %s137 = sand.u32 %s46, 1
          %s138 = sand.u32 %s46, 1
          %s139 = smul.addr %s138, 224
          %s140 = scalar_lea.vmem [#allocation2], %s139
          %s141 = smul.u32 28, %s10
          %s142 = smul.addr %s141, 4
          %s143 = scalar_lea.vmem %s1, %s142
          // Predicated region
          $region29: #{convnet_rse_forward.5} parent=27 // pred_check
            _
          $region30: #{convnet_rse_forward.5} parent=27 // pred_check_branch
            %145 = sbr.rel (0) target = $region32
          $region31: #{convnet_rse_forward.5} parent=27 // pred_region
            // Predicated region
            $region33: #{convnet_rse_forward.5} parent=31 // pred_check
              _
            $region34: #{convnet_rse_forward.5} parent=31 // pred_check_branch
              %147 = sbr.rel (0) target = $region36
            $region35: #{convnet_rse_forward.5} parent=31 // pred_region
              loop: start=0, step=1, limit=1
              $region37: #{convnet_rse_forward.5} parent=35 // loop_pre_header
                _
              $region38: #{convnet_rse_forward.5} parent=35 // loop_header
                %s149 = sphi 0, %s153
                %p150 = scmp.ge.s32.totalorder %s149, 1
                %s154 = sphi %s143, %s143
                %s155 = sphi %s140, %s140
              $region39: #{convnet_rse_forward.5} parent=35 // loop_header_branch
                %152 = sbr.rel (%p150) target = $region43
              $region40: #{convnet_rse_forward.5} parent=35 // loop_body
                %v156 = vld [vmem:[%s154] sm:$0xff]
                %157 = vst [vmem:[%s155] sm:$0xff] %v156
                %v158 = vld [vmem:[%s154 + $0x8] sm:$0xff]
                %159 = vst [vmem:[%s155 + $0x8] sm:$0xff] %v158
                %v160 = vld [vmem:[%s154 + $0x10] sm:$0xff]
                %161 = vst [vmem:[%s155 + $0x10] sm:$0xff] %v160
                %v162 = vld [vmem:[%s154 + $0x18] sm:$0xff]
                %163 = vst [vmem:[%s155 + $0x18] sm:$0xff] %v162
                %v164 = vld [vmem:[%s154 + $0x20] sm:$0xff]
                %165 = vst [vmem:[%s155 + $0x20] sm:$0xff] %v164
                %v166 = vld [vmem:[%s154 + $0x28] sm:$0xff]
                %167 = vst [vmem:[%s155 + $0x28] sm:$0xff] %v166
                %v168 = vld [vmem:[%s154 + $0x30] sm:$0xff]
                %169 = vst [vmem:[%s155 + $0x30] sm:$0xff] %v168
                %v170 = vld [vmem:[%s154 + $0x38] sm:$0xff]
                %171 = vst [vmem:[%s155 + $0x38] sm:$0xff] %v170
                %v172 = vld [vmem:[%s154 + $0x40] sm:$0xff]
                %173 = vst [vmem:[%s155 + $0x40] sm:$0xff] %v172
                %v174 = vld [vmem:[%s154 + $0x48] sm:$0xff]
                %175 = vst [vmem:[%s155 + $0x48] sm:$0xff] %v174
                %v176 = vld [vmem:[%s154 + $0x50] sm:$0xff]
                %177 = vst [vmem:[%s155 + $0x50] sm:$0xff] %v176
                %v178 = vld [vmem:[%s154 + $0x58] sm:$0xff]
                %179 = vst [vmem:[%s155 + $0x58] sm:$0xff] %v178
                %v180 = vld [vmem:[%s154 + $0x60] sm:$0xff]
                %181 = vst [vmem:[%s155 + $0x60] sm:$0xff] %v180
                %v182 = vld [vmem:[%s154 + $0x68] sm:$0xff]
                %183 = vst [vmem:[%s155 + $0x68] sm:$0xff] %v182
                %v184 = vld [vmem:[%s154 + $0x310] sm:$0xff]
                %185 = vst [vmem:[%s155 + $0x70] sm:$0xff] %v184
                %v186 = vld [vmem:[%s154 + $0x318] sm:$0xff]
                %187 = vst [vmem:[%s155 + $0x78] sm:$0xff] %v186
                %v188 = vld [vmem:[%s154 + $0x320] sm:$0xff]
                %189 = vst [vmem:[%s155 + $0x80] sm:$0xff] %v188
                %v190 = vld [vmem:[%s154 + $0x328] sm:$0xff]
                %191 = vst [vmem:[%s155 + $0x88] sm:$0xff] %v190
                %v192 = vld [vmem:[%s154 + $0x330] sm:$0xff]
                %193 = vst [vmem:[%s155 + $0x90] sm:$0xff] %v192
                %v194 = vld [vmem:[%s154 + $0x338] sm:$0xff]
                %195 = vst [vmem:[%s155 + $0x98] sm:$0xff] %v194
                %v196 = vld [vmem:[%s154 + $0x340] sm:$0xff]
                %197 = vst [vmem:[%s155 + $0xa0] sm:$0xff] %v196
                %v198 = vld [vmem:[%s154 + $0x348] sm:$0xff]
                %199 = vst [vmem:[%s155 + $0xa8] sm:$0xff] %v198
                %v200 = vld [vmem:[%s154 + $0x350] sm:$0xff]
                %201 = vst [vmem:[%s155 + $0xb0] sm:$0xff] %v200
                %v202 = vld [vmem:[%s154 + $0x358] sm:$0xff]
                %203 = vst [vmem:[%s155 + $0xb8] sm:$0xff] %v202
                %v204 = vld [vmem:[%s154 + $0x360] sm:$0xff]
                %205 = vst [vmem:[%s155 + $0xc0] sm:$0xff] %v204
                %v206 = vld [vmem:[%s154 + $0x368] sm:$0xff]
                %207 = vst [vmem:[%s155 + $0xc8] sm:$0xff] %v206
                %v208 = vld [vmem:[%s154 + $0x370] sm:$0xff]
                %209 = vst [vmem:[%s155 + $0xd0] sm:$0xff] %v208
                %v210 = vld [vmem:[%s154 + $0x378] sm:$0xff]
                %211 = vst [vmem:[%s155 + $0xd8] sm:$0xff] %v210
              $region41: #{convnet_rse_forward.5} parent=35 // loop_footer
                %s153 = sadd.s32 1, %s149
              $region42: #{convnet_rse_forward.5} parent=35 // loop_footer_branch
                %148 = sbr.rel target = $region38
              $region43: #{convnet_rse_forward.5} parent=35 // loop_exit
                _
            $region36: #{convnet_rse_forward.5} parent=31 // pred_fallthru
              _
            // Predicated region
            $region44: #{convnet_rse_forward.5} parent=31 // pred_check
              _
            $region45: #{convnet_rse_forward.5} parent=31 // pred_check_branch
              %213 = sbr.rel target = $region47
            $region46: #{convnet_rse_forward.5} parent=31 // pred_region
              _
            $region47: #{convnet_rse_forward.5} parent=31 // pred_fallthru
              _
          $region32: #{convnet_rse_forward.5} parent=27 // pred_fallthru
            _
          %214 = vnop
        $region28: #{convnet_rse_forward.5} parent=19 // pred_fallthru
          _
      $region20: #{convnet_rse_forward.5} parent=5 // pred_fallthru
        _
      %p215 = scmp.le.s32.totalorder 1, %s10
      %p216 = scmp.lt.s32.totalorder %s10, 8
      %p217 = pnand %p215, %p216
      %p218 = pneg %p217
      // Predicated region
      $region48: #{convnet_rse_forward.5} parent=5 // pred_check
        _
      $region49: #{convnet_rse_forward.5} parent=5 // pred_check_branch
        %220 = sbr.rel (%p217) target = $region51
      $region50: #{convnet_rse_forward.5} parent=5 // pred_region
        %s221 = ssub.s32 %s10, 1
        %s222 = sand.u32 %s49, 1
        %s223 = sand.u32 %s49, 1
        %s224 = smul.addr %s223, 224
        %s225 = scalar_lea.vmem [#allocation2], %s224
        // Predicated region
        $region52: #{convnet_rse_forward.5} parent=50 // pred_check
          %p226 = pneg %p62
        $region53: #{convnet_rse_forward.5} parent=50 // pred_check_branch
          %228 = sbr.rel (%p226) target = $region55
        $region54: #{convnet_rse_forward.5} parent=50 // pred_region
          _
        $region55: #{convnet_rse_forward.5} parent=50 // pred_fallthru
          _
        %s229 = smul.u32 28, %s15
        %p230 = scmp.lt.s32.totalorder %s229, 195
        %s231 = scalar_select %p230, %s229, 195
        %s232 = scalar_lea.vmem %s0, %s231
        %p233 = pneg %p36
        %p234 = pneg %p33
        %s235 = sand.u32 %s49, 1
        %s236 = sand.u32 %s49, 1
        %s237 = smul.addr %s236, 224
        %s238 = scalar_lea.vmem [#allocation2], %s237
        %p239 = pneg %p62
        %p240 = pneg %p59
        %p241 = pneg %p83
        %p242 = pneg %p80
        %p243 = pneg %p104
        %p244 = pneg %p101
        %s245 = smul.u32 28, %s15
        %p246 = scmp.lt.s32.totalorder %s245, 195
        %s247 = scalar_select %p246, %s245, 195
        %s248 = scalar_lea.vmem %s0, %s247
        %s249 = smul.u32 28, %s15
        %s250 = smul.u32 28, %s15
        %p252 = scmp.eq.s32.totalorder %s15, 0
        // Predicated region
        $region56: #{convnet_rse_forward.5} parent=50 // pred_check
          %p253 = pneg %p252
        $region57: #{convnet_rse_forward.5} parent=50 // pred_check_branch
          %255 = sbr.rel (%p253) target = $region59
        $region58: #{convnet_rse_forward.5} parent=50 // pred_region
          %v256 = vld [vmem:[%s2] sm:$0x1]
          %v258 = vlaneseq
          %v259 = vshrl.u32 %v258, 7
          %v260 = vsub.s32 0, %v259
          %v261 = vrot.slane %v256, %v260
          %v263 = vadd.f32 %v261, 0.0
          %vm264 = vcmask 123904
          %265 = vst.msk [vmem:[#allocation3] sm:$0x3] %vm264, %v263
        $region59: #{convnet_rse_forward.5} parent=50 // pred_fallthru
          _
        %v266 = vld [vmem:[#allocation3] sm:$0x3]
        %v267 = vld [vmem:[%s248] sm:$0xff]
        %v268 = vld [vmem:[%s248 + $0x8] sm:$0xff]
        %v269 = vld [vmem:[%s248 + $0x10] sm:$0xff]
        %v270 = vld [vmem:[%s248 + $0x18] sm:$0xf]
        %v271 = vld [vmem:[%s225] sm:$0xff]
        %v272 = vld [vmem:[%s225 + $0x8] sm:$0xff]
        %v273 = vld [vmem:[%s225 + $0x10] sm:$0xff]
        %v274 = vld [vmem:[%s225 + $0x18] sm:$0xff]
        %v275 = vld [vmem:[%s225 + $0x20] sm:$0xff]
        %v276 = vld [vmem:[%s225 + $0x28] sm:$0xff]
        %v277 = vld [vmem:[%s225 + $0x30] sm:$0xff]
        %v278 = vld [vmem:[%s225 + $0x38] sm:$0xff]
        %v279 = vld [vmem:[%s225 + $0x40] sm:$0xff]
        %v280 = vld [vmem:[%s225 + $0x48] sm:$0xff]
        %v281 = vld [vmem:[%s225 + $0x50] sm:$0xff]
        %v282 = vld [vmem:[%s225 + $0x58] sm:$0xff]
        %v283 = vld [vmem:[%s225 + $0x60] sm:$0xff]
        %v284 = vld [vmem:[%s225 + $0x68] sm:$0xff]
        %v285 = vld [vmem:[%s225 + $0x70] sm:$0xff]
        %v286 = vld [vmem:[%s225 + $0x78] sm:$0xff]
        %v287 = vld [vmem:[%s225 + $0x80] sm:$0xff]
        %v288 = vld [vmem:[%s225 + $0x88] sm:$0xff]
        %v289 = vld [vmem:[%s225 + $0x90] sm:$0xff]
        %v290 = vld [vmem:[%s225 + $0x98] sm:$0xff]
        %v291 = vld [vmem:[%s225 + $0xa0] sm:$0xff]
        %v292 = vld [vmem:[%s225 + $0xa8] sm:$0xff]
        %v293 = vld [vmem:[%s225 + $0xb0] sm:$0xff]
        %v294 = vld [vmem:[%s225 + $0xb8] sm:$0xff]
        %v295 = vld [vmem:[%s225 + $0xc0] sm:$0xff]
        %v296 = vld [vmem:[%s225 + $0xc8] sm:$0xff]
        %v297 = vld [vmem:[%s225 + $0xd0] sm:$0xff]
        %v298 = vld [vmem:[%s225 + $0xd8] sm:$0xff]
        %v303 = vcombine.high %v267, %v267
        %v305 = vunpack.c.l.s4 1966171168
        %v306 = vunpack.c.0.s8 %v305
        %v307 = vlaneseq
        %v308 = vshrl.u32 %v307, 7
        %v309 = vsub.s32 %v306, %v308
        %v310 = vrot.slane %v267, %v309
        %v312 = vunpack.c.l.s4 1966171168
        %v313 = vunpack.c.0.s8 %v312
        %v314 = vlaneseq
        %v315 = vshrl.u32 %v314, 7
        %v316 = vsub.s32 %v313, %v315
        %v317 = vrot.slane %v303, %v316
        %v318 = vcombine.high %v310, %v310
        %v319 = vcombine.high %v317, %v317
        %v321 = vunpack.c.l.s4 1966171168
        %v322 = vunpack.c.0.s8 %v321
        %v323 = vlaneseq
        %v324 = vshrl.u32 %v323, 7
        %v325 = vsub.s32 %v322, %v324
        %v326 = vrot.slane %v310, %v325
        %v328 = vunpack.c.l.s4 1966171168
        %v329 = vunpack.c.0.s8 %v328
        %v330 = vlaneseq
        %v331 = vshrl.u32 %v330, 7
        %v332 = vsub.s32 %v329, %v331
        %v333 = vrot.slane %v317, %v332
        %v335 = vunpack.c.l.s4 1966171168
        %v336 = vunpack.c.0.s8 %v335
        %v337 = vlaneseq
        %v338 = vshrl.u32 %v337, 7
        %v339 = vsub.s32 %v336, %v338
        %v340 = vrot.slane %v318, %v339
        %v342 = vunpack.c.l.s4 1966171168
        %v343 = vunpack.c.0.s8 %v342
        %v344 = vlaneseq
        %v345 = vshrl.u32 %v344, 7
        %v346 = vsub.s32 %v343, %v345
        %v347 = vrot.slane %v319, %v346
        %v348 = vcombine.high %v326, %v326
        %v349 = vcombine.high %v333, %v333
        %v350 = vcombine.high %v340, %v340
        %v351 = vcombine.high %v347, %v347
        %v352 = vcombine.high %v268, %v268
        %v354 = vunpack.c.l.s4 1966171168
        %v355 = vunpack.c.0.s8 %v354
        %v356 = vlaneseq
        %v357 = vshrl.u32 %v356, 7
        %v358 = vsub.s32 %v355, %v357
        %v359 = vrot.slane %v268, %v358
        %v361 = vunpack.c.l.s4 1966171168
        %v362 = vunpack.c.0.s8 %v361
        %v363 = vlaneseq
        %v364 = vshrl.u32 %v363, 7
        %v365 = vsub.s32 %v362, %v364
        %v366 = vrot.slane %v352, %v365
        %v367 = vcombine.high %v359, %v359
        %v368 = vcombine.high %v366, %v366
        %v370 = vunpack.c.l.s4 1966171168
        %v371 = vunpack.c.0.s8 %v370
        %v372 = vlaneseq
        %v373 = vshrl.u32 %v372, 7
        %v374 = vsub.s32 %v371, %v373
        %v375 = vrot.slane %v359, %v374
        %v377 = vunpack.c.l.s4 1966171168
        %v378 = vunpack.c.0.s8 %v377
        %v379 = vlaneseq
        %v380 = vshrl.u32 %v379, 7
        %v381 = vsub.s32 %v378, %v380
        %v382 = vrot.slane %v366, %v381
        %v384 = vunpack.c.l.s4 1966171168
        %v385 = vunpack.c.0.s8 %v384
        %v386 = vlaneseq
        %v387 = vshrl.u32 %v386, 7
        %v388 = vsub.s32 %v385, %v387
        %v389 = vrot.slane %v367, %v388
        %v391 = vunpack.c.l.s4 1966171168
        %v392 = vunpack.c.0.s8 %v391
        %v393 = vlaneseq
        %v394 = vshrl.u32 %v393, 7
        %v395 = vsub.s32 %v392, %v394
        %v396 = vrot.slane %v368, %v395
        %v397 = vcombine.high %v375, %v375
        %v398 = vcombine.high %v382, %v382
        %v399 = vcombine.high %v389, %v389
        %v400 = vcombine.high %v396, %v396
        %v401 = vcombine.high %v269, %v269
        %v403 = vunpack.c.l.s4 1966171168
        %v404 = vunpack.c.0.s8 %v403
        %v405 = vlaneseq
        %v406 = vshrl.u32 %v405, 7
        %v407 = vsub.s32 %v404, %v406
        %v408 = vrot.slane %v269, %v407
        %v410 = vunpack.c.l.s4 1966171168
        %v411 = vunpack.c.0.s8 %v410
        %v412 = vlaneseq
        %v413 = vshrl.u32 %v412, 7
        %v414 = vsub.s32 %v411, %v413
        %v415 = vrot.slane %v401, %v414
        %v416 = vcombine.high %v408, %v408
        %v417 = vcombine.high %v415, %v415
        %v419 = vunpack.c.l.s4 1966171168
        %v420 = vunpack.c.0.s8 %v419
        %v421 = vlaneseq
        %v422 = vshrl.u32 %v421, 7
        %v423 = vsub.s32 %v420, %v422
        %v424 = vrot.slane %v408, %v423
        %v426 = vunpack.c.l.s4 1966171168
        %v427 = vunpack.c.0.s8 %v426
        %v428 = vlaneseq
        %v429 = vshrl.u32 %v428, 7
        %v430 = vsub.s32 %v427, %v429
        %v431 = vrot.slane %v415, %v430
        %v433 = vunpack.c.l.s4 1966171168
        %v434 = vunpack.c.0.s8 %v433
        %v435 = vlaneseq
        %v436 = vshrl.u32 %v435, 7
        %v437 = vsub.s32 %v434, %v436
        %v438 = vrot.slane %v416, %v437
        %v440 = vunpack.c.l.s4 1966171168
        %v441 = vunpack.c.0.s8 %v440
        %v442 = vlaneseq
        %v443 = vshrl.u32 %v442, 7
        %v444 = vsub.s32 %v441, %v443
        %v445 = vrot.slane %v417, %v444
        %v446 = vcombine.high %v424, %v424
        %v447 = vcombine.high %v431, %v431
        %v448 = vcombine.high %v438, %v438
        %v449 = vcombine.high %v445, %v445
        %v451 = vunpack.c.l.s4 1966171168
        %v452 = vunpack.c.0.s8 %v451
        %v453 = vlaneseq
        %v454 = vshrl.u32 %v453, 7
        %v455 = vsub.s32 %v452, %v454
        %v456 = vrot.slane %v270, %v455
        %v457 = vcombine.high %v456, %v456
        %v459 = vunpack.c.l.s4 1966171168
        %v460 = vunpack.c.0.s8 %v459
        %v461 = vlaneseq
        %v462 = vshrl.u32 %v461, 7
        %v463 = vsub.s32 %v460, %v462
        %v464 = vrot.slane %v456, %v463
        %v466 = vunpack.c.l.s4 1966171168
        %v467 = vunpack.c.0.s8 %v466
        %v468 = vlaneseq
        %v469 = vshrl.u32 %v468, 7
        %v470 = vsub.s32 %v467, %v469
        %v471 = vrot.slane %v457, %v470
        %v472 = vcombine.high %v464, %v464
        %v473 = vcombine.high %v471, %v471
        %v530 = vunpack.c.l.b16 %v271
        %v531 = vunpack.c.h.b16 %v271
        %v532 = vunpack.c.l.b16 %v272
        %v533 = vunpack.c.h.b16 %v272
        %v534 = vunpack.c.l.b16 %v273
        %v535 = vunpack.c.h.b16 %v273
        %v536 = vunpack.c.l.b16 %v274
        %v537 = vunpack.c.h.b16 %v274
        %v538 = vunpack.c.l.b16 %v275
        %v539 = vunpack.c.h.b16 %v275
        %v540 = vunpack.c.l.b16 %v276
        %v541 = vunpack.c.h.b16 %v276
        %v542 = vunpack.c.l.b16 %v277
        %v543 = vunpack.c.h.b16 %v277
        %v544 = vunpack.c.l.b16 %v278
        %v545 = vunpack.c.h.b16 %v278
        %v546 = vunpack.c.l.b16 %v279
        %v547 = vunpack.c.h.b16 %v279
        %v548 = vunpack.c.l.b16 %v280
        %v549 = vunpack.c.h.b16 %v280
        %v550 = vunpack.c.l.b16 %v281
        %v551 = vunpack.c.h.b16 %v281
        %v552 = vunpack.c.l.b16 %v282
        %v553 = vunpack.c.h.b16 %v282
        %v554 = vunpack.c.l.b16 %v283
        %v555 = vunpack.c.h.b16 %v283
        %v556 = vunpack.c.l.b16 %v284
        %v557 = vunpack.c.h.b16 %v284
        %v558 = vunpack.c.l.b16 %v285
        %v559 = vunpack.c.h.b16 %v285
        %v560 = vunpack.c.l.b16 %v286
        %v561 = vunpack.c.h.b16 %v286
        %v562 = vunpack.c.l.b16 %v287
        %v563 = vunpack.c.h.b16 %v287
        %v564 = vunpack.c.l.b16 %v288
        %v565 = vunpack.c.h.b16 %v288
        %v566 = vunpack.c.l.b16 %v289
        %v567 = vunpack.c.h.b16 %v289
        %v568 = vunpack.c.l.b16 %v290
        %v569 = vunpack.c.h.b16 %v290
        %v570 = vunpack.c.l.b16 %v291
        %v571 = vunpack.c.h.b16 %v291
        %v572 = vunpack.c.l.b16 %v292
        %v573 = vunpack.c.h.b16 %v292
        %v574 = vunpack.c.l.b16 %v293
        %v575 = vunpack.c.h.b16 %v293
        %v576 = vunpack.c.l.b16 %v294
        %v577 = vunpack.c.h.b16 %v294
        %v578 = vunpack.c.l.b16 %v295
        %v579 = vunpack.c.h.b16 %v295
        %v580 = vunpack.c.l.b16 %v296
        %v581 = vunpack.c.h.b16 %v296
        %v582 = vunpack.c.l.b16 %v297
        %v583 = vunpack.c.h.b16 %v297
        %v584 = vunpack.c.l.b16 %v298
        %v585 = vunpack.c.h.b16 %v298
        %v586 = vpack.c.b16 %v558, %v530
        %v587 = vpack.c.b16 %v559, %v531
        %v588 = vpack.c.b16 %v560, %v532
        %v589 = vpack.c.b16 %v561, %v533
        %v590 = vpack.c.b16 %v562, %v534
        %v591 = vpack.c.b16 %v563, %v535
        %v592 = vpack.c.b16 %v564, %v536
        %v593 = vpack.c.b16 %v565, %v537
        %v594 = vpack.c.b16 %v566, %v538
        %v595 = vpack.c.b16 %v567, %v539
        %v596 = vpack.c.b16 %v568, %v540
        %v597 = vpack.c.b16 %v569, %v541
        %v598 = vpack.c.b16 %v570, %v542
        %v599 = vpack.c.b16 %v571, %v543
        %v600 = vpack.c.b16 %v572, %v544
        %v601 = vpack.c.b16 %v573, %v545
        %v602 = vpack.c.b16 %v574, %v546
        %v603 = vpack.c.b16 %v575, %v547
        %v604 = vpack.c.b16 %v576, %v548
        %v605 = vpack.c.b16 %v577, %v549
        %v606 = vpack.c.b16 %v578, %v550
        %v607 = vpack.c.b16 %v579, %v551
        %v608 = vpack.c.b16 %v580, %v552
        %v609 = vpack.c.b16 %v581, %v553
        %v610 = vpack.c.b16 %v582, %v554
        %v611 = vpack.c.b16 %v583, %v555
        %v612 = vpack.c.b16 %v584, %v556
        %v613 = vpack.c.b16 %v585, %v557
        %642 = vmatprep.subr.bf16.mxu0 %v587
        %643 = vmatpush1.bf16.xpose.msra.mxu0 %v586
        %644 = vmatprep.subr.bf16.mxu0 0
        %645 = vmatpush1.bf16.xpose.msra.mxu0 0
        %646 = vmatprep.subr.bf16.mxu0 0
        %647 = vmatpush1.bf16.xpose.msra.mxu0 0
        %648 = vmatprep.subr.bf16.mxu0 0
        %649 = vmatpush1.bf16.xpose.msra.mxu0 0
        %650 = vmatprep.subr.bf16.mxu0 0
        %651 = vmatpush1.bf16.xpose.msra.mxu0 0
        %652 = vmatprep.subr.bf16.mxu0 0
        %653 = vmatpush1.bf16.xpose.msra.mxu0 0
        %654 = vmatprep.subr.bf16.mxu0 0
        %655 = vmatpush1.bf16.xpose.msra.mxu0 0
        %656 = vmatprep.subr.bf16.mxu0 0
        %657 = vmatpush1.bf16.xpose.msra.mxu0 0
        %658 = vmatprep.subr.bf16.mxu0 0
        %659 = vmatpush1.bf16.xpose.msra.mxu0 0
        %660 = vmatprep.subr.bf16.mxu0 0
        %661 = vmatpush1.bf16.xpose.msra.mxu0 0
        %662 = vmatprep.subr.bf16.mxu0 0
        %663 = vmatpush1.bf16.xpose.msra.mxu0 0
        %664 = vmatprep.subr.bf16.mxu0 0
        %665 = vmatpush1.bf16.xpose.msra.mxu0 0
        %666 = vmatprep.subr.bf16.mxu0 0
        %667 = vmatpush1.bf16.xpose.msra.mxu0 0
        %668 = vmatprep.subr.bf16.mxu0 0
        %669 = vmatpush1.bf16.xpose.msra.mxu0 0
        %670 = vmatprep.subr.bf16.mxu0 0
        %671 = vmatpush1.bf16.xpose.msra.mxu0 0
        %672 = vmatprep.subr.bf16.mxu0 0
        %673 = vmatpush1.bf16.xpose.msra.mxu0 0
        %674 = vmatprep.mubr.bf16.mxu0 %v340
        %675 = vmatmul.mubr.bf16.gmra.mrb[0].mxu0 %v326
        %v676 = vpop.f32.mrb[0].mxu0
        %v677 = vadd.f32 0.0, %v676
        %v678 = vpop.f32.mrb[0].mxu0
        %v679 = vpop.f32.mrb[0].mxu0
        %v680 = vpop.f32.mrb[0].mxu0
        %681 = vdwg.mxu0
        %682 = vmatprep.subr.bf16.mxu0 %v589
        %683 = vmatpush1.bf16.xpose.msra.mxu0 %v588
        %684 = vmatprep.subr.bf16.mxu0 0
        %685 = vmatpush1.bf16.xpose.msra.mxu0 0
        %686 = vmatprep.subr.bf16.mxu0 0
        %687 = vmatpush1.bf16.xpose.msra.mxu0 0
        %688 = vmatprep.subr.bf16.mxu0 0
        %689 = vmatpush1.bf16.xpose.msra.mxu0 0
        %690 = vmatprep.subr.bf16.mxu0 0
        %691 = vmatpush1.bf16.xpose.msra.mxu0 0
        %692 = vmatprep.subr.bf16.mxu0 0
        %693 = vmatpush1.bf16.xpose.msra.mxu0 0
        %694 = vmatprep.subr.bf16.mxu0 0
        %695 = vmatpush1.bf16.xpose.msra.mxu0 0
        %696 = vmatprep.subr.bf16.mxu0 0
        %697 = vmatpush1.bf16.xpose.msra.mxu0 0
        %698 = vmatprep.subr.bf16.mxu0 0
        %699 = vmatpush1.bf16.xpose.msra.mxu0 0
        %700 = vmatprep.subr.bf16.mxu0 0
        %701 = vmatpush1.bf16.xpose.msra.mxu0 0
        %702 = vmatprep.subr.bf16.mxu0 0
        %703 = vmatpush1.bf16.xpose.msra.mxu0 0
        %704 = vmatprep.subr.bf16.mxu0 0
        %705 = vmatpush1.bf16.xpose.msra.mxu0 0
        %706 = vmatprep.subr.bf16.mxu0 0
        %707 = vmatpush1.bf16.xpose.msra.mxu0 0
        %708 = vmatprep.subr.bf16.mxu0 0
        %709 = vmatpush1.bf16.xpose.msra.mxu0 0
        %710 = vmatprep.subr.bf16.mxu0 0
        %711 = vmatpush1.bf16.xpose.msra.mxu0 0
        %712 = vmatprep.subr.bf16.mxu0 0
        %713 = vmatpush1.bf16.xpose.msra.mxu0 0
        %714 = vmatprep.mubr.bf16.mxu0 %v350
        %715 = vmatmul.mubr.bf16.gmra.mrb[0].mxu0 %v348
        %v716 = vpop.f32.mrb[0].mxu0
        %v717 = vadd.f32 %v677, %v716
        %v718 = vpop.f32.mrb[0].mxu0
        %v719 = vpop.f32.mrb[0].mxu0
        %v720 = vpop.f32.mrb[0].mxu0
        %721 = vdwg.mxu0
        %722 = vmatprep.subr.bf16.mxu0 %v591
        %723 = vmatpush1.bf16.xpose.msra.mxu0 %v590
        %724 = vmatprep.subr.bf16.mxu0 0
        %725 = vmatpush1.bf16.xpose.msra.mxu0 0
        %726 = vmatprep.subr.bf16.mxu0 0
        %727 = vmatpush1.bf16.xpose.msra.mxu0 0
        %728 = vmatprep.subr.bf16.mxu0 0
        %729 = vmatpush1.bf16.xpose.msra.mxu0 0
        %730 = vmatprep.subr.bf16.mxu0 0
        %731 = vmatpush1.bf16.xpose.msra.mxu0 0
        %732 = vmatprep.subr.bf16.mxu0 0
        %733 = vmatpush1.bf16.xpose.msra.mxu0 0
        %734 = vmatprep.subr.bf16.mxu0 0
        %735 = vmatpush1.bf16.xpose.msra.mxu0 0
        %736 = vmatprep.subr.bf16.mxu0 0
        %737 = vmatpush1.bf16.xpose.msra.mxu0 0
        %738 = vmatprep.subr.bf16.mxu0 0
        %739 = vmatpush1.bf16.xpose.msra.mxu0 0
        %740 = vmatprep.subr.bf16.mxu0 0
        %741 = vmatpush1.bf16.xpose.msra.mxu0 0
        %742 = vmatprep.subr.bf16.mxu0 0
        %743 = vmatpush1.bf16.xpose.msra.mxu0 0
        %744 = vmatprep.subr.bf16.mxu0 0
        %745 = vmatpush1.bf16.xpose.msra.mxu0 0
        %746 = vmatprep.subr.bf16.mxu0 0
        %747 = vmatpush1.bf16.xpose.msra.mxu0 0
        %748 = vmatprep.subr.bf16.mxu0 0
        %749 = vmatpush1.bf16.xpose.msra.mxu0 0
        %750 = vmatprep.subr.bf16.mxu0 0
        %751 = vmatpush1.bf16.xpose.msra.mxu0 0
        %752 = vmatprep.subr.bf16.mxu0 0
        %753 = vmatpush1.bf16.xpose.msra.mxu0 0
        %754 = vmatprep.mubr.bf16.mxu0 %v347
        %755 = vmatmul.mubr.bf16.gmra.mrb[0].mxu0 %v333
        %v756 = vpop.f32.mrb[0].mxu0
        %v757 = vadd.f32 %v717, %v756
        %v758 = vpop.f32.mrb[0].mxu0
        %v759 = vpop.f32.mrb[0].mxu0
        %v760 = vpop.f32.mrb[0].mxu0
        %761 = vdwg.mxu0
        %762 = vmatprep.subr.bf16.mxu0 %v593
        %763 = vmatpush1.bf16.xpose.msra.mxu0 %v592
        %764 = vmatprep.subr.bf16.mxu0 0
        %765 = vmatpush1.bf16.xpose.msra.mxu0 0
        %766 = vmatprep.subr.bf16.mxu0 0
        %767 = vmatpush1.bf16.xpose.msra.mxu0 0
        %768 = vmatprep.subr.bf16.mxu0 0
        %769 = vmatpush1.bf16.xpose.msra.mxu0 0
        %770 = vmatprep.subr.bf16.mxu0 0
        %771 = vmatpush1.bf16.xpose.msra.mxu0 0
        %772 = vmatprep.subr.bf16.mxu0 0
        %773 = vmatpush1.bf16.xpose.msra.mxu0 0
        %774 = vmatprep.subr.bf16.mxu0 0
        %775 = vmatpush1.bf16.xpose.msra.mxu0 0
        %776 = vmatprep.subr.bf16.mxu0 0
        %777 = vmatpush1.bf16.xpose.msra.mxu0 0
        %778 = vmatprep.subr.bf16.mxu0 0
        %779 = vmatpush1.bf16.xpose.msra.mxu0 0
        %780 = vmatprep.subr.bf16.mxu0 0
        %781 = vmatpush1.bf16.xpose.msra.mxu0 0
        %782 = vmatprep.subr.bf16.mxu0 0
        %783 = vmatpush1.bf16.xpose.msra.mxu0 0
        %784 = vmatprep.subr.bf16.mxu0 0
        %785 = vmatpush1.bf16.xpose.msra.mxu0 0
        %786 = vmatprep.subr.bf16.mxu0 0
        %787 = vmatpush1.bf16.xpose.msra.mxu0 0
        %788 = vmatprep.subr.bf16.mxu0 0
        %789 = vmatpush1.bf16.xpose.msra.mxu0 0
        %790 = vmatprep.subr.bf16.mxu0 0
        %791 = vmatpush1.bf16.xpose.msra.mxu0 0
        %792 = vmatprep.subr.bf16.mxu0 0
        %793 = vmatpush1.bf16.xpose.msra.mxu0 0
        %794 = vmatprep.mubr.bf16.mxu0 %v351
        %795 = vmatmul.mubr.bf16.gmra.mrb[0].mxu0 %v349
        %v796 = vpop.f32.mrb[0].mxu0
        %v797 = vadd.f32 %v757, %v796
        %v798 = vpop.f32.mrb[0].mxu0
        %v799 = vpop.f32.mrb[0].mxu0
        %v800 = vpop.f32.mrb[0].mxu0
        %801 = vdwg.mxu0
        %802 = vmatprep.subr.bf16.mxu0 %v595
        %803 = vmatpush1.bf16.xpose.msra.mxu0 %v594
        %804 = vmatprep.subr.bf16.mxu0 0
        %805 = vmatpush1.bf16.xpose.msra.mxu0 0
        %806 = vmatprep.subr.bf16.mxu0 0
        %807 = vmatpush1.bf16.xpose.msra.mxu0 0
        %808 = vmatprep.subr.bf16.mxu0 0
        %809 = vmatpush1.bf16.xpose.msra.mxu0 0
        %810 = vmatprep.subr.bf16.mxu0 0
        %811 = vmatpush1.bf16.xpose.msra.mxu0 0
        %812 = vmatprep.subr.bf16.mxu0 0
        %813 = vmatpush1.bf16.xpose.msra.mxu0 0
        %814 = vmatprep.subr.bf16.mxu0 0
        %815 = vmatpush1.bf16.xpose.msra.mxu0 0
        %816 = vmatprep.subr.bf16.mxu0 0
        %817 = vmatpush1.bf16.xpose.msra.mxu0 0
        %818 = vmatprep.subr.bf16.mxu0 0
        %819 = vmatpush1.bf16.xpose.msra.mxu0 0
        %820 = vmatprep.subr.bf16.mxu0 0
        %821 = vmatpush1.bf16.xpose.msra.mxu0 0
        %822 = vmatprep.subr.bf16.mxu0 0
        %823 = vmatpush1.bf16.xpose.msra.mxu0 0
        %824 = vmatprep.subr.bf16.mxu0 0
        %825 = vmatpush1.bf16.xpose.msra.mxu0 0
        %826 = vmatprep.subr.bf16.mxu0 0
        %827 = vmatpush1.bf16.xpose.msra.mxu0 0
        %828 = vmatprep.subr.bf16.mxu0 0
        %829 = vmatpush1.bf16.xpose.msra.mxu0 0
        %830 = vmatprep.subr.bf16.mxu0 0
        %831 = vmatpush1.bf16.xpose.msra.mxu0 0
        %832 = vmatprep.subr.bf16.mxu0 0
        %833 = vmatpush1.bf16.xpose.msra.mxu0 0
        %834 = vmatprep.mubr.bf16.mxu0 %v389
        %835 = vmatmul.mubr.bf16.gmra.mrb[0].mxu0 %v375
        %v836 = vpop.f32.mrb[0].mxu0
        %v837 = vadd.f32 %v797, %v836
        %v838 = vpop.f32.mrb[0].mxu0
        %v839 = vpop.f32.mrb[0].mxu0
        %v840 = vpop.f32.mrb[0].mxu0
        %841 = vdwg.mxu0
        %842 = vmatprep.subr.bf16.mxu0 %v597
        %843 = vmatpush1.bf16.xpose.msra.mxu0 %v596
        %844 = vmatprep.subr.bf16.mxu0 0
        %845 = vmatpush1.bf16.xpose.msra.mxu0 0
        %846 = vmatprep.subr.bf16.mxu0 0
        %847 = vmatpush1.bf16.xpose.msra.mxu0 0
        %848 = vmatprep.subr.bf16.mxu0 0
        %849 = vmatpush1.bf16.xpose.msra.mxu0 0
        %850 = vmatprep.subr.bf16.mxu0 0
        %851 = vmatpush1.bf16.xpose.msra.mxu0 0
        %852 = vmatprep.subr.bf16.mxu0 0
        %853 = vmatpush1.bf16.xpose.msra.mxu0 0
        %854 = vmatprep.subr.bf16.mxu0 0
        %855 = vmatpush1.bf16.xpose.msra.mxu0 0
        %856 = vmatprep.subr.bf16.mxu0 0
        %857 = vmatpush1.bf16.xpose.msra.mxu0 0
        %858 = vmatprep.subr.bf16.mxu0 0
        %859 = vmatpush1.bf16.xpose.msra.mxu0 0
        %860 = vmatprep.subr.bf16.mxu0 0
        %861 = vmatpush1.bf16.xpose.msra.mxu0 0
        %862 = vmatprep.subr.bf16.mxu0 0
        %863 = vmatpush1.bf16.xpose.msra.mxu0 0
        %864 = vmatprep.subr.bf16.mxu0 0
        %865 = vmatpush1.bf16.xpose.msra.mxu0 0
        %866 = vmatprep.subr.bf16.mxu0 0
        %867 = vmatpush1.bf16.xpose.msra.mxu0 0
        %868 = vmatprep.subr.bf16.mxu0 0
        %869 = vmatpush1.bf16.xpose.msra.mxu0 0
        %870 = vmatprep.subr.bf16.mxu0 0
        %871 = vmatpush1.bf16.xpose.msra.mxu0 0
        %872 = vmatprep.subr.bf16.mxu0 0
        %873 = vmatpush1.bf16.xpose.msra.mxu0 0
        %874 = vmatprep.mubr.bf16.mxu0 %v399
        %875 = vmatmul.mubr.bf16.gmra.mrb[0].mxu0 %v397
        %v876 = vpop.f32.mrb[0].mxu0
        %v877 = vadd.f32 %v837, %v876
        %v878 = vpop.f32.mrb[0].mxu0
        %v879 = vpop.f32.mrb[0].mxu0
        %v880 = vpop.f32.mrb[0].mxu0
        %881 = vdwg.mxu0
        %882 = vmatprep.subr.bf16.mxu0 %v599
        %883 = vmatpush1.bf16.xpose.msra.mxu0 %v598
        %884 = vmatprep.subr.bf16.mxu0 0
        %885 = vmatpush1.bf16.xpose.msra.mxu0 0
        %886 = vmatprep.subr.bf16.mxu0 0
        %887 = vmatpush1.bf16.xpose.msra.mxu0 0
        %888 = vmatprep.subr.bf16.mxu0 0
        %889 = vmatpush1.bf16.xpose.msra.mxu0 0
        %890 = vmatprep.subr.bf16.mxu0 0
        %891 = vmatpush1.bf16.xpose.msra.mxu0 0
        %892 = vmatprep.subr.bf16.mxu0 0
        %893 = vmatpush1.bf16.xpose.msra.mxu0 0
        %894 = vmatprep.subr.bf16.mxu0 0
        %895 = vmatpush1.bf16.xpose.msra.mxu0 0
        %896 = vmatprep.subr.bf16.mxu0 0
        %897 = vmatpush1.bf16.xpose.msra.mxu0 0
        %898 = vmatprep.subr.bf16.mxu0 0
        %899 = vmatpush1.bf16.xpose.msra.mxu0 0
        %900 = vmatprep.subr.bf16.mxu0 0
        %901 = vmatpush1.bf16.xpose.msra.mxu0 0
        %902 = vmatprep.subr.bf16.mxu0 0
        %903 = vmatpush1.bf16.xpose.msra.mxu0 0
        %904 = vmatprep.subr.bf16.mxu0 0
        %905 = vmatpush1.bf16.xpose.msra.mxu0 0
        %906 = vmatprep.subr.bf16.mxu0 0
        %907 = vmatpush1.bf16.xpose.msra.mxu0 0
        %908 = vmatprep.subr.bf16.mxu0 0
        %909 = vmatpush1.bf16.xpose.msra.mxu0 0
        %910 = vmatprep.subr.bf16.mxu0 0
        %911 = vmatpush1.bf16.xpose.msra.mxu0 0
        %912 = vmatprep.subr.bf16.mxu0 0
        %913 = vmatpush1.bf16.xpose.msra.mxu0 0
        %914 = vmatprep.mubr.bf16.mxu0 %v396
        %915 = vmatmul.mubr.bf16.gmra.mrb[0].mxu0 %v382
        %v916 = vpop.f32.mrb[0].mxu0
        %v917 = vadd.f32 %v877, %v916
        %v918 = vpop.f32.mrb[0].mxu0
        %v919 = vpop.f32.mrb[0].mxu0
        %v920 = vpop.f32.mrb[0].mxu0
        %921 = vdwg.mxu0
        %922 = vmatprep.subr.bf16.mxu0 %v601
        %923 = vmatpush1.bf16.xpose.msra.mxu0 %v600
        %924 = vmatprep.subr.bf16.mxu0 0
        %925 = vmatpush1.bf16.xpose.msra.mxu0 0
        %926 = vmatprep.subr.bf16.mxu0 0
        %927 = vmatpush1.bf16.xpose.msra.mxu0 0
        %928 = vmatprep.subr.bf16.mxu0 0
        %929 = vmatpush1.bf16.xpose.msra.mxu0 0
        %930 = vmatprep.subr.bf16.mxu0 0
        %931 = vmatpush1.bf16.xpose.msra.mxu0 0
        %932 = vmatprep.subr.bf16.mxu0 0
        %933 = vmatpush1.bf16.xpose.msra.mxu0 0
        %934 = vmatprep.subr.bf16.mxu0 0
        %935 = vmatpush1.bf16.xpose.msra.mxu0 0
        %936 = vmatprep.subr.bf16.mxu0 0
        %937 = vmatpush1.bf16.xpose.msra.mxu0 0
        %938 = vmatprep.subr.bf16.mxu0 0
        %939 = vmatpush1.bf16.xpose.msra.mxu0 0
        %940 = vmatprep.subr.bf16.mxu0 0
        %941 = vmatpush1.bf16.xpose.msra.mxu0 0
        %942 = vmatprep.subr.bf16.mxu0 0
        %943 = vmatpush1.bf16.xpose.msra.mxu0 0
        %944 = vmatprep.subr.bf16.mxu0 0
        %945 = vmatpush1.bf16.xpose.msra.mxu0 0
        %946 = vmatprep.subr.bf16.mxu0 0
        %947 = vmatpush1.bf16.xpose.msra.mxu0 0
        %948 = vmatprep.subr.bf16.mxu0 0
        %949 = vmatpush1.bf16.xpose.msra.mxu0 0
        %950 = vmatprep.subr.bf16.mxu0 0
        %951 = vmatpush1.bf16.xpose.msra.mxu0 0
        %952 = vmatprep.subr.bf16.mxu0 0
        %953 = vmatpush1.bf16.xpose.msra.mxu0 0
        %954 = vmatprep.mubr.bf16.mxu0 %v400
        %955 = vmatmul.mubr.bf16.gmra.mrb[0].mxu0 %v398
        %v956 = vpop.f32.mrb[0].mxu0
        %v957 = vadd.f32 %v917, %v956
        %v958 = vpop.f32.mrb[0].mxu0
        %v959 = vpop.f32.mrb[0].mxu0
        %v960 = vpop.f32.mrb[0].mxu0
        %961 = vdwg.mxu0
        %962 = vmatprep.subr.bf16.mxu0 %v603
        %963 = vmatpush1.bf16.xpose.msra.mxu0 %v602
        %964 = vmatprep.subr.bf16.mxu0 0
        %965 = vmatpush1.bf16.xpose.msra.mxu0 0
        %966 = vmatprep.subr.bf16.mxu0 0
        %967 = vmatpush1.bf16.xpose.msra.mxu0 0
        %968 = vmatprep.subr.bf16.mxu0 0
        %969 = vmatpush1.bf16.xpose.msra.mxu0 0
        %970 = vmatprep.subr.bf16.mxu0 0
        %971 = vmatpush1.bf16.xpose.msra.mxu0 0
        %972 = vmatprep.subr.bf16.mxu0 0
        %973 = vmatpush1.bf16.xpose.msra.mxu0 0
        %974 = vmatprep.subr.bf16.mxu0 0
        %975 = vmatpush1.bf16.xpose.msra.mxu0 0
        %976 = vmatprep.subr.bf16.mxu0 0
        %977 = vmatpush1.bf16.xpose.msra.mxu0 0
        %978 = vmatprep.subr.bf16.mxu0 0
        %979 = vmatpush1.bf16.xpose.msra.mxu0 0
        %980 = vmatprep.subr.bf16.mxu0 0
        %981 = vmatpush1.bf16.xpose.msra.mxu0 0
        %982 = vmatprep.subr.bf16.mxu0 0
        %983 = vmatpush1.bf16.xpose.msra.mxu0 0
        %984 = vmatprep.subr.bf16.mxu0 0
        %985 = vmatpush1.bf16.xpose.msra.mxu0 0
        %986 = vmatprep.subr.bf16.mxu0 0
        %987 = vmatpush1.bf16.xpose.msra.mxu0 0
        %988 = vmatprep.subr.bf16.mxu0 0
        %989 = vmatpush1.bf16.xpose.msra.mxu0 0
        %990 = vmatprep.subr.bf16.mxu0 0
        %991 = vmatpush1.bf16.xpose.msra.mxu0 0
        %992 = vmatprep.subr.bf16.mxu0 0
        %993 = vmatpush1.bf16.xpose.msra.mxu0 0
        %994 = vmatprep.mubr.bf16.mxu0 %v438
        %995 = vmatmul.mubr.bf16.gmra.mrb[0].mxu0 %v424
        %v996 = vpop.f32.mrb[0].mxu0
        %v997 = vadd.f32 %v957, %v996
        %v998 = vpop.f32.mrb[0].mxu0
        %v999 = vpop.f32.mrb[0].mxu0
        %v1000 = vpop.f32.mrb[0].mxu0
        %1001 = vdwg.mxu0
        %1002 = vmatprep.subr.bf16.mxu0 %v605
        %1003 = vmatpush1.bf16.xpose.msra.mxu0 %v604
        %1004 = vmatprep.subr.bf16.mxu0 0
        %1005 = vmatpush1.bf16.xpose.msra.mxu0 0
        %1006 = vmatprep.subr.bf16.mxu0 0
        %1007 = vmatpush1.bf16.xpose.msra.mxu0 0
        %1008 = vmatprep.subr.bf16.mxu0 0
        %1009 = vmatpush1.bf16.xpose.msra.mxu0 0
        %1010 = vmatprep.subr.bf16.mxu0 0
        %1011 = vmatpush1.bf16.xpose.msra.mxu0 0
        %1012 = vmatprep.subr.bf16.mxu0 0
        %1013 = vmatpush1.bf16.xpose.msra.mxu0 0
        %1014 = vmatprep.subr.bf16.mxu0 0
        %1015 = vmatpush1.bf16.xpose.msra.mxu0 0
        %1016 = vmatprep.subr.bf16.mxu0 0
        %1017 = vmatpush1.bf16.xpose.msra.mxu0 0
        %1018 = vmatprep.subr.bf16.mxu0 0
        %1019 = vmatpush1.bf16.xpose.msra.mxu0 0
        %1020 = vmatprep.subr.bf16.mxu0 0
        %1021 = vmatpush1.bf16.xpose.msra.mxu0 0
        %1022 = vmatprep.subr.bf16.mxu0 0
        %1023 = vmatpush1.bf16.xpose.msra.mxu0 0
        %1024 = vmatprep.subr.bf16.mxu0 0
        %1025 = vmatpush1.bf16.xpose.msra.mxu0 0
        %1026 = vmatprep.subr.bf16.mxu0 0
        %1027 = vmatpush1.bf16.xpose.msra.mxu0 0
        %1028 = vmatprep.subr.bf16.mxu0 0
        %1029 = vmatpush1.bf16.xpose.msra.mxu0 0
        %1030 = vmatprep.subr.bf16.mxu0 0
        %1031 = vmatpush1.bf16.xpose.msra.mxu0 0
        %1032 = vmatprep.subr.bf16.mxu0 0
        %1033 = vmatpush1.bf16.xpose.msra.mxu0 0
        %1034 = vmatprep.mubr.bf16.mxu0 %v448
        %1035 = vmatmul.mubr.bf16.gmra.mrb[0].mxu0 %v446
        %v1036 = vpop.f32.mrb[0].mxu0
        %v1037 = vadd.f32 %v997, %v1036
        %v1038 = vpop.f32.mrb[0].mxu0
        %v1039 = vpop.f32.mrb[0].mxu0
        %v1040 = vpop.f32.mrb[0].mxu0
        %1041 = vdwg.mxu0
        %1042 = vmatprep.subr.bf16.mxu0 %v607
        %1043 = vmatpush1.bf16.xpose.msra.mxu0 %v606
        %1044 = vmatprep.subr.bf16.mxu0 0
        %1045 = vmatpush1.bf16.xpose.msra.mxu0 0
        %1046 = vmatprep.subr.bf16.mxu0 0
        %1047 = vmatpush1.bf16.xpose.msra.mxu0 0
        %1048 = vmatprep.subr.bf16.mxu0 0
        %1049 = vmatpush1.bf16.xpose.msra.mxu0 0
        %1050 = vmatprep.subr.bf16.mxu0 0
        %1051 = vmatpush1.bf16.xpose.msra.mxu0 0
        %1052 = vmatprep.subr.bf16.mxu0 0
        %1053 = vmatpush1.bf16.xpose.msra.mxu0 0
        %1054 = vmatprep.subr.bf16.mxu0 0
        %1055 = vmatpush1.bf16.xpose.msra.mxu0 0
        %1056 = vmatprep.subr.bf16.mxu0 0
        %1057 = vmatpush1.bf16.xpose.msra.mxu0 0
        %1058 = vmatprep.subr.bf16.mxu0 0
        %1059 = vmatpush1.bf16.xpose.msra.mxu0 0
        %1060 = vmatprep.subr.bf16.mxu0 0
        %1061 = vmatpush1.bf16.xpose.msra.mxu0 0
        %1062 = vmatprep.subr.bf16.mxu0 0
        %1063 = vmatpush1.bf16.xpose.msra.mxu0 0
        %1064 = vmatprep.subr.bf16.mxu0 0
        %1065 = vmatpush1.bf16.xpose.msra.mxu0 0
        %1066 = vmatprep.subr.bf16.mxu0 0
        %1067 = vmatpush1.bf16.xpose.msra.mxu0 0
        %1068 = vmatprep.subr.bf16.mxu0 0
        %1069 = vmatpush1.bf16.xpose.msra.mxu0 0
        %1070 = vmatprep.subr.bf16.mxu0 0
        %1071 = vmatpush1.bf16.xpose.msra.mxu0 0
        %1072 = vmatprep.subr.bf16.mxu0 0
        %1073 = vmatpush1.bf16.xpose.msra.mxu0 0
        %1074 = vmatprep.mubr.bf16.mxu0 %v445
        %1075 = vmatmul.mubr.bf16.gmra.mrb[0].mxu0 %v431
        %v1076 = vpop.f32.mrb[0].mxu0
        %v1077 = vadd.f32 %v1037, %v1076
        %v1078 = vpop.f32.mrb[0].mxu0
        %v1079 = vpop.f32.mrb[0].mxu0
        %v1080 = vpop.f32.mrb[0].mxu0
        %1081 = vdwg.mxu0
        %1082 = vmatprep.subr.bf16.mxu0 %v609
        %1083 = vmatpush1.bf16.xpose.msra.mxu0 %v608
        %1084 = vmatprep.subr.bf16.mxu0 0
        %1085 = vmatpush1.bf16.xpose.msra.mxu0 0
        %1086 = vmatprep.subr.bf16.mxu0 0
        %1087 = vmatpush1.bf16.xpose.msra.mxu0 0
        %1088 = vmatprep.subr.bf16.mxu0 0
        %1089 = vmatpush1.bf16.xpose.msra.mxu0 0
        %1090 = vmatprep.subr.bf16.mxu0 0
        %1091 = vmatpush1.bf16.xpose.msra.mxu0 0
        %1092 = vmatprep.subr.bf16.mxu0 0
        %1093 = vmatpush1.bf16.xpose.msra.mxu0 0
        %1094 = vmatprep.subr.bf16.mxu0 0
        %1095 = vmatpush1.bf16.xpose.msra.mxu0 0
        %1096 = vmatprep.subr.bf16.mxu0 0
        %1097 = vmatpush1.bf16.xpose.msra.mxu0 0
        %1098 = vmatprep.subr.bf16.mxu0 0
        %1099 = vmatpush1.bf16.xpose.msra.mxu0 0
        %1100 = vmatprep.subr.bf16.mxu0 0
        %1101 = vmatpush1.bf16.xpose.msra.mxu0 0
        %1102 = vmatprep.subr.bf16.mxu0 0
        %1103 = vmatpush1.bf16.xpose.msra.mxu0 0
        %1104 = vmatprep.subr.bf16.mxu0 0
        %1105 = vmatpush1.bf16.xpose.msra.mxu0 0
        %1106 = vmatprep.subr.bf16.mxu0 0
        %1107 = vmatpush1.bf16.xpose.msra.mxu0 0
        %1108 = vmatprep.subr.bf16.mxu0 0
        %1109 = vmatpush1.bf16.xpose.msra.mxu0 0
        %1110 = vmatprep.subr.bf16.mxu0 0
        %1111 = vmatpush1.bf16.xpose.msra.mxu0 0
        %1112 = vmatprep.subr.bf16.mxu0 0
        %1113 = vmatpush1.bf16.xpose.msra.mxu0 0
        %1114 = vmatprep.mubr.bf16.mxu0 %v449
        %1115 = vmatmul.mubr.bf16.gmra.mrb[0].mxu0 %v447
        %v1116 = vpop.f32.mrb[0].mxu0
        %v1117 = vadd.f32 %v1077, %v1116
        %v1118 = vpop.f32.mrb[0].mxu0
        %v1119 = vpop.f32.mrb[0].mxu0
        %v1120 = vpop.f32.mrb[0].mxu0
        %1121 = vdwg.mxu0
        %1122 = vmatprep.subr.bf16.mxu0 %v611
        %1123 = vmatpush1.bf16.xpose.msra.mxu0 %v610
        %1124 = vmatprep.subr.bf16.mxu0 0
        %1125 = vmatpush1.bf16.xpose.msra.mxu0 0
        %1126 = vmatprep.subr.bf16.mxu0 0
        %1127 = vmatpush1.bf16.xpose.msra.mxu0 0
        %1128 = vmatprep.subr.bf16.mxu0 0
        %1129 = vmatpush1.bf16.xpose.msra.mxu0 0
        %1130 = vmatprep.subr.bf16.mxu0 0
        %1131 = vmatpush1.bf16.xpose.msra.mxu0 0
        %1132 = vmatprep.subr.bf16.mxu0 0
        %1133 = vmatpush1.bf16.xpose.msra.mxu0 0
        %1134 = vmatprep.subr.bf16.mxu0 0
        %1135 = vmatpush1.bf16.xpose.msra.mxu0 0
        %1136 = vmatprep.subr.bf16.mxu0 0
        %1137 = vmatpush1.bf16.xpose.msra.mxu0 0
        %1138 = vmatprep.subr.bf16.mxu0 0
        %1139 = vmatpush1.bf16.xpose.msra.mxu0 0
        %1140 = vmatprep.subr.bf16.mxu0 0
        %1141 = vmatpush1.bf16.xpose.msra.mxu0 0
        %1142 = vmatprep.subr.bf16.mxu0 0
        %1143 = vmatpush1.bf16.xpose.msra.mxu0 0
        %1144 = vmatprep.subr.bf16.mxu0 0
        %1145 = vmatpush1.bf16.xpose.msra.mxu0 0
        %1146 = vmatprep.subr.bf16.mxu0 0
        %1147 = vmatpush1.bf16.xpose.msra.mxu0 0
        %1148 = vmatprep.subr.bf16.mxu0 0
        %1149 = vmatpush1.bf16.xpose.msra.mxu0 0
        %1150 = vmatprep.subr.bf16.mxu0 0
        %1151 = vmatpush1.bf16.xpose.msra.mxu0 0
        %1152 = vmatprep.subr.bf16.mxu0 0
        %1153 = vmatpush1.bf16.xpose.msra.mxu0 0
        %1154 = vmatprep.mubr.bf16.mxu0 %v471
        %1155 = vmatmul.mubr.bf16.gmra.mrb[0].mxu0 %v464
        %v1156 = vpop.f32.mrb[0].mxu0
        %v1157 = vadd.f32 %v1117, %v1156
        %v1158 = vpop.f32.mrb[0].mxu0
        %v1159 = vpop.f32.mrb[0].mxu0
        %v1160 = vpop.f32.mrb[0].mxu0
        %1161 = vdwg.mxu0
        %1162 = vmatprep.subr.bf16.mxu0 %v613
        %1163 = vmatpush1.bf16.xpose.msra.mxu0 %v612
        %1164 = vmatprep.subr.bf16.mxu0 0
        %1165 = vmatpush1.bf16.xpose.msra.mxu0 0
        %1166 = vmatprep.subr.bf16.mxu0 0
        %1167 = vmatpush1.bf16.xpose.msra.mxu0 0
        %1168 = vmatprep.subr.bf16.mxu0 0
        %1169 = vmatpush1.bf16.xpose.msra.mxu0 0
        %1170 = vmatprep.subr.bf16.mxu0 0
        %1171 = vmatpush1.bf16.xpose.msra.mxu0 0
        %1172 = vmatprep.subr.bf16.mxu0 0
        %1173 = vmatpush1.bf16.xpose.msra.mxu0 0
        %1174 = vmatprep.subr.bf16.mxu0 0
        %1175 = vmatpush1.bf16.xpose.msra.mxu0 0
        %1176 = vmatprep.subr.bf16.mxu0 0
        %1177 = vmatpush1.bf16.xpose.msra.mxu0 0
        %1178 = vmatprep.subr.bf16.mxu0 0
        %1179 = vmatpush1.bf16.xpose.msra.mxu0 0
        %1180 = vmatprep.subr.bf16.mxu0 0
        %1181 = vmatpush1.bf16.xpose.msra.mxu0 0
        %1182 = vmatprep.subr.bf16.mxu0 0
        %1183 = vmatpush1.bf16.xpose.msra.mxu0 0
        %1184 = vmatprep.subr.bf16.mxu0 0
        %1185 = vmatpush1.bf16.xpose.msra.mxu0 0
        %1186 = vmatprep.subr.bf16.mxu0 0
        %1187 = vmatpush1.bf16.xpose.msra.mxu0 0
        %1188 = vmatprep.subr.bf16.mxu0 0
        %1189 = vmatpush1.bf16.xpose.msra.mxu0 0
        %1190 = vmatprep.subr.bf16.mxu0 0
        %1191 = vmatpush1.bf16.xpose.msra.mxu0 0
        %1192 = vmatprep.subr.bf16.mxu0 0
        %1193 = vmatpush1.bf16.xpose.msra.mxu0 0
        %1194 = vmatprep.mubr.bf16.mxu0 %v473
        %1195 = vmatmul.mubr.bf16.gmra.mrb[0].mxu0 %v472
        %v1196 = vpop.f32.mrb[0].mxu0
        %v1197 = vadd.f32 %v1157, %v1196
        %v1198 = vpop.f32.mrb[0].mxu0
        %v1199 = vpop.f32.mrb[0].mxu0
        %v1200 = vpop.f32.mrb[0].mxu0
        %1201 = vdwg.mxu0
        %v1202 = vadd.f32 %v266, %v1197
        %vm1203 = vcmask 123904
        %1204 = vst.msk [vmem:[#allocation3] sm:$0x3] %vm1203, %v1202
        // Predicated region
        $region60: #{convnet_rse_forward.5} parent=50 // pred_check
          %p1205 = pneg %p101
        $region61: #{convnet_rse_forward.5} parent=50 // pred_check_branch
          %1207 = sbr.rel (%p1205) target = $region63
        $region62: #{convnet_rse_forward.5} parent=50 // pred_region
          %s1209 = ssub.s32 32, 32
          %1210 = vsyncadd [#allocation4], %s1209
          %s1212 = sshll.u32 [#allocation3], 4
          %s1213 = int_to_ptr.vmem [resolvable:$true] %s1212
          %1215 = dma.vmem_to_hbm [thread:$0]  %s1213, 32, %s3, [#allocation4]
        $region63: #{convnet_rse_forward.5} parent=50 // pred_fallthru
          _
        // Predicated region
        $region64: #{convnet_rse_forward.5} parent=50 // pred_check
          %p1216 = pneg %p101
        $region65: #{convnet_rse_forward.5} parent=50 // pred_check_branch
          %1218 = sbr.rel (%p1216) target = $region67
        $region66: #{convnet_rse_forward.5} parent=50 // pred_region
          %1219 = dma.done [#allocation4], 32
        $region67: #{convnet_rse_forward.5} parent=50 // pred_fallthru
          _
      $region51: #{convnet_rse_forward.5} parent=5 // pred_fallthru
        _
      %p1220 = scmp.le.s32.totalorder 2, %s10
      // Predicated region
      $region68: #{convnet_rse_forward.5} parent=5 // pred_check
        %p1221 = pneg %p1220
      $region69: #{convnet_rse_forward.5} parent=5 // pred_check_branch
        %1223 = sbr.rel (%p1221) target = $region71
      $region70: #{convnet_rse_forward.5} parent=5 // pred_region
        %s1224 = ssub.s32 %s10, 2
      $region71: #{convnet_rse_forward.5} parent=5 // pred_fallthru
        _
    $region6: #{convnet_rse_forward.5} parent=1 // loop_footer
      %s14 = sadd.s32 1, %s10
    $region7: #{convnet_rse_forward.5} parent=1 // loop_footer_branch
      %9 = sbr.rel target = $region3
    $region8: #{convnet_rse_forward.5} parent=1 // loop_exit
      _
    %1225 = vsyncpa [#allocation4], 1
    %s1226 = scalar_lea.sflag [#allocation4], 1
    %1227 = vsyncpa %s1226, 1

</llo_original>
